<compile_context>
chip_gen: v7x
topology: tpu7x:2x2x1
jax: 0.10.0
libtpu: 0.0.40
codegen_flags: <defaults>
</compile_context>

<pallas_src>
from functools import partial

import numpy as np
import jax
import jax.numpy as jnp
from jax.experimental import pallas as pl
from jax.experimental.pallas import tpu as pltpu


# ---------------------------------------------------------------------------
# Kernel
# ---------------------------------------------------------------------------
def _block_kernel(x_ref,
                  ln1_g_ref, ln1_b_ref,
                  wq_ref, wk_ref, wv_ref, wp_ref, bp_ref,
                  ln2_g_ref, ln2_b_ref,
                  w1_ref, b1_ref, dwk_ref, dwb_ref,
                  w2_ref, b2_ref,
                  o_ref,
                  *, num_heads, H, W):
    f32 = jnp.float32
    eps = 1e-5

    x = x_ref[0].astype(f32)                       # (N, C)
    N, C = x.shape
    hid = w1_ref.shape[0]
    hd = C // num_heads

    def layernorm(v, g, b):
        mu = jnp.mean(v, axis=-1, keepdims=True)
        d = v - mu
        var = jnp.mean(d * d, axis=-1, keepdims=True)
        return d * jax.lax.rsqrt(var + eps) * g + b

    def linear(v, w_ref, b=None):
        # v: (N, in), w_ref: (out, in) PyTorch layout -> contract over `in`.
        out = jax.lax.dot_general(v, w_ref[...], (((1,), (1,)), ((), ())),
                                  preferred_element_type=f32)
        if b is not None:
            out = out + b
        return out

    # ------------------------- attention branch ---------------------------
    xn = layernorm(x, ln1_g_ref[...], ln1_b_ref[...])

    q = linear(xn, wq_ref)                         # (N, C), no bias (qkv_bias=False)
    k = linear(xn, wk_ref)
    v = linear(xn, wv_ref)

    scale = hd ** (-0.5)
    head_outs = []
    for h in range(num_heads):                     # static unroll over heads
        lo, hi = h * hd, (h + 1) * hd
        qh, kh, vh = q[:, lo:hi], k[:, lo:hi], v[:, lo:hi]
        s = jax.lax.dot_general(qh, kh, (((1,), (1,)), ((), ())),
                                preferred_element_type=f32) * scale   # (N, N)
        s = s - jnp.max(s, axis=-1, keepdims=True)
        p = jnp.exp(s)
        p = p / jnp.sum(p, axis=-1, keepdims=True)
        head_outs.append(jnp.dot(p, vh, preferred_element_type=f32))  # (N, hd)
    attn_out = jnp.concatenate(head_outs, axis=-1)                    # (N, C)

    proj = linear(attn_out, wp_ref, bp_ref[...])
    x1 = x + proj                                   # residual 1

    # ----------------------------- MLP branch -----------------------------
    xn2 = layernorm(x1, ln2_g_ref[...], ln2_b_ref[...])
    hpre = linear(xn2, w1_ref, b1_ref[...])         # (N, hid)

    # Depthwise 3x3 conv (stride 1, pad 1) on the flattened H*W axis.
    P = W + 1                                       # covers |shift| <= W+1
    zpad = jnp.zeros((P, hid), f32)
    hp = jnp.concatenate([zpad, hpre, zpad], axis=0)      # (N + 2P, hid)
    w_idx = jax.lax.broadcasted_iota(jnp.int32, (N, 1), 0) % W
    dwk = dwk_ref[...]                              # (9, hid)  tap-major
    acc = jnp.zeros_like(hpre) + dwb_ref[...]       # start from bias
    for dh in (-1, 0, 1):
        for dw in (-1, 0, 1):
            t = (dh + 1) * 3 + (dw + 1)
            shift = dh * W + dw
            sh = jax.lax.slice(hp, (P + shift, 0), (P + shift + N, hid))
            if dw == -1:
                sh = jnp.where(w_idx >= 1, sh, 0.0)
            elif dw == 1:
                sh = jnp.where(w_idx <= W - 2, sh, 0.0)
            acc = acc + sh * dwk[t:t + 1]
    # tanh-approx GELU (exact formula from the module's GELU class)
    c0 = float(np.sqrt(2.0 / np.pi))
    g = 0.5 * acc * (1.0 + jnp.tanh(c0 * (acc + 0.044715 * acc * acc * acc)))

    y = linear(g, w2_ref, b2_ref[...])              # (N, C)
    o_ref[0] = (x1 + y).astype(o_ref.dtype)         # residual 2


# ---------------------------------------------------------------------------
# Wrapper
# ---------------------------------------------------------------------------
def block_pallas(x, params, H, W):
    B, N, C = x.shape
    nh = params["num_heads"]
    hid = params["W1"].shape[0]
    dwk = params["dwk"].reshape(hid, 9).T           # (9, hid): tap t = (dh+1)*3+(dw+1)

    kernel = partial(_block_kernel, num_heads=nh, H=H, W=W)
    full = lambda i: (0, 0)
    return pl.pallas_call(
        kernel,
        out_shape=jax.ShapeDtypeStruct((B, N, C), x.dtype),
        grid=(B,),
        in_specs=[
            pl.BlockSpec((1, N, C), lambda i: (i, 0, 0)),   # x
            pl.BlockSpec((1, C), full),                      # ln1 gamma
            pl.BlockSpec((1, C), full),                      # ln1 beta
            pl.BlockSpec((C, C), full),                      # Wq
            pl.BlockSpec((C, C), full),                      # Wk
            pl.BlockSpec((C, C), full),                      # Wv
            pl.BlockSpec((C, C), full),                      # Wproj
            pl.BlockSpec((1, C), full),                      # bproj
            pl.BlockSpec((1, C), full),                      # ln2 gamma
            pl.BlockSpec((1, C), full),                      # ln2 beta
            pl.BlockSpec((hid, C), full),                    # W1 (fc1)
            pl.BlockSpec((1, hid), full),                    # b1
            pl.BlockSpec((9, hid), full),                    # dw conv taps
            pl.BlockSpec((1, hid), full),                    # dw conv bias
            pl.BlockSpec((C, hid), full),                    # W2 (fc2)
            pl.BlockSpec((1, C), full),                      # b2
        ],
        out_specs=pl.BlockSpec((1, N, C), lambda i: (i, 0, 0)),
        compiler_params=pltpu.CompilerParams(dimension_semantics=("parallel",)),
    )(x,
      params["ln1_g"].reshape(1, C), params["ln1_b"].reshape(1, C),
      params["Wq"], params["Wk"], params["Wv"],
      params["Wp"], params["bp"].reshape(1, C),
      params["ln2_g"].reshape(1, C), params["ln2_b"].reshape(1, C),
      params["W1"], params["b1"].reshape(1, hid),
      dwk, params["dwb"].reshape(1, hid),
      params["W2"], params["b2"].reshape(1, C))


# ---------------------------------------------------------------------------
# Pure-JAX reference (same math, no Pallas) for validation.
# ---------------------------------------------------------------------------
def block_ref(x, params, H, W):
    eps = 1e-5
    hp = jax.lax.Precision.HIGHEST
    B, N, C = x.shape
    nh = params["num_heads"]
    hd = C // nh

    def ln(v, g, b):
        mu = v.mean(-1, keepdims=True)
        var = ((v - mu) ** 2).mean(-1, keepdims=True)
        return (v - mu) / jnp.sqrt(var + eps) * g + b

    xn = ln(x, params["ln1_g"], params["ln1_b"])
    q = jnp.einsum("bnc,dc->bnd", xn, params["Wq"], precision=hp)
    k = jnp.einsum("bnc,dc->bnd", xn, params["Wk"], precision=hp)
    v = jnp.einsum("bnc,dc->bnd", xn, params["Wv"], precision=hp)
    qh = q.reshape(B, N, nh, hd).transpose(0, 2, 1, 3)
    kh = k.reshape(B, N, nh, hd).transpose(0, 2, 1, 3)
    vh = v.reshape(B, N, nh, hd).transpose(0, 2, 1, 3)
    attn = jnp.einsum("bhnd,bhmd->bhnm", qh, kh, precision=hp) * (hd ** (-0.5))
    attn = jax.nn.softmax(attn, axis=-1)
    o = jnp.einsum("bhnm,bhmd->bhnd", attn, vh, precision=hp)
    o = o.transpose(0, 2, 1, 3).reshape(B, N, C)
    o = jnp.einsum("bnc,dc->bnd", o, params["Wp"], precision=hp) + params["bp"]
    x1 = x + o

    xn2 = ln(x1, params["ln2_g"], params["ln2_b"])
    h = jnp.einsum("bnc,hc->bnh", xn2, params["W1"], precision=hp) + params["b1"]
    hid = h.shape[-1]
    h4 = h.transpose(0, 2, 1).reshape(B, hid, H, W)
    h4 = jax.lax.conv_general_dilated(
        h4, params["dwk"].reshape(hid, 1, 3, 3),
        window_strides=(1, 1), padding=((1, 1), (1, 1)),
        feature_group_count=hid, precision=hp)
    h4 = h4 + params["dwb"][None, :, None, None]
    h = h4.reshape(B, hid, N).transpose(0, 2, 1)
    g = 0.5 * h * (1.0 + jnp.tanh(np.sqrt(2.0 / np.pi) * (h + 0.044715 * h ** 3)))
    y = jnp.einsum("bnh,ch->bnc", g, params["W2"], precision=hp) + params["b2"]
    return x1 + y


# ---------------------------------------------------------------------------
# Main
# ---------------------------------------------------------------------------
if __name__ == "__main__":
    B = 2
    dim = 128          # embedding dim (lane-dense)
    num_heads = 4
    H, W = 8, 8
    N = H * W
    mlp_ratio = 2.0
    hid = int(dim * mlp_ratio)   # 256

    key = jax.random.PRNGKey(0)
    ks = jax.random.split(key, 20)
    it = iter(range(20))

    x = jax.random.normal(ks[next(it)], (B, N, dim), jnp.float32)

    params = {
        "num_heads": num_heads,
        "ln1_g": 1.0 + 0.1 * jax.random.normal(ks[next(it)], (dim,), jnp.float32),
        "ln1_b": 0.1 * jax.random.normal(ks[next(it)], (dim,), jnp.float32),
        "Wq": 0.05 * jax.random.normal(ks[next(it)], (dim, dim), jnp.float32),
        "Wk": 0.05 * jax.random.normal(ks[next(it)], (dim, dim), jnp.float32),
        "Wv": 0.05 * jax.random.normal(ks[next(it)], (dim, dim), jnp.float32),
        "Wp": 0.05 * jax.random.normal(ks[next(it)], (dim, dim), jnp.float32),
        "bp": 0.05 * jax.random.normal(ks[next(it)], (dim,), jnp.float32),
        "ln2_g": 1.0 + 0.1 * jax.random.normal(ks[next(it)], (dim,), jnp.float32),
        "ln2_b": 0.1 * jax.random.normal(ks[next(it)], (dim,), jnp.float32),
        "W1": 0.05 * jax.random.normal(ks[next(it)], (hid, dim), jnp.float32),
        "b1": 0.05 * jax.random.normal(ks[next(it)], (hid,), jnp.float32),
        "dwk": 0.2 * jax.random.normal(ks[next(it)], (hid, 3, 3), jnp.float32),
        "dwb": 0.05 * jax.random.normal(ks[next(it)], (hid,), jnp.float32),
        "W2": 0.05 * jax.random.normal(ks[next(it)], (dim, hid), jnp.float32),
        "b2": 0.05 * jax.random.normal(ks[next(it)], (dim,), jnp.float32),
    }

    out = jax.block_until_ready(block_pallas(x, params, H, W))
    ref = jax.block_until_ready(block_ref(x, params, H, W))

    assert out.shape == (B, N, dim), out.shape
    np.testing.assert_allclose(np.asarray(out), np.asarray(ref), rtol=2e-2, atol=2e-2)

    print("KERNEL_OK")
</pallas_src>

<mosaic_0001>
module attributes {stable_mosaic.version = 11 : i64} {
  func.func @_block_kernel(%arg0: i32, %arg1: memref<1x64x128xf32, #tpu.memory_space<vmem>>, %arg2: memref<1x128xf32, #tpu.memory_space<vmem>>, %arg3: memref<1x128xf32, #tpu.memory_space<vmem>>, %arg4: memref<128x128xf32, #tpu.memory_space<vmem>>, %arg5: memref<128x128xf32, #tpu.memory_space<vmem>>, %arg6: memref<128x128xf32, #tpu.memory_space<vmem>>, %arg7: memref<128x128xf32, #tpu.memory_space<vmem>>, %arg8: memref<1x128xf32, #tpu.memory_space<vmem>>, %arg9: memref<1x128xf32, #tpu.memory_space<vmem>>, %arg10: memref<1x128xf32, #tpu.memory_space<vmem>>, %arg11: memref<256x128xf32, #tpu.memory_space<vmem>>, %arg12: memref<1x256xf32, #tpu.memory_space<vmem>>, %arg13: memref<9x256xf32, #tpu.memory_space<vmem>>, %arg14: memref<1x256xf32, #tpu.memory_space<vmem>>, %arg15: memref<128x256xf32, #tpu.memory_space<vmem>>, %arg16: memref<1x128xf32, #tpu.memory_space<vmem>>, %arg17: memref<1x64x128xf32, #tpu.memory_space<vmem>>) attributes {dimension_semantics = [#tpu.dimension_semantics<parallel>], iteration_bounds = array<i64: 2>, scalar_prefetch = 0 : i64, scratch_operands = 0 : i64, tpu.core_type = #tpu.core_type<tc>, window_params = [{transform_indices = @transform_0, window_bounds = array<i64: 1, 64, 128>}, {pipeline_mode = #tpu.pipeline_mode<synchronous>, transform_indices = @transform_1, window_bounds = array<i64: 1, 128>}, {pipeline_mode = #tpu.pipeline_mode<synchronous>, transform_indices = @transform_2, window_bounds = array<i64: 1, 128>}, {pipeline_mode = #tpu.pipeline_mode<synchronous>, transform_indices = @transform_3, window_bounds = array<i64: 128, 128>}, {pipeline_mode = #tpu.pipeline_mode<synchronous>, transform_indices = @transform_4, window_bounds = array<i64: 128, 128>}, {pipeline_mode = #tpu.pipeline_mode<synchronous>, transform_indices = @transform_5, window_bounds = array<i64: 128, 128>}, {pipeline_mode = #tpu.pipeline_mode<synchronous>, transform_indices = @transform_6, window_bounds = array<i64: 128, 128>}, {pipeline_mode = #tpu.pipeline_mode<synchronous>, transform_indices = @transform_7, window_bounds = array<i64: 1, 128>}, {pipeline_mode = #tpu.pipeline_mode<synchronous>, transform_indices = @transform_8, window_bounds = array<i64: 1, 128>}, {pipeline_mode = #tpu.pipeline_mode<synchronous>, transform_indices = @transform_9, window_bounds = array<i64: 1, 128>}, {pipeline_mode = #tpu.pipeline_mode<synchronous>, transform_indices = @transform_10, window_bounds = array<i64: 256, 128>}, {pipeline_mode = #tpu.pipeline_mode<synchronous>, transform_indices = @transform_11, window_bounds = array<i64: 1, 256>}, {pipeline_mode = #tpu.pipeline_mode<synchronous>, transform_indices = @transform_12, window_bounds = array<i64: 9, 256>}, {pipeline_mode = #tpu.pipeline_mode<synchronous>, transform_indices = @transform_13, window_bounds = array<i64: 1, 256>}, {pipeline_mode = #tpu.pipeline_mode<synchronous>, transform_indices = @transform_14, window_bounds = array<i64: 128, 256>}, {pipeline_mode = #tpu.pipeline_mode<synchronous>, transform_indices = @transform_15, window_bounds = array<i64: 1, 128>}, {transform_indices = @transform_16, window_bounds = array<i64: 1, 64, 128>}]} {
    %c0 = arith.constant 0 : index
    %c0_0 = arith.constant 0 : index
    %c0_1 = arith.constant 0 : index
    %0 = vector.load %arg1[%c0, %c0_0, %c0_1] : memref<1x64x128xf32, #tpu.memory_space<vmem>>, vector<1x64x128xf32>
    %1 = vector.shape_cast %0 : vector<1x64x128xf32> to vector<64x128xf32>
    %c0_2 = arith.constant 0 : index
    %c0_3 = arith.constant 0 : index
    %2 = vector.load %arg2[%c0_2, %c0_3] : memref<1x128xf32, #tpu.memory_space<vmem>>, vector<1x128xf32>
    %c0_4 = arith.constant 0 : index
    %c0_5 = arith.constant 0 : index
    %3 = vector.load %arg3[%c0_4, %c0_5] : memref<1x128xf32, #tpu.memory_space<vmem>>, vector<1x128xf32>
    %cst = arith.constant dense<0.000000e+00> : vector<64xf32>
    %4 = vector.multi_reduction <add>, %1, %cst [1] : vector<64x128xf32> to vector<64xf32>
    %5 = vector.shape_cast %4 : vector<64xf32> to vector<64x1xf32>
    %cst_6 = arith.constant 1.280000e+02 : f32
    %6 = vector.broadcast %cst_6 : f32 to vector<64x1xf32>
    %7 = arith.divf %5, %6 : vector<64x1xf32>
    %8 = vector.broadcast %7 : vector<64x1xf32> to vector<64x128xf32>
    %9 = arith.subf %1, %8 : vector<64x128xf32>
    %10 = arith.mulf %9, %9 : vector<64x128xf32>
    %cst_7 = arith.constant dense<0.000000e+00> : vector<64xf32>
    %11 = vector.multi_reduction <add>, %10, %cst_7 [1] : vector<64x128xf32> to vector<64xf32>
    %12 = vector.shape_cast %11 : vector<64xf32> to vector<64x1xf32>
    %cst_8 = arith.constant 1.280000e+02 : f32
    %13 = vector.broadcast %cst_8 : f32 to vector<64x1xf32>
    %14 = arith.divf %12, %13 : vector<64x1xf32>
    %cst_9 = arith.constant 9.99999974E-6 : f32
    %15 = vector.broadcast %cst_9 : f32 to vector<64x1xf32>
    %16 = arith.addf %14, %15 : vector<64x1xf32>
    %17 = math.rsqrt %16 : vector<64x1xf32>
    %18 = vector.broadcast %17 : vector<64x1xf32> to vector<64x128xf32>
    %19 = arith.mulf %9, %18 : vector<64x128xf32>
    %20 = vector.broadcast %2 : vector<1x128xf32> to vector<64x128xf32>
    %21 = arith.mulf %19, %20 : vector<64x128xf32>
    %22 = vector.broadcast %3 : vector<1x128xf32> to vector<64x128xf32>
    %23 = arith.addf %21, %22 : vector<64x128xf32>
    %c0_10 = arith.constant 0 : index
    %c0_11 = arith.constant 0 : index
    %24 = vector.load %arg4[%c0_10, %c0_11] : memref<128x128xf32, #tpu.memory_space<vmem>>, vector<128x128xf32>
    %cst_12 = arith.constant dense<0.000000e+00> : vector<64x128xf32>
    %25 = tpu.matmul %23, %24, %cst_12 {dimension_numbers = #tpu.dot_dimension_numbers<[1], [1], [0], [0], [0, 0, 1, 0], [], []>} : vector<64x128xf32>, vector<128x128xf32>, vector<64x128xf32> -> vector<64x128xf32>
    %c0_13 = arith.constant 0 : index
    %c0_14 = arith.constant 0 : index
    %26 = vector.load %arg5[%c0_13, %c0_14] : memref<128x128xf32, #tpu.memory_space<vmem>>, vector<128x128xf32>
    %cst_15 = arith.constant dense<0.000000e+00> : vector<64x128xf32>
    %27 = tpu.matmul %23, %26, %cst_15 {dimension_numbers = #tpu.dot_dimension_numbers<[1], [1], [0], [0], [0, 0, 1, 0], [], []>} : vector<64x128xf32>, vector<128x128xf32>, vector<64x128xf32> -> vector<64x128xf32>
    %c0_16 = arith.constant 0 : index
    %c0_17 = arith.constant 0 : index
    %28 = vector.load %arg6[%c0_16, %c0_17] : memref<128x128xf32, #tpu.memory_space<vmem>>, vector<128x128xf32>
    %cst_18 = arith.constant dense<0.000000e+00> : vector<64x128xf32>
    %29 = tpu.matmul %23, %28, %cst_18 {dimension_numbers = #tpu.dot_dimension_numbers<[1], [1], [0], [0], [0, 0, 1, 0], [], []>} : vector<64x128xf32>, vector<128x128xf32>, vector<64x128xf32> -> vector<64x128xf32>
    %30 = vector.extract_strided_slice %25 {offsets = [0, 0], sizes = [64, 32], strides = [1, 1]} : vector<64x128xf32> to vector<64x32xf32>
    %31 = vector.extract_strided_slice %27 {offsets = [0, 0], sizes = [64, 32], strides = [1, 1]} : vector<64x128xf32> to vector<64x32xf32>
    %32 = vector.extract_strided_slice %29 {offsets = [0, 0], sizes = [64, 32], strides = [1, 1]} : vector<64x128xf32> to vector<64x32xf32>
    %cst_19 = arith.constant dense<0.000000e+00> : vector<64x64xf32>
    %33 = tpu.matmul %30, %31, %cst_19 {dimension_numbers = #tpu.dot_dimension_numbers<[1], [1], [0], [0], [0, 0, 1, 0], [], []>} : vector<64x32xf32>, vector<64x32xf32>, vector<64x64xf32> -> vector<64x64xf32>
    %cst_20 = arith.constant 0.176776692 : f32
    %34 = vector.broadcast %cst_20 : f32 to vector<64x64xf32>
    %35 = arith.mulf %33, %34 : vector<64x64xf32>
    %cst_21 = arith.constant dense<0xFF800000> : vector<64xf32>
    %36 = vector.multi_reduction <maximumf>, %35, %cst_21 [1] : vector<64x64xf32> to vector<64xf32>
    %37 = vector.shape_cast %36 : vector<64xf32> to vector<64x1xf32>
    %38 = vector.broadcast %37 : vector<64x1xf32> to vector<64x64xf32>
    %39 = arith.subf %35, %38 : vector<64x64xf32>
    %40 = math.exp %39 : vector<64x64xf32>
    %cst_22 = arith.constant dense<0.000000e+00> : vector<64xf32>
    %41 = vector.multi_reduction <add>, %40, %cst_22 [1] : vector<64x64xf32> to vector<64xf32>
    %42 = vector.shape_cast %41 : vector<64xf32> to vector<64x1xf32>
    %43 = vector.broadcast %42 : vector<64x1xf32> to vector<64x64xf32>
    %44 = arith.divf %40, %43 : vector<64x64xf32>
    %cst_23 = arith.constant dense<0.000000e+00> : vector<64x32xf32>
    %45 = tpu.matmul %44, %32, %cst_23 {dimension_numbers = #tpu.dot_dimension_numbers<[1], [0], [0], [1], [0, 0, 1, 1], [], []>} : vector<64x64xf32>, vector<64x32xf32>, vector<64x32xf32> -> vector<64x32xf32>
    %46 = vector.extract_strided_slice %25 {offsets = [0, 32], sizes = [64, 32], strides = [1, 1]} : vector<64x128xf32> to vector<64x32xf32>
    %47 = vector.extract_strided_slice %27 {offsets = [0, 32], sizes = [64, 32], strides = [1, 1]} : vector<64x128xf32> to vector<64x32xf32>
    %48 = vector.extract_strided_slice %29 {offsets = [0, 32], sizes = [64, 32], strides = [1, 1]} : vector<64x128xf32> to vector<64x32xf32>
    %cst_24 = arith.constant dense<0.000000e+00> : vector<64x64xf32>
    %49 = tpu.matmul %46, %47, %cst_24 {dimension_numbers = #tpu.dot_dimension_numbers<[1], [1], [0], [0], [0, 0, 1, 0], [], []>} : vector<64x32xf32>, vector<64x32xf32>, vector<64x64xf32> -> vector<64x64xf32>
    %cst_25 = arith.constant 0.176776692 : f32
    %50 = vector.broadcast %cst_25 : f32 to vector<64x64xf32>
    %51 = arith.mulf %49, %50 : vector<64x64xf32>
    %cst_26 = arith.constant dense<0xFF800000> : vector<64xf32>
    %52 = vector.multi_reduction <maximumf>, %51, %cst_26 [1] : vector<64x64xf32> to vector<64xf32>
    %53 = vector.shape_cast %52 : vector<64xf32> to vector<64x1xf32>
    %54 = vector.broadcast %53 : vector<64x1xf32> to vector<64x64xf32>
    %55 = arith.subf %51, %54 : vector<64x64xf32>
    %56 = math.exp %55 : vector<64x64xf32>
    %cst_27 = arith.constant dense<0.000000e+00> : vector<64xf32>
    %57 = vector.multi_reduction <add>, %56, %cst_27 [1] : vector<64x64xf32> to vector<64xf32>
    %58 = vector.shape_cast %57 : vector<64xf32> to vector<64x1xf32>
    %59 = vector.broadcast %58 : vector<64x1xf32> to vector<64x64xf32>
    %60 = arith.divf %56, %59 : vector<64x64xf32>
    %cst_28 = arith.constant dense<0.000000e+00> : vector<64x32xf32>
    %61 = tpu.matmul %60, %48, %cst_28 {dimension_numbers = #tpu.dot_dimension_numbers<[1], [0], [0], [1], [0, 0, 1, 1], [], []>} : vector<64x64xf32>, vector<64x32xf32>, vector<64x32xf32> -> vector<64x32xf32>
    %62 = vector.extract_strided_slice %25 {offsets = [0, 64], sizes = [64, 32], strides = [1, 1]} : vector<64x128xf32> to vector<64x32xf32>
    %63 = vector.extract_strided_slice %27 {offsets = [0, 64], sizes = [64, 32], strides = [1, 1]} : vector<64x128xf32> to vector<64x32xf32>
    %64 = vector.extract_strided_slice %29 {offsets = [0, 64], sizes = [64, 32], strides = [1, 1]} : vector<64x128xf32> to vector<64x32xf32>
    %cst_29 = arith.constant dense<0.000000e+00> : vector<64x64xf32>
    %65 = tpu.matmul %62, %63, %cst_29 {dimension_numbers = #tpu.dot_dimension_numbers<[1], [1], [0], [0], [0, 0, 1, 0], [], []>} : vector<64x32xf32>, vector<64x32xf32>, vector<64x64xf32> -> vector<64x64xf32>
    %cst_30 = arith.constant 0.176776692 : f32
    %66 = vector.broadcast %cst_30 : f32 to vector<64x64xf32>
    %67 = arith.mulf %65, %66 : vector<64x64xf32>
    %cst_31 = arith.constant dense<0xFF800000> : vector<64xf32>
    %68 = vector.multi_reduction <maximumf>, %67, %cst_31 [1] : vector<64x64xf32> to vector<64xf32>
    %69 = vector.shape_cast %68 : vector<64xf32> to vector<64x1xf32>
    %70 = vector.broadcast %69 : vector<64x1xf32> to vector<64x64xf32>
    %71 = arith.subf %67, %70 : vector<64x64xf32>
    %72 = math.exp %71 : vector<64x64xf32>
    %cst_32 = arith.constant dense<0.000000e+00> : vector<64xf32>
    %73 = vector.multi_reduction <add>, %72, %cst_32 [1] : vector<64x64xf32> to vector<64xf32>
    %74 = vector.shape_cast %73 : vector<64xf32> to vector<64x1xf32>
    %75 = vector.broadcast %74 : vector<64x1xf32> to vector<64x64xf32>
    %76 = arith.divf %72, %75 : vector<64x64xf32>
    %cst_33 = arith.constant dense<0.000000e+00> : vector<64x32xf32>
    %77 = tpu.matmul %76, %64, %cst_33 {dimension_numbers = #tpu.dot_dimension_numbers<[1], [0], [0], [1], [0, 0, 1, 1], [], []>} : vector<64x64xf32>, vector<64x32xf32>, vector<64x32xf32> -> vector<64x32xf32>
    %78 = vector.extract_strided_slice %25 {offsets = [0, 96], sizes = [64, 32], strides = [1, 1]} : vector<64x128xf32> to vector<64x32xf32>
    %79 = vector.extract_strided_slice %27 {offsets = [0, 96], sizes = [64, 32], strides = [1, 1]} : vector<64x128xf32> to vector<64x32xf32>
    %80 = vector.extract_strided_slice %29 {offsets = [0, 96], sizes = [64, 32], strides = [1, 1]} : vector<64x128xf32> to vector<64x32xf32>
    %cst_34 = arith.constant dense<0.000000e+00> : vector<64x64xf32>
    %81 = tpu.matmul %78, %79, %cst_34 {dimension_numbers = #tpu.dot_dimension_numbers<[1], [1], [0], [0], [0, 0, 1, 0], [], []>} : vector<64x32xf32>, vector<64x32xf32>, vector<64x64xf32> -> vector<64x64xf32>
    %cst_35 = arith.constant 0.176776692 : f32
    %82 = vector.broadcast %cst_35 : f32 to vector<64x64xf32>
    %83 = arith.mulf %81, %82 : vector<64x64xf32>
    %cst_36 = arith.constant dense<0xFF800000> : vector<64xf32>
    %84 = vector.multi_reduction <maximumf>, %83, %cst_36 [1] : vector<64x64xf32> to vector<64xf32>
    %85 = vector.shape_cast %84 : vector<64xf32> to vector<64x1xf32>
    %86 = vector.broadcast %85 : vector<64x1xf32> to vector<64x64xf32>
    %87 = arith.subf %83, %86 : vector<64x64xf32>
    %88 = math.exp %87 : vector<64x64xf32>
    %cst_37 = arith.constant dense<0.000000e+00> : vector<64xf32>
    %89 = vector.multi_reduction <add>, %88, %cst_37 [1] : vector<64x64xf32> to vector<64xf32>
    %90 = vector.shape_cast %89 : vector<64xf32> to vector<64x1xf32>
    %91 = vector.broadcast %90 : vector<64x1xf32> to vector<64x64xf32>
    %92 = arith.divf %88, %91 : vector<64x64xf32>
    %cst_38 = arith.constant dense<0.000000e+00> : vector<64x32xf32>
    %93 = tpu.matmul %92, %80, %cst_38 {dimension_numbers = #tpu.dot_dimension_numbers<[1], [0], [0], [1], [0, 0, 1, 1], [], []>} : vector<64x64xf32>, vector<64x32xf32>, vector<64x32xf32> -> vector<64x32xf32>
    %94 = tpu.concatenate %45, %61, %77, %93 in 1 : vector<64x32xf32>, vector<64x32xf32>, vector<64x32xf32>, vector<64x32xf32> -> vector<64x128xf32>
    %c0_39 = arith.constant 0 : index
    %c0_40 = arith.constant 0 : index
    %95 = vector.load %arg8[%c0_39, %c0_40] : memref<1x128xf32, #tpu.memory_space<vmem>>, vector<1x128xf32>
    %c0_41 = arith.constant 0 : index
    %c0_42 = arith.constant 0 : index
    %96 = vector.load %arg7[%c0_41, %c0_42] : memref<128x128xf32, #tpu.memory_space<vmem>>, vector<128x128xf32>
    %cst_43 = arith.constant dense<0.000000e+00> : vector<64x128xf32>
    %97 = tpu.matmul %94, %96, %cst_43 {dimension_numbers = #tpu.dot_dimension_numbers<[1], [1], [0], [0], [0, 0, 1, 0], [], []>} : vector<64x128xf32>, vector<128x128xf32>, vector<64x128xf32> -> vector<64x128xf32>
    %98 = vector.broadcast %95 : vector<1x128xf32> to vector<64x128xf32>
    %99 = arith.addf %97, %98 : vector<64x128xf32>
    %100 = arith.addf %1, %99 : vector<64x128xf32>
    %c0_44 = arith.constant 0 : index
    %c0_45 = arith.constant 0 : index
    %101 = vector.load %arg9[%c0_44, %c0_45] : memref<1x128xf32, #tpu.memory_space<vmem>>, vector<1x128xf32>
    %c0_46 = arith.constant 0 : index
    %c0_47 = arith.constant 0 : index
    %102 = vector.load %arg10[%c0_46, %c0_47] : memref<1x128xf32, #tpu.memory_space<vmem>>, vector<1x128xf32>
    %cst_48 = arith.constant dense<0.000000e+00> : vector<64xf32>
    %103 = vector.multi_reduction <add>, %100, %cst_48 [1] : vector<64x128xf32> to vector<64xf32>
    %104 = vector.shape_cast %103 : vector<64xf32> to vector<64x1xf32>
    %cst_49 = arith.constant 1.280000e+02 : f32
    %105 = vector.broadcast %cst_49 : f32 to vector<64x1xf32>
    %106 = arith.divf %104, %105 : vector<64x1xf32>
    %107 = vector.broadcast %106 : vector<64x1xf32> to vector<64x128xf32>
    %108 = arith.subf %100, %107 : vector<64x128xf32>
    %109 = arith.mulf %108, %108 : vector<64x128xf32>
    %cst_50 = arith.constant dense<0.000000e+00> : vector<64xf32>
    %110 = vector.multi_reduction <add>, %109, %cst_50 [1] : vector<64x128xf32> to vector<64xf32>
    %111 = vector.shape_cast %110 : vector<64xf32> to vector<64x1xf32>
    %cst_51 = arith.constant 1.280000e+02 : f32
    %112 = vector.broadcast %cst_51 : f32 to vector<64x1xf32>
    %113 = arith.divf %111, %112 : vector<64x1xf32>
    %cst_52 = arith.constant 9.99999974E-6 : f32
    %114 = vector.broadcast %cst_52 : f32 to vector<64x1xf32>
    %115 = arith.addf %113, %114 : vector<64x1xf32>
    %116 = math.rsqrt %115 : vector<64x1xf32>
    %117 = vector.broadcast %116 : vector<64x1xf32> to vector<64x128xf32>
    %118 = arith.mulf %108, %117 : vector<64x128xf32>
    %119 = vector.broadcast %101 : vector<1x128xf32> to vector<64x128xf32>
    %120 = arith.mulf %118, %119 : vector<64x128xf32>
    %121 = vector.broadcast %102 : vector<1x128xf32> to vector<64x128xf32>
    %122 = arith.addf %120, %121 : vector<64x128xf32>
    %c0_53 = arith.constant 0 : index
    %c0_54 = arith.constant 0 : index
    %123 = vector.load %arg12[%c0_53, %c0_54] : memref<1x256xf32, #tpu.memory_space<vmem>>, vector<1x256xf32>
    %c0_55 = arith.constant 0 : index
    %c0_56 = arith.constant 0 : index
    %124 = vector.load %arg11[%c0_55, %c0_56] : memref<256x128xf32, #tpu.memory_space<vmem>>, vector<256x128xf32>
    %cst_57 = arith.constant dense<0.000000e+00> : vector<64x256xf32>
    %125 = tpu.matmul %122, %124, %cst_57 {dimension_numbers = #tpu.dot_dimension_numbers<[1], [1], [0], [0], [0, 0, 1, 0], [], []>} : vector<64x128xf32>, vector<256x128xf32>, vector<64x256xf32> -> vector<64x256xf32>
    %126 = vector.broadcast %123 : vector<1x256xf32> to vector<64x256xf32>
    %127 = arith.addf %125, %126 : vector<64x256xf32>
    %cst_58 = arith.constant 0.000000e+00 : f32
    %128 = vector.broadcast %cst_58 : f32 to vector<9x256xf32>
    %129 = tpu.concatenate %128, %127, %128 in 0 : vector<9x256xf32>, vector<64x256xf32>, vector<9x256xf32> -> vector<82x256xf32>
    %130 = tpu.iota {dimensions = array<i32: 0>} : vector<64x1xi32>
    %c8_i32 = arith.constant 8 : i32
    %c0_i32 = arith.constant 0 : i32
    %131 = arith.cmpi eq, %c8_i32, %c0_i32 : i32
    %c1_i32 = arith.constant 1 : i32
    %132 = arith.select %131, %c1_i32, %c8_i32 : i32
    %133 = vector.broadcast %132 : i32 to vector<64x1xi32>
    %134 = arith.remsi %130, %133 : vector<64x1xi32>
    %c0_i32_59 = arith.constant 0 : i32
    %135 = vector.broadcast %c0_i32_59 : i32 to vector<64x1xi32>
    %136 = arith.cmpi ne, %134, %135 : vector<64x1xi32>
    %c0_i32_60 = arith.constant 0 : i32
    %137 = vector.broadcast %c0_i32_60 : i32 to vector<64x1xi32>
    %138 = arith.cmpi slt, %134, %137 : vector<64x1xi32>
    %c0_i32_61 = arith.constant 0 : i32
    %139 = arith.cmpi slt, %132, %c0_i32_61 : i32
    %140 = vector.broadcast %139 : i1 to vector<64x1xi1>
    %141 = vector.broadcast %140 : vector<64x1xi1> to vector<64x1xi1>
    %142 = arith.xori %138, %141 : vector<64x1xi1>
    %143 = arith.andi %142, %136 : vector<64x1xi1>
    %144 = vector.broadcast %132 : i32 to vector<64x1xi32>
    %145 = arith.addi %134, %144 : vector<64x1xi32>
    %146 = arith.select %143, %145, %134 : vector<64x1xi1>, vector<64x1xi32>
    %c0_62 = arith.constant 0 : index
    %c0_63 = arith.constant 0 : index
    %147 = vector.load %arg13[%c0_62, %c0_63] : memref<9x256xf32, #tpu.memory_space<vmem>>, vector<9x256xf32>
    %cst_64 = arith.constant 0.000000e+00 : f32
    %148 = vector.broadcast %cst_64 : f32 to vector<64x256xf32>
    %c0_65 = arith.constant 0 : index
    %c0_66 = arith.constant 0 : index
    %149 = vector.load %arg14[%c0_65, %c0_66] : memref<1x256xf32, #tpu.memory_space<vmem>>, vector<1x256xf32>
    %150 = vector.broadcast %149 : vector<1x256xf32> to vector<64x256xf32>
    %151 = arith.addf %148, %150 : vector<64x256xf32>
    %152 = vector.extract_strided_slice %129 {offsets = [0, 0], sizes = [64, 256], strides = [1, 1]} : vector<82x256xf32> to vector<64x256xf32>
    %c1_i32_67 = arith.constant 1 : i32
    %153 = vector.broadcast %c1_i32_67 : i32 to vector<64x1xi32>
    %154 = arith.cmpi sge, %146, %153 : vector<64x1xi32>
    %cst_68 = arith.constant 0.000000e+00 : f32
    %155 = vector.shape_cast %154 : vector<64x1xi1> to vector<64x1xi1>
    %156 = vector.broadcast %155 : vector<64x1xi1> to vector<64x256xi1>
    %157 = vector.broadcast %cst_68 : f32 to vector<64x256xf32>
    %158 = arith.select %156, %152, %157 : vector<64x256xi1>, vector<64x256xf32>
    %159 = vector.extract_strided_slice %147 {offsets = [0, 0], sizes = [1, 256], strides = [1, 1]} : vector<9x256xf32> to vector<1x256xf32>
    %160 = vector.broadcast %159 : vector<1x256xf32> to vector<64x256xf32>
    %161 = arith.mulf %158, %160 : vector<64x256xf32>
    %162 = arith.addf %151, %161 : vector<64x256xf32>
    %163 = vector.extract_strided_slice %129 {offsets = [1, 0], sizes = [64, 256], strides = [1, 1]} : vector<82x256xf32> to vector<64x256xf32>
    %164 = vector.extract_strided_slice %147 {offsets = [1, 0], sizes = [1, 256], strides = [1, 1]} : vector<9x256xf32> to vector<1x256xf32>
    %165 = vector.broadcast %164 : vector<1x256xf32> to vector<64x256xf32>
    %166 = arith.mulf %163, %165 : vector<64x256xf32>
    %167 = arith.addf %162, %166 : vector<64x256xf32>
    %168 = vector.extract_strided_slice %129 {offsets = [2, 0], sizes = [64, 256], strides = [1, 1]} : vector<82x256xf32> to vector<64x256xf32>
    %c6_i32 = arith.constant 6 : i32
    %169 = vector.broadcast %c6_i32 : i32 to vector<64x1xi32>
    %170 = arith.cmpi sle, %146, %169 : vector<64x1xi32>
    %cst_69 = arith.constant 0.000000e+00 : f32
    %171 = vector.shape_cast %170 : vector<64x1xi1> to vector<64x1xi1>
    %172 = vector.broadcast %171 : vector<64x1xi1> to vector<64x256xi1>
    %173 = vector.broadcast %cst_69 : f32 to vector<64x256xf32>
    %174 = arith.select %172, %168, %173 : vector<64x256xi1>, vector<64x256xf32>
    %175 = vector.extract_strided_slice %147 {offsets = [2, 0], sizes = [1, 256], strides = [1, 1]} : vector<9x256xf32> to vector<1x256xf32>
    %176 = vector.broadcast %175 : vector<1x256xf32> to vector<64x256xf32>
    %177 = arith.mulf %174, %176 : vector<64x256xf32>
    %178 = arith.addf %167, %177 : vector<64x256xf32>
    %179 = vector.extract_strided_slice %129 {offsets = [8, 0], sizes = [64, 256], strides = [1, 1]} : vector<82x256xf32> to vector<64x256xf32>
    %c1_i32_70 = arith.constant 1 : i32
    %180 = vector.broadcast %c1_i32_70 : i32 to vector<64x1xi32>
    %181 = arith.cmpi sge, %146, %180 : vector<64x1xi32>
    %cst_71 = arith.constant 0.000000e+00 : f32
    %182 = vector.shape_cast %181 : vector<64x1xi1> to vector<64x1xi1>
    %183 = vector.broadcast %182 : vector<64x1xi1> to vector<64x256xi1>
    %184 = vector.broadcast %cst_71 : f32 to vector<64x256xf32>
    %185 = arith.select %183, %179, %184 : vector<64x256xi1>, vector<64x256xf32>
    %186 = vector.extract_strided_slice %147 {offsets = [3, 0], sizes = [1, 256], strides = [1, 1]} : vector<9x256xf32> to vector<1x256xf32>
    %187 = vector.broadcast %186 : vector<1x256xf32> to vector<64x256xf32>
    %188 = arith.mulf %185, %187 : vector<64x256xf32>
    %189 = arith.addf %178, %188 : vector<64x256xf32>
    %190 = vector.extract_strided_slice %129 {offsets = [9, 0], sizes = [64, 256], strides = [1, 1]} : vector<82x256xf32> to vector<64x256xf32>
    %191 = vector.extract_strided_slice %147 {offsets = [4, 0], sizes = [1, 256], strides = [1, 1]} : vector<9x256xf32> to vector<1x256xf32>
    %192 = vector.broadcast %191 : vector<1x256xf32> to vector<64x256xf32>
    %193 = arith.mulf %190, %192 : vector<64x256xf32>
    %194 = arith.addf %189, %193 : vector<64x256xf32>
    %195 = vector.extract_strided_slice %129 {offsets = [10, 0], sizes = [64, 256], strides = [1, 1]} : vector<82x256xf32> to vector<64x256xf32>
    %c6_i32_72 = arith.constant 6 : i32
    %196 = vector.broadcast %c6_i32_72 : i32 to vector<64x1xi32>
    %197 = arith.cmpi sle, %146, %196 : vector<64x1xi32>
    %cst_73 = arith.constant 0.000000e+00 : f32
    %198 = vector.shape_cast %197 : vector<64x1xi1> to vector<64x1xi1>
    %199 = vector.broadcast %198 : vector<64x1xi1> to vector<64x256xi1>
    %200 = vector.broadcast %cst_73 : f32 to vector<64x256xf32>
    %201 = arith.select %199, %195, %200 : vector<64x256xi1>, vector<64x256xf32>
    %202 = vector.extract_strided_slice %147 {offsets = [5, 0], sizes = [1, 256], strides = [1, 1]} : vector<9x256xf32> to vector<1x256xf32>
    %203 = vector.broadcast %202 : vector<1x256xf32> to vector<64x256xf32>
    %204 = arith.mulf %201, %203 : vector<64x256xf32>
    %205 = arith.addf %194, %204 : vector<64x256xf32>
    %206 = vector.extract_strided_slice %129 {offsets = [16, 0], sizes = [64, 256], strides = [1, 1]} : vector<82x256xf32> to vector<64x256xf32>
    %c1_i32_74 = arith.constant 1 : i32
    %207 = vector.broadcast %c1_i32_74 : i32 to vector<64x1xi32>
    %208 = arith.cmpi sge, %146, %207 : vector<64x1xi32>
    %cst_75 = arith.constant 0.000000e+00 : f32
    %209 = vector.shape_cast %208 : vector<64x1xi1> to vector<64x1xi1>
    %210 = vector.broadcast %209 : vector<64x1xi1> to vector<64x256xi1>
    %211 = vector.broadcast %cst_75 : f32 to vector<64x256xf32>
    %212 = arith.select %210, %206, %211 : vector<64x256xi1>, vector<64x256xf32>
    %213 = vector.extract_strided_slice %147 {offsets = [6, 0], sizes = [1, 256], strides = [1, 1]} : vector<9x256xf32> to vector<1x256xf32>
    %214 = vector.broadcast %213 : vector<1x256xf32> to vector<64x256xf32>
    %215 = arith.mulf %212, %214 : vector<64x256xf32>
    %216 = arith.addf %205, %215 : vector<64x256xf32>
    %217 = vector.extract_strided_slice %129 {offsets = [17, 0], sizes = [64, 256], strides = [1, 1]} : vector<82x256xf32> to vector<64x256xf32>
    %218 = vector.extract_strided_slice %147 {offsets = [7, 0], sizes = [1, 256], strides = [1, 1]} : vector<9x256xf32> to vector<1x256xf32>
    %219 = vector.broadcast %218 : vector<1x256xf32> to vector<64x256xf32>
    %220 = arith.mulf %217, %219 : vector<64x256xf32>
    %221 = arith.addf %216, %220 : vector<64x256xf32>
    %222 = vector.extract_strided_slice %129 {offsets = [18, 0], sizes = [64, 256], strides = [1, 1]} : vector<82x256xf32> to vector<64x256xf32>
    %c6_i32_76 = arith.constant 6 : i32
    %223 = vector.broadcast %c6_i32_76 : i32 to vector<64x1xi32>
    %224 = arith.cmpi sle, %146, %223 : vector<64x1xi32>
    %cst_77 = arith.constant 0.000000e+00 : f32
    %225 = vector.shape_cast %224 : vector<64x1xi1> to vector<64x1xi1>
    %226 = vector.broadcast %225 : vector<64x1xi1> to vector<64x256xi1>
    %227 = vector.broadcast %cst_77 : f32 to vector<64x256xf32>
    %228 = arith.select %226, %222, %227 : vector<64x256xi1>, vector<64x256xf32>
    %229 = vector.extract_strided_slice %147 {offsets = [8, 0], sizes = [1, 256], strides = [1, 1]} : vector<9x256xf32> to vector<1x256xf32>
    %230 = vector.broadcast %229 : vector<1x256xf32> to vector<64x256xf32>
    %231 = arith.mulf %228, %230 : vector<64x256xf32>
    %232 = arith.addf %221, %231 : vector<64x256xf32>
    %cst_78 = arith.constant 5.000000e-01 : f32
    %233 = vector.broadcast %cst_78 : f32 to vector<64x256xf32>
    %234 = arith.mulf %233, %232 : vector<64x256xf32>
    %cst_79 = arith.constant 4.471500e-02 : f32
    %235 = vector.broadcast %cst_79 : f32 to vector<64x256xf32>
    %236 = arith.mulf %235, %232 : vector<64x256xf32>
    %237 = arith.mulf %236, %232 : vector<64x256xf32>
    %238 = arith.mulf %237, %232 : vector<64x256xf32>
    %239 = arith.addf %232, %238 : vector<64x256xf32>
    %cst_80 = arith.constant 0.797884583 : f32
    %240 = vector.broadcast %cst_80 : f32 to vector<64x256xf32>
    %241 = arith.mulf %240, %239 : vector<64x256xf32>
    %242 = math.tanh %241 : vector<64x256xf32>
    %cst_81 = arith.constant 1.000000e+00 : f32
    %243 = vector.broadcast %cst_81 : f32 to vector<64x256xf32>
    %244 = arith.addf %243, %242 : vector<64x256xf32>
    %245 = arith.mulf %234, %244 : vector<64x256xf32>
    %c0_82 = arith.constant 0 : index
    %c0_83 = arith.constant 0 : index
    %246 = vector.load %arg16[%c0_82, %c0_83] : memref<1x128xf32, #tpu.memory_space<vmem>>, vector<1x128xf32>
    %c0_84 = arith.constant 0 : index
    %c0_85 = arith.constant 0 : index
    %247 = vector.load %arg15[%c0_84, %c0_85] : memref<128x256xf32, #tpu.memory_space<vmem>>, vector<128x256xf32>
    %cst_86 = arith.constant dense<0.000000e+00> : vector<64x128xf32>
    %248 = tpu.matmul %245, %247, %cst_86 {dimension_numbers = #tpu.dot_dimension_numbers<[1], [1], [0], [0], [0, 0, 1, 0], [], []>} : vector<64x256xf32>, vector<128x256xf32>, vector<64x128xf32> -> vector<64x128xf32>
    %249 = vector.broadcast %246 : vector<1x128xf32> to vector<64x128xf32>
    %250 = arith.addf %248, %249 : vector<64x128xf32>
    %251 = arith.addf %100, %250 : vector<64x128xf32>
    %c0_87 = arith.constant 0 : index
    %c0_88 = arith.constant 0 : index
    %c0_89 = arith.constant 0 : index
    %252 = vector.load %arg17[%c0_87, %c0_88, %c0_89] : memref<1x64x128xf32, #tpu.memory_space<vmem>>, vector<1x64x128xf32>
    %253 = vector.shape_cast %252 : vector<1x64x128xf32> to vector<64x128xf32>
    %254 = vector.shape_cast %251 : vector<64x128xf32> to vector<1x64x128xf32>
    tpu.vector_store %arg17[%c0_87, %c0_88, %c0_89], %254 {strides = array<i32>} : memref<1x64x128xf32, #tpu.memory_space<vmem>>, vector<1x64x128xf32>,
    return
  }
  func.func @transform_0(%arg0: i32) -> (i32, i32, i32) {
    %c0_i32 = arith.constant 0 : i32
    %c0_i32_0 = arith.constant 0 : i32
    %c0_i32_1 = arith.constant 0 : i32
    return %arg0, %c0_i32, %c0_i32_0 : i32, i32, i32
  }
  func.func @transform_1(%arg0: i32) -> (i32, i32) {
    %c0_i32 = arith.constant 0 : i32
    %c0_i32_0 = arith.constant 0 : i32
    %c0_i32_1 = arith.constant 0 : i32
    return %c0_i32, %c0_i32_0 : i32, i32
  }
  func.func @transform_2(%arg0: i32) -> (i32, i32) {
    %c0_i32 = arith.constant 0 : i32
    %c0_i32_0 = arith.constant 0 : i32
    %c0_i32_1 = arith.constant 0 : i32
    return %c0_i32, %c0_i32_0 : i32, i32
  }
  func.func @transform_3(%arg0: i32) -> (i32, i32) {
    %c0_i32 = arith.constant 0 : i32
    %c0_i32_0 = arith.constant 0 : i32
    %c0_i32_1 = arith.constant 0 : i32
    return %c0_i32, %c0_i32_0 : i32, i32
  }
  func.func @transform_4(%arg0: i32) -> (i32, i32) {
    %c0_i32 = arith.constant 0 : i32
    %c0_i32_0 = arith.constant 0 : i32
    %c0_i32_1 = arith.constant 0 : i32
    return %c0_i32, %c0_i32_0 : i32, i32
  }
  func.func @transform_5(%arg0: i32) -> (i32, i32) {
    %c0_i32 = arith.constant 0 : i32
    %c0_i32_0 = arith.constant 0 : i32
    %c0_i32_1 = arith.constant 0 : i32
    return %c0_i32, %c0_i32_0 : i32, i32
  }
  func.func @transform_6(%arg0: i32) -> (i32, i32) {
    %c0_i32 = arith.constant 0 : i32
    %c0_i32_0 = arith.constant 0 : i32
    %c0_i32_1 = arith.constant 0 : i32
    return %c0_i32, %c0_i32_0 : i32, i32
  }
  func.func @transform_7(%arg0: i32) -> (i32, i32) {
    %c0_i32 = arith.constant 0 : i32
    %c0_i32_0 = arith.constant 0 : i32
    %c0_i32_1 = arith.constant 0 : i32
    return %c0_i32, %c0_i32_0 : i32, i32
  }
  func.func @transform_8(%arg0: i32) -> (i32, i32) {
    %c0_i32 = arith.constant 0 : i32
    %c0_i32_0 = arith.constant 0 : i32
    %c0_i32_1 = arith.constant 0 : i32
    return %c0_i32, %c0_i32_0 : i32, i32
  }
  func.func @transform_9(%arg0: i32) -> (i32, i32) {
    %c0_i32 = arith.constant 0 : i32
    %c0_i32_0 = arith.constant 0 : i32
    %c0_i32_1 = arith.constant 0 : i32
    return %c0_i32, %c0_i32_0 : i32, i32
  }
  func.func @transform_10(%arg0: i32) -> (i32, i32) {
    %c0_i32 = arith.constant 0 : i32
    %c0_i32_0 = arith.constant 0 : i32
    %c0_i32_1 = arith.constant 0 : i32
    return %c0_i32, %c0_i32_0 : i32, i32
  }
  func.func @transform_11(%arg0: i32) -> (i32, i32) {
    %c0_i32 = arith.constant 0 : i32
    %c0_i32_0 = arith.constant 0 : i32
    %c0_i32_1 = arith.constant 0 : i32
    return %c0_i32, %c0_i32_0 : i32, i32
  }
  func.func @transform_12(%arg0: i32) -> (i32, i32) {
    %c0_i32 = arith.constant 0 : i32
    %c0_i32_0 = arith.constant 0 : i32
    %c0_i32_1 = arith.constant 0 : i32
    return %c0_i32, %c0_i32_0 : i32, i32
  }
  func.func @transform_13(%arg0: i32) -> (i32, i32) {
    %c0_i32 = arith.constant 0 : i32
    %c0_i32_0 = arith.constant 0 : i32
    %c0_i32_1 = arith.constant 0 : i32
    return %c0_i32, %c0_i32_0 : i32, i32
  }
  func.func @transform_14(%arg0: i32) -> (i32, i32) {
    %c0_i32 = arith.constant 0 : i32
    %c0_i32_0 = arith.constant 0 : i32
    %c0_i32_1 = arith.constant 0 : i32
    return %c0_i32, %c0_i32_0 : i32, i32
  }
  func.func @transform_15(%arg0: i32) -> (i32, i32) {
    %c0_i32 = arith.constant 0 : i32
    %c0_i32_0 = arith.constant 0 : i32
    %c0_i32_1 = arith.constant 0 : i32
    return %c0_i32, %c0_i32_0 : i32, i32
  }
  func.func @transform_16(%arg0: i32) -> (i32, i32, i32) {
    %c0_i32 = arith.constant 0 : i32
    %c0_i32_0 = arith.constant 0 : i32
    %c0_i32_1 = arith.constant 0 : i32
    return %arg0, %c0_i32, %c0_i32_0 : i32, i32, i32
  }
}

</mosaic_0001>

<llo_original>
// kernel: tpu_custom_call.1
$region0: #{tpu_custom_call.1}
  #allocation0 [shape = 'u32[]', space=smem, size = 0x4, offset = 0x4, fixed_abs, tag = 'smem constant byte address 0x4 - core index']
  #allocation1 [shape = 'u32[144,128]{1,0:T(1,128)}', space=vmem, size = 0x12000, scoped, tag = 'internal scratch']
  %s0 = inlined_call_operand.hbm [shape: f32[2,64,128], index: 0, kind: input, shape index: {}]
  %s1 = inlined_call_operand.vmem [shape: f32[1,128], index: 1, kind: input, shape index: {}]
  %s2 = inlined_call_operand.vmem [shape: f32[1,128], index: 2, kind: input, shape index: {}]
  %s3 = inlined_call_operand.hbm [shape: f32[128,128], index: 3, kind: input, shape index: {}]
  %s4 = inlined_call_operand.hbm [shape: f32[128,128], index: 4, kind: input, shape index: {}]
  %s5 = inlined_call_operand.hbm [shape: f32[128,128], index: 5, kind: input, shape index: {}]
  %s6 = inlined_call_operand.hbm [shape: f32[128,128], index: 6, kind: input, shape index: {}]
  %s7 = inlined_call_operand.vmem [shape: f32[1,128], index: 7, kind: input, shape index: {}]
  %s8 = inlined_call_operand.vmem [shape: f32[1,128], index: 8, kind: input, shape index: {}]
  %s9 = inlined_call_operand.vmem [shape: f32[1,128], index: 9, kind: input, shape index: {}]
  %s10 = inlined_call_operand.hbm [shape: f32[256,128], index: 10, kind: input, shape index: {}]
  %s11 = inlined_call_operand.vmem [shape: f32[1,256], index: 11, kind: input, shape index: {}]
  %s12 = inlined_call_operand.vmem [shape: f32[9,256], index: 12, kind: input, shape index: {}]
  %s13 = inlined_call_operand.vmem [shape: f32[1,256], index: 13, kind: input, shape index: {}]
  %s14 = inlined_call_operand.hbm [shape: f32[128,256], index: 14, kind: input, shape index: {}]
  %s15 = inlined_call_operand.vmem [shape: f32[1,128], index: 15, kind: input, shape index: {}]
  %s16 = inlined_call_operand.hbm [shape: f32[2,64,128], index: 16, kind: output, shape index: {}]
  %s17 = sld [smem:[#allocation0]]
  $region125: #{tpu_custom_call.1} parent=0
    _
  %s19 = ssub.s32 1, %s17
  %s20 = scalar_select 0, %s19, %s17
  $region1: #{tpu_custom_call.1} parent=0
    #allocation2 [shape = 'u8[65536]{0}', space=vmem, size = 0x10000, scoped, tag = 'input window, operand 0']
    #allocation3 [shape = 's32[2]{0}', space=sflag, size = 0x8, scoped, tag = 'scoped memory for tpu_custom_call.1']
    #allocation4 [shape = 's32[2]{0}', space=sflag, size = 0x8, scoped, tag = 'scoped memory for tpu_custom_call.1']
    #allocation5 [shape = 'u8[65536]{0}', space=vmem, size = 0x10000, scoped, tag = 'input window, operand 3, single buffered']
    #allocation6 [shape = 's32[1]{0}', space=sflag, size = 0x4, scoped, tag = 'scoped memory for tpu_custom_call.1']
    #allocation7 [shape = 'u8[65536]{0}', space=vmem, size = 0x10000, scoped, tag = 'input window, operand 4, single buffered']
    #allocation8 [shape = 'u8[65536]{0}', space=vmem, size = 0x10000, scoped, tag = 'input window, operand 5, single buffered']
    #allocation9 [shape = 's32[1]{0}', space=sflag, size = 0x4, scoped, tag = 'scoped memory for tpu_custom_call.1']
    #allocation10 [shape = 'u8[65536]{0}', space=vmem, size = 0x10000, scoped, tag = 'input window, operand 6, single buffered']
    #allocation11 [shape = 'u8[131072]{0}', space=vmem, size = 0x20000, scoped, tag = 'input window, operand 10, single buffered']
    #allocation12 [shape = 's32[1]{0}', space=sflag, size = 0x4, scoped, tag = 'scoped memory for tpu_custom_call.1']
    #allocation13 [shape = 'u8[131072]{0}', space=vmem, size = 0x20000, scoped, tag = 'input window, operand 14, single buffered']
    #allocation14 [shape = 'u8[65536]{0}', space=vmem, size = 0x10000, scoped, tag = 'output window, operand 0']
    %21 = vsyncpa [#allocation3], 0
    %s22 = scalar_lea.sflag [#allocation3], 1
    %23 = vsyncpa %s22, 0
    %24 = vsyncpa [#allocation6], 0
    %25 = vsyncpa [#allocation9], 0
    %26 = vsyncpa [#allocation12], 0
    %27 = vsyncpa [#allocation4], 0
    %s28 = scalar_lea.sflag [#allocation4], 1
    %29 = vsyncpa %s28, 0
    loop: start=0, step=1, limit=4
    $region2: #{tpu_custom_call.1} parent=1 // loop_pre_header
      _
    $region3: #{tpu_custom_call.1} parent=1 // loop_header
      %s31 = sphi 0, %s35
      %p32 = scmp.ge.s32.totalorder %s31, 4
      %s41 = sphi 0, %s43
      %s44 = sphi 0, %s41
      %s45 = sphi 0, %s44
      %s61 = sphi 0, %s45
      %s65 = sphi 0, %s65
      %s67 = sphi 0, %s65
      %s68 = sphi 0, %s67
      %s82 = sphi 0, %s68
      %s86 = sphi 0, %s86
      %s88 = sphi 0, %s86
      %s89 = sphi 0, %s88
      %s103 = sphi 0, %s89
      %s107 = sphi 0, %s107
      %s109 = sphi 0, %s107
      %s110 = sphi 0, %s109
      %s124 = sphi 0, %s110
      %s128 = sphi 0, %s128
      %s130 = sphi 0, %s128
      %s131 = sphi 0, %s130
      %s145 = sphi 0, %s131
      %s149 = sphi 0, %s149
      %s151 = sphi 0, %s149
      %s152 = sphi 0, %s151
      %s166 = sphi 0, %s152
      %s170 = sphi 0, %s170
      %s172 = sphi 0, %s170
      %s173 = sphi 0, %s172
      %s187 = sphi 0, %s173
      %s191 = sphi 0, %s191
      %s193 = sphi 0, %s191
      %s194 = sphi 0, %s193
      %s208 = sphi 0, %s194
      %s212 = sphi 0, %s212
      %s214 = sphi 0, %s212
      %s215 = sphi 0, %s214
      %s229 = sphi 0, %s215
      %s233 = sphi 0, %s233
      %s235 = sphi 0, %s233
      %s236 = sphi 0, %s235
      %s250 = sphi 0, %s236
      %s254 = sphi 0, %s254
      %s256 = sphi 0, %s254
      %s257 = sphi 0, %s256
      %s271 = sphi 0, %s257
      %s275 = sphi 0, %s275
      %s277 = sphi 0, %s275
      %s278 = sphi 0, %s277
      %s292 = sphi 0, %s278
      %s296 = sphi 0, %s296
      %s298 = sphi 0, %s296
      %s299 = sphi 0, %s298
      %s313 = sphi 0, %s299
      %s317 = sphi 0, %s317
      %s319 = sphi 0, %s317
      %s320 = sphi 0, %s319
      %s334 = sphi 0, %s320
      %s338 = sphi 0, %s338
      %s340 = sphi 0, %s338
      %s341 = sphi 0, %s340
      %s355 = sphi 0, %s341
      %s359 = sphi 0, %s359
      %s361 = sphi 0, %s359
      %s362 = sphi 0, %s361
      %s376 = sphi 0, %s362
      %s382 = sphi 0, %s384
      %s385 = sphi 0, %s382
      %s386 = sphi 0, %s385
      %s402 = sphi 0, %s386
    $region4: #{tpu_custom_call.1} parent=1 // loop_header_branch
      %34 = sbr.rel (%p32) target = $region8
    $region5: #{tpu_custom_call.1} parent=1 // loop_body
      %s36 = ssub.s32 %s31, 1
      %s37 = ssub.s32 %s31, 2
      %s38 = sadd.s32 %s31, 1
      %s39 = ssub.s32 %s31, %s38
      %p40 = scmp.eq.s32.totalorder %s39, 0
      %s42 = sadd.s32 %s41, 1
      %s43 = scalar_select %p40, %s41, %s42
      %p46 = pneg %p40
      %p47 = scmp.eq.s32.totalorder %s31, 1
      %p48 = por %p46, %p47
      %p49 = scmp.ne.s32.totalorder %s41, %s44
      %p50 = scmp.eq.s32.totalorder %s31, 0
      %p51 = por %p49, %p50
      %p52 = scmp.ne.s32.totalorder %s41, %s44
      %p53 = scmp.eq.s32.totalorder %s36, 1
      %p54 = por %p52, %p53
      %p55 = scmp.ne.s32.totalorder %s44, %s45
      %p56 = scmp.eq.s32.totalorder %s36, 0
      %p57 = por %p55, %p56
      %p58 = scmp.ne.s32.totalorder %s44, %s45
      %p59 = scmp.eq.s32.totalorder %s37, 1
      %p60 = por %p58, %p59
      %p62 = scmp.ne.s32.totalorder %s45, %s61
      %p63 = scmp.eq.s32.totalorder %s37, 0
      %p64 = por %p62, %p63
      %s66 = sadd.s32 %s65, 1
      %p69 = scmp.eq.s32.totalorder %s31, 1
      %p70 = scmp.ne.s32.totalorder %s65, %s67
      %p71 = scmp.eq.s32.totalorder %s31, 0
      %p72 = por %p70, %p71
      %p73 = scmp.ne.s32.totalorder %s65, %s67
      %p74 = scmp.eq.s32.totalorder %s36, 1
      %p75 = por %p73, %p74
      %p76 = scmp.ne.s32.totalorder %s67, %s68
      %p77 = scmp.eq.s32.totalorder %s36, 0
      %p78 = por %p76, %p77
      %p79 = scmp.ne.s32.totalorder %s67, %s68
      %p80 = scmp.eq.s32.totalorder %s37, 1
      %p81 = por %p79, %p80
      %p83 = scmp.ne.s32.totalorder %s68, %s82
      %p84 = scmp.eq.s32.totalorder %s37, 0
      %p85 = por %p83, %p84
      %s87 = sadd.s32 %s86, 1
      %p90 = scmp.eq.s32.totalorder %s31, 1
      %p91 = scmp.ne.s32.totalorder %s86, %s88
      %p92 = scmp.eq.s32.totalorder %s31, 0
      %p93 = por %p91, %p92
      %p94 = scmp.ne.s32.totalorder %s86, %s88
      %p95 = scmp.eq.s32.totalorder %s36, 1
      %p96 = por %p94, %p95
      %p97 = scmp.ne.s32.totalorder %s88, %s89
      %p98 = scmp.eq.s32.totalorder %s36, 0
      %p99 = por %p97, %p98
      %p100 = scmp.ne.s32.totalorder %s88, %s89
      %p101 = scmp.eq.s32.totalorder %s37, 1
      %p102 = por %p100, %p101
      %p104 = scmp.ne.s32.totalorder %s89, %s103
      %p105 = scmp.eq.s32.totalorder %s37, 0
      %p106 = por %p104, %p105
      %s108 = sadd.s32 %s107, 1
      %p111 = scmp.eq.s32.totalorder %s31, 1
      %p112 = scmp.ne.s32.totalorder %s107, %s109
      %p113 = scmp.eq.s32.totalorder %s31, 0
      %p114 = por %p112, %p113
      %p115 = scmp.ne.s32.totalorder %s107, %s109
      %p116 = scmp.eq.s32.totalorder %s36, 1
      %p117 = por %p115, %p116
      %p118 = scmp.ne.s32.totalorder %s109, %s110
      %p119 = scmp.eq.s32.totalorder %s36, 0
      %p120 = por %p118, %p119
      %p121 = scmp.ne.s32.totalorder %s109, %s110
      %p122 = scmp.eq.s32.totalorder %s37, 1
      %p123 = por %p121, %p122
      %p125 = scmp.ne.s32.totalorder %s110, %s124
      %p126 = scmp.eq.s32.totalorder %s37, 0
      %p127 = por %p125, %p126
      %s129 = sadd.s32 %s128, 1
      %p132 = scmp.eq.s32.totalorder %s31, 1
      %p133 = scmp.ne.s32.totalorder %s128, %s130
      %p134 = scmp.eq.s32.totalorder %s31, 0
      %p135 = por %p133, %p134
      %p136 = scmp.ne.s32.totalorder %s128, %s130
      %p137 = scmp.eq.s32.totalorder %s36, 1
      %p138 = por %p136, %p137
      %p139 = scmp.ne.s32.totalorder %s130, %s131
      %p140 = scmp.eq.s32.totalorder %s36, 0
      %p141 = por %p139, %p140
      %p142 = scmp.ne.s32.totalorder %s130, %s131
      %p143 = scmp.eq.s32.totalorder %s37, 1
      %p144 = por %p142, %p143
      %p146 = scmp.ne.s32.totalorder %s131, %s145
      %p147 = scmp.eq.s32.totalorder %s37, 0
      %p148 = por %p146, %p147
      %s150 = sadd.s32 %s149, 1
      %p153 = scmp.eq.s32.totalorder %s31, 1
      %p154 = scmp.ne.s32.totalorder %s149, %s151
      %p155 = scmp.eq.s32.totalorder %s31, 0
      %p156 = por %p154, %p155
      %p157 = scmp.ne.s32.totalorder %s149, %s151
      %p158 = scmp.eq.s32.totalorder %s36, 1
      %p159 = por %p157, %p158
      %p160 = scmp.ne.s32.totalorder %s151, %s152
      %p161 = scmp.eq.s32.totalorder %s36, 0
      %p162 = por %p160, %p161
      %p163 = scmp.ne.s32.totalorder %s151, %s152
      %p164 = scmp.eq.s32.totalorder %s37, 1
      %p165 = por %p163, %p164
      %p167 = scmp.ne.s32.totalorder %s152, %s166
      %p168 = scmp.eq.s32.totalorder %s37, 0
      %p169 = por %p167, %p168
      %s171 = sadd.s32 %s170, 1
      %p174 = scmp.eq.s32.totalorder %s31, 1
      %p175 = scmp.ne.s32.totalorder %s170, %s172
      %p176 = scmp.eq.s32.totalorder %s31, 0
      %p177 = por %p175, %p176
      %p178 = scmp.ne.s32.totalorder %s170, %s172
      %p179 = scmp.eq.s32.totalorder %s36, 1
      %p180 = por %p178, %p179
      %p181 = scmp.ne.s32.totalorder %s172, %s173
      %p182 = scmp.eq.s32.totalorder %s36, 0
      %p183 = por %p181, %p182
      %p184 = scmp.ne.s32.totalorder %s172, %s173
      %p185 = scmp.eq.s32.totalorder %s37, 1
      %p186 = por %p184, %p185
      %p188 = scmp.ne.s32.totalorder %s173, %s187
      %p189 = scmp.eq.s32.totalorder %s37, 0
      %p190 = por %p188, %p189
      %s192 = sadd.s32 %s191, 1
      %p195 = scmp.eq.s32.totalorder %s31, 1
      %p196 = scmp.ne.s32.totalorder %s191, %s193
      %p197 = scmp.eq.s32.totalorder %s31, 0
      %p198 = por %p196, %p197
      %p199 = scmp.ne.s32.totalorder %s191, %s193
      %p200 = scmp.eq.s32.totalorder %s36, 1
      %p201 = por %p199, %p200
      %p202 = scmp.ne.s32.totalorder %s193, %s194
      %p203 = scmp.eq.s32.totalorder %s36, 0
      %p204 = por %p202, %p203
      %p205 = scmp.ne.s32.totalorder %s193, %s194
      %p206 = scmp.eq.s32.totalorder %s37, 1
      %p207 = por %p205, %p206
      %p209 = scmp.ne.s32.totalorder %s194, %s208
      %p210 = scmp.eq.s32.totalorder %s37, 0
      %p211 = por %p209, %p210
      %s213 = sadd.s32 %s212, 1
      %p216 = scmp.eq.s32.totalorder %s31, 1
      %p217 = scmp.ne.s32.totalorder %s212, %s214
      %p218 = scmp.eq.s32.totalorder %s31, 0
      %p219 = por %p217, %p218
      %p220 = scmp.ne.s32.totalorder %s212, %s214
      %p221 = scmp.eq.s32.totalorder %s36, 1
      %p222 = por %p220, %p221
      %p223 = scmp.ne.s32.totalorder %s214, %s215
      %p224 = scmp.eq.s32.totalorder %s36, 0
      %p225 = por %p223, %p224
      %p226 = scmp.ne.s32.totalorder %s214, %s215
      %p227 = scmp.eq.s32.totalorder %s37, 1
      %p228 = por %p226, %p227
      %p230 = scmp.ne.s32.totalorder %s215, %s229
      %p231 = scmp.eq.s32.totalorder %s37, 0
      %p232 = por %p230, %p231
      %s234 = sadd.s32 %s233, 1
      %p237 = scmp.eq.s32.totalorder %s31, 1
      %p238 = scmp.ne.s32.totalorder %s233, %s235
      %p239 = scmp.eq.s32.totalorder %s31, 0
      %p240 = por %p238, %p239
      %p241 = scmp.ne.s32.totalorder %s233, %s235
      %p242 = scmp.eq.s32.totalorder %s36, 1
      %p243 = por %p241, %p242
      %p244 = scmp.ne.s32.totalorder %s235, %s236
      %p245 = scmp.eq.s32.totalorder %s36, 0
      %p246 = por %p244, %p245
      %p247 = scmp.ne.s32.totalorder %s235, %s236
      %p248 = scmp.eq.s32.totalorder %s37, 1
      %p249 = por %p247, %p248
      %p251 = scmp.ne.s32.totalorder %s236, %s250
      %p252 = scmp.eq.s32.totalorder %s37, 0
      %p253 = por %p251, %p252
      %s255 = sadd.s32 %s254, 1
      %p258 = scmp.eq.s32.totalorder %s31, 1
      %p259 = scmp.ne.s32.totalorder %s254, %s256
      %p260 = scmp.eq.s32.totalorder %s31, 0
      %p261 = por %p259, %p260
      %p262 = scmp.ne.s32.totalorder %s254, %s256
      %p263 = scmp.eq.s32.totalorder %s36, 1
      %p264 = por %p262, %p263
      %p265 = scmp.ne.s32.totalorder %s256, %s257
      %p266 = scmp.eq.s32.totalorder %s36, 0
      %p267 = por %p265, %p266
      %p268 = scmp.ne.s32.totalorder %s256, %s257
      %p269 = scmp.eq.s32.totalorder %s37, 1
      %p270 = por %p268, %p269
      %p272 = scmp.ne.s32.totalorder %s257, %s271
      %p273 = scmp.eq.s32.totalorder %s37, 0
      %p274 = por %p272, %p273
      %s276 = sadd.s32 %s275, 1
      %p279 = scmp.eq.s32.totalorder %s31, 1
      %p280 = scmp.ne.s32.totalorder %s275, %s277
      %p281 = scmp.eq.s32.totalorder %s31, 0
      %p282 = por %p280, %p281
      %p283 = scmp.ne.s32.totalorder %s275, %s277
      %p284 = scmp.eq.s32.totalorder %s36, 1
      %p285 = por %p283, %p284
      %p286 = scmp.ne.s32.totalorder %s277, %s278
      %p287 = scmp.eq.s32.totalorder %s36, 0
      %p288 = por %p286, %p287
      %p289 = scmp.ne.s32.totalorder %s277, %s278
      %p290 = scmp.eq.s32.totalorder %s37, 1
      %p291 = por %p289, %p290
      %p293 = scmp.ne.s32.totalorder %s278, %s292
      %p294 = scmp.eq.s32.totalorder %s37, 0
      %p295 = por %p293, %p294
      %s297 = sadd.s32 %s296, 1
      %p300 = scmp.eq.s32.totalorder %s31, 1
      %p301 = scmp.ne.s32.totalorder %s296, %s298
      %p302 = scmp.eq.s32.totalorder %s31, 0
      %p303 = por %p301, %p302
      %p304 = scmp.ne.s32.totalorder %s296, %s298
      %p305 = scmp.eq.s32.totalorder %s36, 1
      %p306 = por %p304, %p305
      %p307 = scmp.ne.s32.totalorder %s298, %s299
      %p308 = scmp.eq.s32.totalorder %s36, 0
      %p309 = por %p307, %p308
      %p310 = scmp.ne.s32.totalorder %s298, %s299
      %p311 = scmp.eq.s32.totalorder %s37, 1
      %p312 = por %p310, %p311
      %p314 = scmp.ne.s32.totalorder %s299, %s313
      %p315 = scmp.eq.s32.totalorder %s37, 0
      %p316 = por %p314, %p315
      %s318 = sadd.s32 %s317, 1
      %p321 = scmp.eq.s32.totalorder %s31, 1
      %p322 = scmp.ne.s32.totalorder %s317, %s319
      %p323 = scmp.eq.s32.totalorder %s31, 0
      %p324 = por %p322, %p323
      %p325 = scmp.ne.s32.totalorder %s317, %s319
      %p326 = scmp.eq.s32.totalorder %s36, 1
      %p327 = por %p325, %p326
      %p328 = scmp.ne.s32.totalorder %s319, %s320
      %p329 = scmp.eq.s32.totalorder %s36, 0
      %p330 = por %p328, %p329
      %p331 = scmp.ne.s32.totalorder %s319, %s320
      %p332 = scmp.eq.s32.totalorder %s37, 1
      %p333 = por %p331, %p332
      %p335 = scmp.ne.s32.totalorder %s320, %s334
      %p336 = scmp.eq.s32.totalorder %s37, 0
      %p337 = por %p335, %p336
      %s339 = sadd.s32 %s338, 1
      %p342 = scmp.eq.s32.totalorder %s31, 1
      %p343 = scmp.ne.s32.totalorder %s338, %s340
      %p344 = scmp.eq.s32.totalorder %s31, 0
      %p345 = por %p343, %p344
      %p346 = scmp.ne.s32.totalorder %s338, %s340
      %p347 = scmp.eq.s32.totalorder %s36, 1
      %p348 = por %p346, %p347
      %p349 = scmp.ne.s32.totalorder %s340, %s341
      %p350 = scmp.eq.s32.totalorder %s36, 0
      %p351 = por %p349, %p350
      %p352 = scmp.ne.s32.totalorder %s340, %s341
      %p353 = scmp.eq.s32.totalorder %s37, 1
      %p354 = por %p352, %p353
      %p356 = scmp.ne.s32.totalorder %s341, %s355
      %p357 = scmp.eq.s32.totalorder %s37, 0
      %p358 = por %p356, %p357
      %s360 = sadd.s32 %s359, 1
      %p363 = scmp.eq.s32.totalorder %s31, 1
      %p364 = scmp.ne.s32.totalorder %s359, %s361
      %p365 = scmp.eq.s32.totalorder %s31, 0
      %p366 = por %p364, %p365
      %p367 = scmp.ne.s32.totalorder %s359, %s361
      %p368 = scmp.eq.s32.totalorder %s36, 1
      %p369 = por %p367, %p368
      %p370 = scmp.ne.s32.totalorder %s361, %s362
      %p371 = scmp.eq.s32.totalorder %s36, 0
      %p372 = por %p370, %p371
      %p373 = scmp.ne.s32.totalorder %s361, %s362
      %p374 = scmp.eq.s32.totalorder %s37, 1
      %p375 = por %p373, %p374
      %p377 = scmp.ne.s32.totalorder %s362, %s376
      %p378 = scmp.eq.s32.totalorder %s37, 0
      %p379 = por %p377, %p378
      %s380 = ssub.s32 %s31, %s38
      %p381 = scmp.eq.s32.totalorder %s380, 0
      %s383 = sadd.s32 %s382, 1
      %s384 = scalar_select %p381, %s382, %s383
      %p387 = pneg %p381
      %p388 = scmp.eq.s32.totalorder %s31, 1
      %p389 = por %p387, %p388
      %p390 = scmp.ne.s32.totalorder %s382, %s385
      %p391 = scmp.eq.s32.totalorder %s31, 0
      %p392 = por %p390, %p391
      %p393 = scmp.ne.s32.totalorder %s382, %s385
      %p394 = scmp.eq.s32.totalorder %s36, 1
      %p395 = por %p393, %p394
      %p396 = scmp.ne.s32.totalorder %s385, %s386
      %p397 = scmp.eq.s32.totalorder %s36, 0
      %p398 = por %p396, %p397
      %p399 = scmp.ne.s32.totalorder %s385, %s386
      %p400 = scmp.eq.s32.totalorder %s37, 1
      %p401 = por %p399, %p400
      %p403 = scmp.ne.s32.totalorder %s386, %s402
      %p404 = scmp.eq.s32.totalorder %s37, 0
      %p405 = por %p403, %p404
      %p406 = scmp.le.s32.totalorder 1, %s31
      %p407 = scmp.lt.s32.totalorder %s31, 3
      %p408 = pnand %p406, %p407
      %p409 = pneg %p408
      // Predicated region
      $region9: #{tpu_custom_call.1} parent=5 // pred_check
        _
      $region10: #{tpu_custom_call.1} parent=5 // pred_check_branch
        %411 = sbr.rel (%p408) target = $region12
      $region11: #{tpu_custom_call.1} parent=5 // pred_region
        %s412 = ssub.s32 %s31, 1
        // Predicated region
        $region13: #{tpu_custom_call.1} parent=11 // pred_check
          %p413 = pneg %p78
        $region14: #{tpu_custom_call.1} parent=11 // pred_check_branch
          %415 = sbr.rel (%p413) target = $region16
        $region15: #{tpu_custom_call.1} parent=11 // pred_region
          _
        $region16: #{tpu_custom_call.1} parent=11 // pred_fallthru
          _
        // Predicated region
        $region17: #{tpu_custom_call.1} parent=11 // pred_check
          %p416 = pneg %p99
        $region18: #{tpu_custom_call.1} parent=11 // pred_check_branch
          %418 = sbr.rel (%p416) target = $region20
        $region19: #{tpu_custom_call.1} parent=11 // pred_region
          _
        $region20: #{tpu_custom_call.1} parent=11 // pred_fallthru
          _
        // Predicated region
        $region21: #{tpu_custom_call.1} parent=11 // pred_check
          %p419 = pneg %p120
        $region22: #{tpu_custom_call.1} parent=11 // pred_check_branch
          %421 = sbr.rel (%p419) target = $region24
        $region23: #{tpu_custom_call.1} parent=11 // pred_region
          %s423 = ssub.s32 2048, 2048
          %424 = vsyncadd [#allocation6], %s423
          %s425 = sshll.u32 [#allocation5], 4
          %s426 = int_to_ptr.vmem [resolvable:$true] %s425
          %431 = dma.hbm_to_vmem [thread:$0]  %s3, 2048, %s426, [#allocation6], 128, 128, 8
        $region24: #{tpu_custom_call.1} parent=11 // pred_fallthru
          _
        // Predicated region
        $region25: #{tpu_custom_call.1} parent=11 // pred_check
          %p432 = pneg %p141
        $region26: #{tpu_custom_call.1} parent=11 // pred_check_branch
          %434 = sbr.rel (%p432) target = $region28
        $region27: #{tpu_custom_call.1} parent=11 // pred_region
          %s436 = ssub.s32 2048, 2048
          %437 = vsyncadd [#allocation6], %s436
          %s438 = sshll.u32 [#allocation7], 4
          %s439 = int_to_ptr.vmem [resolvable:$true] %s438
          %444 = dma.hbm_to_vmem [thread:$0]  %s4, 2048, %s439, [#allocation6], 128, 128, 8
        $region28: #{tpu_custom_call.1} parent=11 // pred_fallthru
          _
        // Predicated region
        $region29: #{tpu_custom_call.1} parent=11 // pred_check
          %p445 = pneg %p162
        $region30: #{tpu_custom_call.1} parent=11 // pred_check_branch
          %447 = sbr.rel (%p445) target = $region32
        $region31: #{tpu_custom_call.1} parent=11 // pred_region
          %s449 = ssub.s32 2048, 2048
          %450 = vsyncadd [#allocation9], %s449
          %s451 = sshll.u32 [#allocation8], 4
          %s452 = int_to_ptr.vmem [resolvable:$true] %s451
          %457 = dma.hbm_to_vmem [thread:$0]  %s5, 2048, %s452, [#allocation9], 128, 128, 8
        $region32: #{tpu_custom_call.1} parent=11 // pred_fallthru
          _
        // Predicated region
        $region33: #{tpu_custom_call.1} parent=11 // pred_check
          %p458 = pneg %p183
        $region34: #{tpu_custom_call.1} parent=11 // pred_check_branch
          %460 = sbr.rel (%p458) target = $region36
        $region35: #{tpu_custom_call.1} parent=11 // pred_region
          %s462 = ssub.s32 2048, 2048
          %463 = vsyncadd [#allocation9], %s462
          %s464 = sshll.u32 [#allocation10], 4
          %s465 = int_to_ptr.vmem [resolvable:$true] %s464
          %470 = dma.hbm_to_vmem [thread:$0]  %s6, 2048, %s465, [#allocation9], 128, 128, 8
        $region36: #{tpu_custom_call.1} parent=11 // pred_fallthru
          _
        // Predicated region
        $region37: #{tpu_custom_call.1} parent=11 // pred_check
          %p471 = pneg %p204
        $region38: #{tpu_custom_call.1} parent=11 // pred_check_branch
          %473 = sbr.rel (%p471) target = $region40
        $region39: #{tpu_custom_call.1} parent=11 // pred_region
          _
        $region40: #{tpu_custom_call.1} parent=11 // pred_fallthru
          _
        // Predicated region
        $region41: #{tpu_custom_call.1} parent=11 // pred_check
          %p474 = pneg %p225
        $region42: #{tpu_custom_call.1} parent=11 // pred_check_branch
          %476 = sbr.rel (%p474) target = $region44
        $region43: #{tpu_custom_call.1} parent=11 // pred_region
          _
        $region44: #{tpu_custom_call.1} parent=11 // pred_fallthru
          _
        // Predicated region
        $region45: #{tpu_custom_call.1} parent=11 // pred_check
          %p477 = pneg %p246
        $region46: #{tpu_custom_call.1} parent=11 // pred_check_branch
          %479 = sbr.rel (%p477) target = $region48
        $region47: #{tpu_custom_call.1} parent=11 // pred_region
          _
        $region48: #{tpu_custom_call.1} parent=11 // pred_fallthru
          _
        // Predicated region
        $region49: #{tpu_custom_call.1} parent=11 // pred_check
          %p480 = pneg %p267
        $region50: #{tpu_custom_call.1} parent=11 // pred_check_branch
          %482 = sbr.rel (%p480) target = $region52
        $region51: #{tpu_custom_call.1} parent=11 // pred_region
          %s484 = ssub.s32 4096, 4096
          %485 = vsyncadd [#allocation12], %s484
          %s486 = sshll.u32 [#allocation11], 4
          %s487 = int_to_ptr.vmem [resolvable:$true] %s486
          %492 = dma.hbm_to_vmem [thread:$0]  %s10, 4096, %s487, [#allocation12], 128, 128, 8
        $region52: #{tpu_custom_call.1} parent=11 // pred_fallthru
          _
        // Predicated region
        $region53: #{tpu_custom_call.1} parent=11 // pred_check
          %p493 = pneg %p288
        $region54: #{tpu_custom_call.1} parent=11 // pred_check_branch
          %495 = sbr.rel (%p493) target = $region56
        $region55: #{tpu_custom_call.1} parent=11 // pred_region
          _
        $region56: #{tpu_custom_call.1} parent=11 // pred_fallthru
          _
        // Predicated region
        $region57: #{tpu_custom_call.1} parent=11 // pred_check
          %p496 = pneg %p309
        $region58: #{tpu_custom_call.1} parent=11 // pred_check_branch
          %498 = sbr.rel (%p496) target = $region60
        $region59: #{tpu_custom_call.1} parent=11 // pred_region
          _
        $region60: #{tpu_custom_call.1} parent=11 // pred_fallthru
          _
        // Predicated region
        $region61: #{tpu_custom_call.1} parent=11 // pred_check
          %p499 = pneg %p330
        $region62: #{tpu_custom_call.1} parent=11 // pred_check_branch
          %501 = sbr.rel (%p499) target = $region64
        $region63: #{tpu_custom_call.1} parent=11 // pred_region
          _
        $region64: #{tpu_custom_call.1} parent=11 // pred_fallthru
          _
        // Predicated region
        $region65: #{tpu_custom_call.1} parent=11 // pred_check
          %p502 = pneg %p351
        $region66: #{tpu_custom_call.1} parent=11 // pred_check_branch
          %504 = sbr.rel (%p502) target = $region68
        $region67: #{tpu_custom_call.1} parent=11 // pred_region
          %s506 = ssub.s32 4096, 4096
          %507 = vsyncadd [#allocation12], %s506
          %s508 = sshll.u32 [#allocation13], 4
          %s509 = int_to_ptr.vmem [resolvable:$true] %s508
          %514 = dma.hbm_to_vmem [thread:$0]  %s14, 4096, %s509, [#allocation12], 256, 256, 16
        $region68: #{tpu_custom_call.1} parent=11 // pred_fallthru
          _
        // Predicated region
        $region69: #{tpu_custom_call.1} parent=11 // pred_check
          %p515 = pneg %p372
        $region70: #{tpu_custom_call.1} parent=11 // pred_check_branch
          %517 = sbr.rel (%p515) target = $region72
        $region71: #{tpu_custom_call.1} parent=11 // pred_region
          _
        $region72: #{tpu_custom_call.1} parent=11 // pred_fallthru
          _
      $region12: #{tpu_custom_call.1} parent=5 // pred_fallthru
        _
      %p518 = scmp.lt.s32.totalorder %s31, 2
      // Predicated region
      $region73: #{tpu_custom_call.1} parent=5 // pred_check
        %p519 = pneg %p518
      $region74: #{tpu_custom_call.1} parent=5 // pred_check_branch
        %521 = sbr.rel (%p519) target = $region76
      $region75: #{tpu_custom_call.1} parent=5 // pred_region
        // Predicated region
        $region77: #{tpu_custom_call.1} parent=75 // pred_check
          %p522 = pneg %p51
        $region78: #{tpu_custom_call.1} parent=75 // pred_check_branch
          %524 = sbr.rel (%p522) target = $region80
        $region79: #{tpu_custom_call.1} parent=75 // pred_region
          %s525 = sand.u32 %s41, 1
          %s526 = scalar_lea.sflag [#allocation3], %s525
          %s527 = sand.u32 %s41, 1
          %s528 = smul.addr %s527, 64
          %s529 = scalar_lea.vmem [#allocation2], %s528
          %s531 = ssub.s32 1024, 1024
          %532 = vsyncadd %s526, %s531
          %s533 = smul.addr %s31, 8
          %s534 = smul.addr %s533, 128
          %s535 = scalar_lea.hbm %s0, %s534
          %s536 = sshll.u32 %s529, 4
          %s537 = int_to_ptr.vmem [resolvable:$true] %s536
          %542 = dma.hbm_to_vmem [thread:$0]  %s535, 1024, %s537, %s526, 128, 128, 8
        $region80: #{tpu_custom_call.1} parent=75 // pred_fallthru
          _
      $region76: #{tpu_custom_call.1} parent=5 // pred_fallthru
        _
      %p543 = scmp.le.s32.totalorder 1, %s31
      %p544 = scmp.lt.s32.totalorder %s31, 3
      %p545 = pnand %p543, %p544
      %p546 = pneg %p545
      // Predicated region
      $region81: #{tpu_custom_call.1} parent=5 // pred_check
        _
      $region82: #{tpu_custom_call.1} parent=5 // pred_check_branch
        %548 = sbr.rel (%p545) target = $region84
      $region83: #{tpu_custom_call.1} parent=5 // pred_region
        %s549 = ssub.s32 %s31, 1
        %s550 = sand.u32 %s44, 1
        %s551 = scalar_lea.sflag [#allocation3], %s550
        %s552 = sand.u32 %s44, 1
        %s553 = smul.addr %s552, 64
        %s554 = scalar_lea.vmem [#allocation2], %s553
        // Predicated region
        $region85: #{tpu_custom_call.1} parent=83 // pred_check
          %p555 = pneg %p57
        $region86: #{tpu_custom_call.1} parent=83 // pred_check_branch
          %557 = sbr.rel (%p555) target = $region88
        $region87: #{tpu_custom_call.1} parent=83 // pred_region
          %558 = dma.done %s551, 1024
        $region88: #{tpu_custom_call.1} parent=83 // pred_fallthru
          _
        // Predicated region
        $region89: #{tpu_custom_call.1} parent=83 // pred_check
          %p559 = pneg %p120
        $region90: #{tpu_custom_call.1} parent=83 // pred_check_branch
          %561 = sbr.rel (%p559) target = $region92
        $region91: #{tpu_custom_call.1} parent=83 // pred_region
          %562 = dma.done [#allocation6], 2048
        $region92: #{tpu_custom_call.1} parent=83 // pred_fallthru
          _
        // Predicated region
        $region93: #{tpu_custom_call.1} parent=83 // pred_check
          %p563 = pneg %p141
        $region94: #{tpu_custom_call.1} parent=83 // pred_check_branch
          %565 = sbr.rel (%p563) target = $region96
        $region95: #{tpu_custom_call.1} parent=83 // pred_region
          %566 = dma.done [#allocation6], 2048
        $region96: #{tpu_custom_call.1} parent=83 // pred_fallthru
          _
        // Predicated region
        $region97: #{tpu_custom_call.1} parent=83 // pred_check
          %p567 = pneg %p162
        $region98: #{tpu_custom_call.1} parent=83 // pred_check_branch
          %569 = sbr.rel (%p567) target = $region100
        $region99: #{tpu_custom_call.1} parent=83 // pred_region
          %570 = dma.done [#allocation9], 2048
        $region100: #{tpu_custom_call.1} parent=83 // pred_fallthru
          _
        // Predicated region
        $region101: #{tpu_custom_call.1} parent=83 // pred_check
          %p571 = pneg %p183
        $region102: #{tpu_custom_call.1} parent=83 // pred_check_branch
          %573 = sbr.rel (%p571) target = $region104
        $region103: #{tpu_custom_call.1} parent=83 // pred_region
          %574 = dma.done [#allocation9], 2048
        $region104: #{tpu_custom_call.1} parent=83 // pred_fallthru
          _
        // Predicated region
        $region105: #{tpu_custom_call.1} parent=83 // pred_check
          %p575 = pneg %p267
        $region106: #{tpu_custom_call.1} parent=83 // pred_check_branch
          %577 = sbr.rel (%p575) target = $region108
        $region107: #{tpu_custom_call.1} parent=83 // pred_region
          %578 = dma.done [#allocation12], 4096
        $region108: #{tpu_custom_call.1} parent=83 // pred_fallthru
          _
        // Predicated region
        $region109: #{tpu_custom_call.1} parent=83 // pred_check
          %p579 = pneg %p351
        $region110: #{tpu_custom_call.1} parent=83 // pred_check_branch
          %581 = sbr.rel (%p579) target = $region112
        $region111: #{tpu_custom_call.1} parent=83 // pred_region
          %582 = dma.done [#allocation12], 4096
        $region112: #{tpu_custom_call.1} parent=83 // pred_fallthru
          _
        %s583 = sand.u32 %s44, 1
        %s584 = scalar_lea.sflag [#allocation3], %s583
        %s585 = sand.u32 %s44, 1
        %s586 = smul.addr %s585, 64
        %s587 = scalar_lea.vmem [#allocation2], %s586
        %p588 = pneg %p57
        %p589 = pneg %p54
        %p590 = pneg %p78
        %p591 = pneg %p75
        %p592 = pneg %p99
        %p593 = pneg %p96
        %p594 = pneg %p120
        %p595 = pneg %p117
        %p596 = pneg %p141
        %p597 = pneg %p138
        %p598 = pneg %p162
        %p599 = pneg %p159
        %p600 = pneg %p183
        %p601 = pneg %p180
        %p602 = pneg %p204
        %p603 = pneg %p201
        %p604 = pneg %p225
        %p605 = pneg %p222
        %p606 = pneg %p246
        %p607 = pneg %p243
        %p608 = pneg %p267
        %p609 = pneg %p264
        %p610 = pneg %p288
        %p611 = pneg %p285
        %p612 = pneg %p309
        %p613 = pneg %p306
        %p614 = pneg %p330
        %p615 = pneg %p327
        %p616 = pneg %p351
        %p617 = pneg %p348
        %p618 = pneg %p372
        %p619 = pneg %p369
        %p620 = pneg %p398
        %p621 = pneg %p395
        %s622 = sand.u32 %s385, 1
        %s623 = scalar_lea.sflag [#allocation4], %s622
        %s624 = sand.u32 %s385, 1
        %s625 = smul.addr %s624, 64
        %s626 = scalar_lea.vmem [#allocation14], %s625
        %v627 = vld [vmem:[%s554] sm:$0xff]
        %v628 = vld [vmem:[%s554 + $0x8] sm:$0xff]
        %v629 = vld [vmem:[%s554 + $0x10] sm:$0xff]
        %v630 = vld [vmem:[%s554 + $0x18] sm:$0xff]
        %v631 = vld [vmem:[%s554 + $0x20] sm:$0xff]
        %v632 = vld [vmem:[%s554 + $0x28] sm:$0xff]
        %v633 = vld [vmem:[%s554 + $0x30] sm:$0xff]
        %v634 = vld [vmem:[%s554 + $0x38] sm:$0xff]
        %v635 = vld [vmem:[%s1] sm:$0x1]
        %v636 = vld [vmem:[%s2] sm:$0x1]
        %637 = vadd.xlane.f32.xlu0 %v627
        %v638 = vpop.xlane.xlu0 %637
        %639 = vadd.xlane.f32.xlu0 %v628
        %v640 = vpop.xlane.xlu0 %639
        %641 = vadd.xlane.f32.xlu0 %v629
        %v642 = vpop.xlane.xlu0 %641
        %643 = vadd.xlane.f32.xlu0 %v630
        %v644 = vpop.xlane.xlu0 %643
        %645 = vadd.xlane.f32.xlu0 %v631
        %v646 = vpop.xlane.xlu0 %645
        %647 = vadd.xlane.f32.xlu0 %v632
        %v648 = vpop.xlane.xlu0 %647
        %649 = vadd.xlane.f32.xlu0 %v633
        %v650 = vpop.xlane.xlu0 %649
        %651 = vadd.xlane.f32.xlu0 %v634
        %v652 = vpop.xlane.xlu0 %651
        %v653 = vrcp.pop 128.0
        %v654 = vmul.f32 %v638, %v653
        %v655 = vmul.f32 %v640, %v653
        %v656 = vmul.f32 %v642, %v653
        %v657 = vmul.f32 %v644, %v653
        %v658 = vmul.f32 %v646, %v653
        %v659 = vmul.f32 %v648, %v653
        %v660 = vmul.f32 %v650, %v653
        %v661 = vmul.f32 %v652, %v653
        %v662 = vsub.f32 %v627, %v654
        %v663 = vsub.f32 %v628, %v655
        %v664 = vsub.f32 %v629, %v656
        %v665 = vsub.f32 %v630, %v657
        %v666 = vsub.f32 %v631, %v658
        %v667 = vsub.f32 %v632, %v659
        %v668 = vsub.f32 %v633, %v660
        %v669 = vsub.f32 %v634, %v661
        %v670 = vmul.f32 %v662, %v662
        %v671 = vmul.f32 %v663, %v663
        %v672 = vmul.f32 %v664, %v664
        %v673 = vmul.f32 %v665, %v665
        %v674 = vmul.f32 %v666, %v666
        %v675 = vmul.f32 %v667, %v667
        %v676 = vmul.f32 %v668, %v668
        %v677 = vmul.f32 %v669, %v669
        %678 = vadd.xlane.f32.xlu0 %v670
        %v679 = vpop.xlane.xlu0 %678
        %680 = vadd.xlane.f32.xlu0 %v671
        %v681 = vpop.xlane.xlu0 %680
        %682 = vadd.xlane.f32.xlu0 %v672
        %v683 = vpop.xlane.xlu0 %682
        %684 = vadd.xlane.f32.xlu0 %v673
        %v685 = vpop.xlane.xlu0 %684
        %686 = vadd.xlane.f32.xlu0 %v674
        %v687 = vpop.xlane.xlu0 %686
        %688 = vadd.xlane.f32.xlu0 %v675
        %v689 = vpop.xlane.xlu0 %688
        %690 = vadd.xlane.f32.xlu0 %v676
        %v691 = vpop.xlane.xlu0 %690
        %692 = vadd.xlane.f32.xlu0 %v677
        %v693 = vpop.xlane.xlu0 %692
        %v694 = vmul.f32 %v679, %v653
        %v695 = vmul.f32 %v681, %v653
        %v696 = vmul.f32 %v683, %v653
        %v697 = vmul.f32 %v685, %v653
        %v698 = vmul.f32 %v687, %v653
        %v699 = vmul.f32 %v689, %v653
        %v700 = vmul.f32 %v691, %v653
        %v701 = vmul.f32 %v693, %v653
        %v702 = vadd.f32 %v694, 1e-05
        %v703 = vadd.f32 %v695, 1e-05
        %v704 = vadd.f32 %v696, 1e-05
        %v705 = vadd.f32 %v697, 1e-05
        %v706 = vadd.f32 %v698, 1e-05
        %v707 = vadd.f32 %v699, 1e-05
        %v708 = vadd.f32 %v700, 1e-05
        %v709 = vadd.f32 %v701, 1e-05
        %v710 = vrsqrt.pop %v702
        %v711 = vrsqrt.pop %v703
        %v712 = vrsqrt.pop %v704
        %v713 = vrsqrt.pop %v705
        %v714 = vrsqrt.pop %v706
        %v715 = vrsqrt.pop %v707
        %v716 = vrsqrt.pop %v708
        %v717 = vrsqrt.pop %v709
        %v718 = vmul.f32 %v662, %v710
        %v719 = vmul.f32 %v663, %v711
        %v720 = vmul.f32 %v664, %v712
        %v721 = vmul.f32 %v665, %v713
        %v722 = vmul.f32 %v666, %v714
        %v723 = vmul.f32 %v667, %v715
        %v724 = vmul.f32 %v668, %v716
        %v725 = vmul.f32 %v669, %v717
        %v727 = vlaneseq
        %v728 = vshrl.u32 %v727, 7
        %v729 = vsub.s32 0, %v728
        %v730 = vrot.slane %v635, %v729
        %v732 = vmul.f32 %v718, %v730
        %v733 = vmul.f32 %v719, %v730
        %v734 = vmul.f32 %v720, %v730
        %v735 = vmul.f32 %v721, %v730
        %v736 = vmul.f32 %v722, %v730
        %v737 = vmul.f32 %v723, %v730
        %v738 = vmul.f32 %v724, %v730
        %v739 = vmul.f32 %v725, %v730
        %v741 = vlaneseq
        %v742 = vshrl.u32 %v741, 7
        %v743 = vsub.s32 0, %v742
        %v744 = vrot.slane %v636, %v743
        %v746 = vadd.f32 %v732, %v744
        %v747 = vadd.f32 %v733, %v744
        %v748 = vadd.f32 %v734, %v744
        %v749 = vadd.f32 %v735, %v744
        %v750 = vadd.f32 %v736, %v744
        %v751 = vadd.f32 %v737, %v744
        %v752 = vadd.f32 %v738, %v744
        %v753 = vadd.f32 %v739, %v744
        %v754 = vld [vmem:[#allocation5] sm:$0xff]
        %v755 = vld [vmem:[#allocation5 + $0x8] sm:$0xff]
        %v756 = vld [vmem:[#allocation5 + $0x10] sm:$0xff]
        %v757 = vld [vmem:[#allocation5 + $0x18] sm:$0xff]
        %v758 = vld [vmem:[#allocation5 + $0x20] sm:$0xff]
        %v759 = vld [vmem:[#allocation5 + $0x28] sm:$0xff]
        %v760 = vld [vmem:[#allocation5 + $0x30] sm:$0xff]
        %v761 = vld [vmem:[#allocation5 + $0x38] sm:$0xff]
        %v762 = vld [vmem:[#allocation5 + $0x40] sm:$0xff]
        %v763 = vld [vmem:[#allocation5 + $0x48] sm:$0xff]
        %v764 = vld [vmem:[#allocation5 + $0x50] sm:$0xff]
        %v765 = vld [vmem:[#allocation5 + $0x58] sm:$0xff]
        %v766 = vld [vmem:[#allocation5 + $0x60] sm:$0xff]
        %v767 = vld [vmem:[#allocation5 + $0x68] sm:$0xff]
        %v768 = vld [vmem:[#allocation5 + $0x70] sm:$0xff]
        %v769 = vld [vmem:[#allocation5 + $0x78] sm:$0xff]
        %770 = vmatprep.subr.mxu0 0.0
        %771 = vmatpush1.xpose.msra.mxu0 %v754
        %772 = vmatprep.subr.mxu0 0.0
        %773 = vmatpush1.xpose.msra.mxu0 %v755
        %774 = vmatprep.subr.mxu0 0.0
        %775 = vmatpush1.xpose.msra.mxu0 %v756
        %776 = vmatprep.subr.mxu0 0.0
        %777 = vmatpush1.xpose.msra.mxu0 %v757
        %778 = vmatprep.subr.mxu0 0.0
        %779 = vmatpush1.xpose.msra.mxu0 %v758
        %780 = vmatprep.subr.mxu0 0.0
        %781 = vmatpush1.xpose.msra.mxu0 %v759
        %782 = vmatprep.subr.mxu0 0.0
        %783 = vmatpush1.xpose.msra.mxu0 %v760
        %784 = vmatprep.subr.mxu0 0.0
        %785 = vmatpush1.xpose.msra.mxu0 %v761
        %786 = vmatprep.subr.mxu0 0.0
        %787 = vmatpush1.xpose.msra.mxu0 %v762
        %788 = vmatprep.subr.mxu0 0.0
        %789 = vmatpush1.xpose.msra.mxu0 %v763
        %790 = vmatprep.subr.mxu0 0.0
        %791 = vmatpush1.xpose.msra.mxu0 %v764
        %792 = vmatprep.subr.mxu0 0.0
        %793 = vmatpush1.xpose.msra.mxu0 %v765
        %794 = vmatprep.subr.mxu0 0.0
        %795 = vmatpush1.xpose.msra.mxu0 %v766
        %796 = vmatprep.subr.mxu0 0.0
        %797 = vmatpush1.xpose.msra.mxu0 %v767
        %798 = vmatprep.subr.mxu0 0.0
        %799 = vmatpush1.xpose.msra.mxu0 %v768
        %800 = vmatprep.subr.mxu0 0.0
        %801 = vmatpush1.xpose.msra.mxu0 %v769
        %802 = vmatprep.subr.mxu0 0.0
        %803 = vmatpush1.xpose.msra.mxu0 0.0
        %804 = vmatprep.subr.mxu0 0.0
        %805 = vmatpush1.xpose.msra.mxu0 0.0
        %806 = vmatprep.subr.mxu0 0.0
        %807 = vmatpush1.xpose.msra.mxu0 0.0
        %808 = vmatprep.subr.mxu0 0.0
        %809 = vmatpush1.xpose.msra.mxu0 0.0
        %810 = vmatprep.subr.mxu0 0.0
        %811 = vmatpush1.xpose.msra.mxu0 0.0
        %812 = vmatprep.subr.mxu0 0.0
        %813 = vmatpush1.xpose.msra.mxu0 0.0
        %814 = vmatprep.subr.mxu0 0.0
        %815 = vmatpush1.xpose.msra.mxu0 0.0
        %816 = vmatprep.subr.mxu0 0.0
        %817 = vmatpush1.xpose.msra.mxu0 0.0
        %818 = vmatprep.subr.mxu0 0.0
        %819 = vmatpush1.xpose.msra.mxu0 0.0
        %820 = vmatprep.subr.mxu0 0.0
        %821 = vmatpush1.xpose.msra.mxu0 0.0
        %822 = vmatprep.subr.mxu0 0.0
        %823 = vmatpush1.xpose.msra.mxu0 0.0
        %824 = vmatprep.subr.mxu0 0.0
        %825 = vmatpush1.xpose.msra.mxu0 0.0
        %826 = vmatprep.subr.mxu0 0.0
        %827 = vmatpush1.xpose.msra.mxu0 0.0
        %828 = vmatprep.subr.mxu0 0.0
        %829 = vmatpush1.xpose.msra.mxu0 0.0
        %830 = vmatprep.subr.mxu0 0.0
        %831 = vmatpush1.xpose.msra.mxu0 0.0
        %832 = vmatprep.subr.mxu0 0.0
        %833 = vmatpush1.xpose.msra.mxu0 0.0
        %834 = vmatprep.mubr.f32.mxu0 0.0
        %835 = vmatmul.mubr.f32.gmra.mrb[0].mxu0 %v746
        %v836 = vpop.f32.mrb[0].mxu0
        %v837 = vadd.f32 0.0, %v836
        %v838 = vpop.f32.mrb[0].mxu0
        %839 = vmatprep.mubr.f32.mxu0 0.0
        %840 = vmatmul.mubr.f32.gmra.mrb[0].mxu0 %v747
        %v841 = vpop.f32.mrb[0].mxu0
        %v842 = vadd.f32 0.0, %v841
        %v843 = vpop.f32.mrb[0].mxu0
        %844 = vmatprep.mubr.f32.mxu0 0.0
        %845 = vmatmul.mubr.f32.gmra.mrb[0].mxu0 %v748
        %v846 = vpop.f32.mrb[0].mxu0
        %v847 = vadd.f32 0.0, %v846
        %v848 = vpop.f32.mrb[0].mxu0
        %849 = vmatprep.mubr.f32.mxu0 0.0
        %850 = vmatmul.mubr.f32.gmra.mrb[0].mxu0 %v749
        %v851 = vpop.f32.mrb[0].mxu0
        %v852 = vadd.f32 0.0, %v851
        %v853 = vpop.f32.mrb[0].mxu0
        %854 = vmatprep.mubr.f32.mxu0 0.0
        %855 = vmatmul.mubr.f32.gmra.mrb[0].mxu0 %v750
        %v856 = vpop.f32.mrb[0].mxu0
        %v857 = vadd.f32 0.0, %v856
        %v858 = vpop.f32.mrb[0].mxu0
        %859 = vmatprep.mubr.f32.mxu0 0.0
        %860 = vmatmul.mubr.f32.gmra.mrb[0].mxu0 %v751
        %v861 = vpop.f32.mrb[0].mxu0
        %v862 = vadd.f32 0.0, %v861
        %v863 = vpop.f32.mrb[0].mxu0
        %864 = vmatprep.mubr.f32.mxu0 0.0
        %865 = vmatmul.mubr.f32.gmra.mrb[0].mxu0 %v752
        %v866 = vpop.f32.mrb[0].mxu0
        %v867 = vadd.f32 0.0, %v866
        %v868 = vpop.f32.mrb[0].mxu0
        %869 = vmatprep.mubr.f32.mxu0 0.0
        %870 = vmatmul.mubr.f32.gmra.mrb[0].mxu0 %v753
        %v871 = vpop.f32.mrb[0].mxu0
        %v872 = vadd.f32 0.0, %v871
        %v873 = vpop.f32.mrb[0].mxu0
        %874 = vdwg.mxu0
        %v875 = vld [vmem:[#allocation7] sm:$0xff]
        %v876 = vld [vmem:[#allocation7 + $0x8] sm:$0xff]
        %v877 = vld [vmem:[#allocation7 + $0x10] sm:$0xff]
        %v878 = vld [vmem:[#allocation7 + $0x18] sm:$0xff]
        %v879 = vld [vmem:[#allocation7 + $0x20] sm:$0xff]
        %v880 = vld [vmem:[#allocation7 + $0x28] sm:$0xff]
        %v881 = vld [vmem:[#allocation7 + $0x30] sm:$0xff]
        %v882 = vld [vmem:[#allocation7 + $0x38] sm:$0xff]
        %v883 = vld [vmem:[#allocation7 + $0x40] sm:$0xff]
        %v884 = vld [vmem:[#allocation7 + $0x48] sm:$0xff]
        %v885 = vld [vmem:[#allocation7 + $0x50] sm:$0xff]
        %v886 = vld [vmem:[#allocation7 + $0x58] sm:$0xff]
        %v887 = vld [vmem:[#allocation7 + $0x60] sm:$0xff]
        %v888 = vld [vmem:[#allocation7 + $0x68] sm:$0xff]
        %v889 = vld [vmem:[#allocation7 + $0x70] sm:$0xff]
        %v890 = vld [vmem:[#allocation7 + $0x78] sm:$0xff]
        %891 = vmatprep.subr.mxu0 0.0
        %892 = vmatpush1.xpose.msra.mxu0 %v875
        %893 = vmatprep.subr.mxu0 0.0
        %894 = vmatpush1.xpose.msra.mxu0 %v876
        %895 = vmatprep.subr.mxu0 0.0
        %896 = vmatpush1.xpose.msra.mxu0 %v877
        %897 = vmatprep.subr.mxu0 0.0
        %898 = vmatpush1.xpose.msra.mxu0 %v878
        %899 = vmatprep.subr.mxu0 0.0
        %900 = vmatpush1.xpose.msra.mxu0 %v879
        %901 = vmatprep.subr.mxu0 0.0
        %902 = vmatpush1.xpose.msra.mxu0 %v880
        %903 = vmatprep.subr.mxu0 0.0
        %904 = vmatpush1.xpose.msra.mxu0 %v881
        %905 = vmatprep.subr.mxu0 0.0
        %906 = vmatpush1.xpose.msra.mxu0 %v882
        %907 = vmatprep.subr.mxu0 0.0
        %908 = vmatpush1.xpose.msra.mxu0 %v883
        %909 = vmatprep.subr.mxu0 0.0
        %910 = vmatpush1.xpose.msra.mxu0 %v884
        %911 = vmatprep.subr.mxu0 0.0
        %912 = vmatpush1.xpose.msra.mxu0 %v885
        %913 = vmatprep.subr.mxu0 0.0
        %914 = vmatpush1.xpose.msra.mxu0 %v886
        %915 = vmatprep.subr.mxu0 0.0
        %916 = vmatpush1.xpose.msra.mxu0 %v887
        %917 = vmatprep.subr.mxu0 0.0
        %918 = vmatpush1.xpose.msra.mxu0 %v888
        %919 = vmatprep.subr.mxu0 0.0
        %920 = vmatpush1.xpose.msra.mxu0 %v889
        %921 = vmatprep.subr.mxu0 0.0
        %922 = vmatpush1.xpose.msra.mxu0 %v890
        %923 = vmatprep.subr.mxu0 0.0
        %924 = vmatpush1.xpose.msra.mxu0 0.0
        %925 = vmatprep.subr.mxu0 0.0
        %926 = vmatpush1.xpose.msra.mxu0 0.0
        %927 = vmatprep.subr.mxu0 0.0
        %928 = vmatpush1.xpose.msra.mxu0 0.0
        %929 = vmatprep.subr.mxu0 0.0
        %930 = vmatpush1.xpose.msra.mxu0 0.0
        %931 = vmatprep.subr.mxu0 0.0
        %932 = vmatpush1.xpose.msra.mxu0 0.0
        %933 = vmatprep.subr.mxu0 0.0
        %934 = vmatpush1.xpose.msra.mxu0 0.0
        %935 = vmatprep.subr.mxu0 0.0
        %936 = vmatpush1.xpose.msra.mxu0 0.0
        %937 = vmatprep.subr.mxu0 0.0
        %938 = vmatpush1.xpose.msra.mxu0 0.0
        %939 = vmatprep.subr.mxu0 0.0
        %940 = vmatpush1.xpose.msra.mxu0 0.0
        %941 = vmatprep.subr.mxu0 0.0
        %942 = vmatpush1.xpose.msra.mxu0 0.0
        %943 = vmatprep.subr.mxu0 0.0
        %944 = vmatpush1.xpose.msra.mxu0 0.0
        %945 = vmatprep.subr.mxu0 0.0
        %946 = vmatpush1.xpose.msra.mxu0 0.0
        %947 = vmatprep.subr.mxu0 0.0
        %948 = vmatpush1.xpose.msra.mxu0 0.0
        %949 = vmatprep.subr.mxu0 0.0
        %950 = vmatpush1.xpose.msra.mxu0 0.0
        %951 = vmatprep.subr.mxu0 0.0
        %952 = vmatpush1.xpose.msra.mxu0 0.0
        %953 = vmatprep.subr.mxu0 0.0
        %954 = vmatpush1.xpose.msra.mxu0 0.0
        %955 = vmatprep.mubr.f32.mxu0 0.0
        %956 = vmatmul.mubr.f32.gmra.mrb[0].mxu0 %v746
        %v957 = vpop.f32.mrb[0].mxu0
        %v958 = vadd.f32 0.0, %v957
        %v959 = vpop.f32.mrb[0].mxu0
        %960 = vmatprep.mubr.f32.mxu0 0.0
        %961 = vmatmul.mubr.f32.gmra.mrb[0].mxu0 %v747
        %v962 = vpop.f32.mrb[0].mxu0
        %v963 = vadd.f32 0.0, %v962
        %v964 = vpop.f32.mrb[0].mxu0
        %965 = vmatprep.mubr.f32.mxu0 0.0
        %966 = vmatmul.mubr.f32.gmra.mrb[0].mxu0 %v748
        %v967 = vpop.f32.mrb[0].mxu0
        %v968 = vadd.f32 0.0, %v967
        %v969 = vpop.f32.mrb[0].mxu0
        %970 = vmatprep.mubr.f32.mxu0 0.0
        %971 = vmatmul.mubr.f32.gmra.mrb[0].mxu0 %v749
        %v972 = vpop.f32.mrb[0].mxu0
        %v973 = vadd.f32 0.0, %v972
        %v974 = vpop.f32.mrb[0].mxu0
        %975 = vmatprep.mubr.f32.mxu0 0.0
        %976 = vmatmul.mubr.f32.gmra.mrb[0].mxu0 %v750
        %v977 = vpop.f32.mrb[0].mxu0
        %v978 = vadd.f32 0.0, %v977
        %v979 = vpop.f32.mrb[0].mxu0
        %980 = vmatprep.mubr.f32.mxu0 0.0
        %981 = vmatmul.mubr.f32.gmra.mrb[0].mxu0 %v751
        %v982 = vpop.f32.mrb[0].mxu0
        %v983 = vadd.f32 0.0, %v982
        %v984 = vpop.f32.mrb[0].mxu0
        %985 = vmatprep.mubr.f32.mxu0 0.0
        %986 = vmatmul.mubr.f32.gmra.mrb[0].mxu0 %v752
        %v987 = vpop.f32.mrb[0].mxu0
        %v988 = vadd.f32 0.0, %v987
        %v989 = vpop.f32.mrb[0].mxu0
        %990 = vmatprep.mubr.f32.mxu0 0.0
        %991 = vmatmul.mubr.f32.gmra.mrb[0].mxu0 %v753
        %v992 = vpop.f32.mrb[0].mxu0
        %v993 = vadd.f32 0.0, %v992
        %v994 = vpop.f32.mrb[0].mxu0
        %995 = vdwg.mxu0
        %v996 = vld [vmem:[#allocation8] sm:$0xff]
        %v997 = vld [vmem:[#allocation8 + $0x8] sm:$0xff]
        %v998 = vld [vmem:[#allocation8 + $0x10] sm:$0xff]
        %v999 = vld [vmem:[#allocation8 + $0x18] sm:$0xff]
        %v1000 = vld [vmem:[#allocation8 + $0x20] sm:$0xff]
        %v1001 = vld [vmem:[#allocation8 + $0x28] sm:$0xff]
        %v1002 = vld [vmem:[#allocation8 + $0x30] sm:$0xff]
        %v1003 = vld [vmem:[#allocation8 + $0x38] sm:$0xff]
        %v1004 = vld [vmem:[#allocation8 + $0x40] sm:$0xff]
        %v1005 = vld [vmem:[#allocation8 + $0x48] sm:$0xff]
        %v1006 = vld [vmem:[#allocation8 + $0x50] sm:$0xff]
        %v1007 = vld [vmem:[#allocation8 + $0x58] sm:$0xff]
        %v1008 = vld [vmem:[#allocation8 + $0x60] sm:$0xff]
        %v1009 = vld [vmem:[#allocation8 + $0x68] sm:$0xff]
        %v1010 = vld [vmem:[#allocation8 + $0x70] sm:$0xff]
        %v1011 = vld [vmem:[#allocation8 + $0x78] sm:$0xff]
        %1012 = vmatprep.subr.mxu0 0.0
        %1013 = vmatpush1.xpose.msra.mxu0 %v996
        %1014 = vmatprep.subr.mxu0 0.0
        %1015 = vmatpush1.xpose.msra.mxu0 %v997
        %1016 = vmatprep.subr.mxu0 0.0
        %1017 = vmatpush1.xpose.msra.mxu0 %v998
        %1018 = vmatprep.subr.mxu0 0.0
        %1019 = vmatpush1.xpose.msra.mxu0 %v999
        %1020 = vmatprep.subr.mxu0 0.0
        %1021 = vmatpush1.xpose.msra.mxu0 %v1000
        %1022 = vmatprep.subr.mxu0 0.0
        %1023 = vmatpush1.xpose.msra.mxu0 %v1001
        %1024 = vmatprep.subr.mxu0 0.0
        %1025 = vmatpush1.xpose.msra.mxu0 %v1002
        %1026 = vmatprep.subr.mxu0 0.0
        %1027 = vmatpush1.xpose.msra.mxu0 %v1003
        %1028 = vmatprep.subr.mxu0 0.0
        %1029 = vmatpush1.xpose.msra.mxu0 %v1004
        %1030 = vmatprep.subr.mxu0 0.0
        %1031 = vmatpush1.xpose.msra.mxu0 %v1005
        %1032 = vmatprep.subr.mxu0 0.0
        %1033 = vmatpush1.xpose.msra.mxu0 %v1006
        %1034 = vmatprep.subr.mxu0 0.0
        %1035 = vmatpush1.xpose.msra.mxu0 %v1007
        %1036 = vmatprep.subr.mxu0 0.0
        %1037 = vmatpush1.xpose.msra.mxu0 %v1008
        %1038 = vmatprep.subr.mxu0 0.0
        %1039 = vmatpush1.xpose.msra.mxu0 %v1009
        %1040 = vmatprep.subr.mxu0 0.0
        %1041 = vmatpush1.xpose.msra.mxu0 %v1010
        %1042 = vmatprep.subr.mxu0 0.0
        %1043 = vmatpush1.xpose.msra.mxu0 %v1011
        %1044 = vmatprep.subr.mxu0 0.0
        %1045 = vmatpush1.xpose.msra.mxu0 0.0
        %1046 = vmatprep.subr.mxu0 0.0
        %1047 = vmatpush1.xpose.msra.mxu0 0.0
        %1048 = vmatprep.subr.mxu0 0.0
        %1049 = vmatpush1.xpose.msra.mxu0 0.0
        %1050 = vmatprep.subr.mxu0 0.0
        %1051 = vmatpush1.xpose.msra.mxu0 0.0
        %1052 = vmatprep.subr.mxu0 0.0
        %1053 = vmatpush1.xpose.msra.mxu0 0.0
        %1054 = vmatprep.subr.mxu0 0.0
        %1055 = vmatpush1.xpose.msra.mxu0 0.0
        %1056 = vmatprep.subr.mxu0 0.0
        %1057 = vmatpush1.xpose.msra.mxu0 0.0
        %1058 = vmatprep.subr.mxu0 0.0
        %1059 = vmatpush1.xpose.msra.mxu0 0.0
        %1060 = vmatprep.subr.mxu0 0.0
        %1061 = vmatpush1.xpose.msra.mxu0 0.0
        %1062 = vmatprep.subr.mxu0 0.0
        %1063 = vmatpush1.xpose.msra.mxu0 0.0
        %1064 = vmatprep.subr.mxu0 0.0
        %1065 = vmatpush1.xpose.msra.mxu0 0.0
        %1066 = vmatprep.subr.mxu0 0.0
        %1067 = vmatpush1.xpose.msra.mxu0 0.0
        %1068 = vmatprep.subr.mxu0 0.0
        %1069 = vmatpush1.xpose.msra.mxu0 0.0
        %1070 = vmatprep.subr.mxu0 0.0
        %1071 = vmatpush1.xpose.msra.mxu0 0.0
        %1072 = vmatprep.subr.mxu0 0.0
        %1073 = vmatpush1.xpose.msra.mxu0 0.0
        %1074 = vmatprep.subr.mxu0 0.0
        %1075 = vmatpush1.xpose.msra.mxu0 0.0
        %1076 = vmatprep.mubr.f32.mxu0 0.0
        %1077 = vmatmul.mubr.f32.gmra.mrb[0].mxu0 %v746
        %v1078 = vpop.f32.mrb[0].mxu0
        %v1079 = vadd.f32 0.0, %v1078
        %v1080 = vpop.f32.mrb[0].mxu0
        %1081 = vmatprep.mubr.f32.mxu0 0.0
        %1082 = vmatmul.mubr.f32.gmra.mrb[0].mxu0 %v747
        %v1083 = vpop.f32.mrb[0].mxu0
        %v1084 = vadd.f32 0.0, %v1083
        %v1085 = vpop.f32.mrb[0].mxu0
        %1086 = vmatprep.mubr.f32.mxu0 0.0
        %1087 = vmatmul.mubr.f32.gmra.mrb[0].mxu0 %v748
        %v1088 = vpop.f32.mrb[0].mxu0
        %v1089 = vadd.f32 0.0, %v1088
        %v1090 = vpop.f32.mrb[0].mxu0
        %1091 = vmatprep.mubr.f32.mxu0 0.0
        %1092 = vmatmul.mubr.f32.gmra.mrb[0].mxu0 %v749
        %v1093 = vpop.f32.mrb[0].mxu0
        %v1094 = vadd.f32 0.0, %v1093
        %v1095 = vpop.f32.mrb[0].mxu0
        %1096 = vmatprep.mubr.f32.mxu0 0.0
        %1097 = vmatmul.mubr.f32.gmra.mrb[0].mxu0 %v750
        %v1098 = vpop.f32.mrb[0].mxu0
        %v1099 = vadd.f32 0.0, %v1098
        %v1100 = vpop.f32.mrb[0].mxu0
        %1101 = vmatprep.mubr.f32.mxu0 0.0
        %1102 = vmatmul.mubr.f32.gmra.mrb[0].mxu0 %v751
        %v1103 = vpop.f32.mrb[0].mxu0
        %v1104 = vadd.f32 0.0, %v1103
        %v1105 = vpop.f32.mrb[0].mxu0
        %1106 = vmatprep.mubr.f32.mxu0 0.0
        %1107 = vmatmul.mubr.f32.gmra.mrb[0].mxu0 %v752
        %v1108 = vpop.f32.mrb[0].mxu0
        %v1109 = vadd.f32 0.0, %v1108
        %v1110 = vpop.f32.mrb[0].mxu0
        %1111 = vmatprep.mubr.f32.mxu0 0.0
        %1112 = vmatmul.mubr.f32.gmra.mrb[0].mxu0 %v753
        %v1113 = vpop.f32.mrb[0].mxu0
        %v1114 = vadd.f32 0.0, %v1113
        %v1115 = vpop.f32.mrb[0].mxu0
        %1116 = vdwg.mxu0
        %vm1117 = vcmask 261120
        %v1119 = vsel %vm1117, %v837, 0
        %v1122 = vsel %vm1117, %v842, 0
        %v1125 = vsel %vm1117, %v847, 0
        %v1128 = vsel %vm1117, %v852, 0
        %v1131 = vsel %vm1117, %v857, 0
        %v1134 = vsel %vm1117, %v862, 0
        %v1137 = vsel %vm1117, %v867, 0
        %v1140 = vsel %vm1117, %v872, 0
        %v1143 = vsel %vm1117, %v958, 0
        %v1146 = vsel %vm1117, %v963, 0
        %v1149 = vsel %vm1117, %v968, 0
        %v1152 = vsel %vm1117, %v973, 0
        %v1155 = vsel %vm1117, %v978, 0
        %v1158 = vsel %vm1117, %v983, 0
        %v1161 = vsel %vm1117, %v988, 0
        %v1164 = vsel %vm1117, %v993, 0
        %1166 = vmatprep.subr.mxu0 0.0
        %1167 = vmatpush1.xpose.msra.mxu0 %v1143
        %1168 = vmatprep.subr.mxu0 0.0
        %1169 = vmatpush1.xpose.msra.mxu0 %v1146
        %1170 = vmatprep.subr.mxu0 0.0
        %1171 = vmatpush1.xpose.msra.mxu0 %v1149
        %1172 = vmatprep.subr.mxu0 0.0
        %1173 = vmatpush1.xpose.msra.mxu0 %v1152
        %1174 = vmatprep.subr.mxu0 0.0
        %1175 = vmatpush1.xpose.msra.mxu0 %v1155
        %1176 = vmatprep.subr.mxu0 0.0
        %1177 = vmatpush1.xpose.msra.mxu0 %v1158
        %1178 = vmatprep.subr.mxu0 0.0
        %1179 = vmatpush1.xpose.msra.mxu0 %v1161
        %1180 = vmatprep.subr.mxu0 0.0
        %1181 = vmatpush1.xpose.msra.mxu0 %v1164
        %1182 = vmatprep.subr.mxu0 0.0
        %1183 = vmatpush1.xpose.msra.mxu0 0.0
        %1184 = vmatprep.subr.mxu0 0.0
        %1185 = vmatpush1.xpose.msra.mxu0 0.0
        %1186 = vmatprep.subr.mxu0 0.0
        %1187 = vmatpush1.xpose.msra.mxu0 0.0
        %1188 = vmatprep.subr.mxu0 0.0
        %1189 = vmatpush1.xpose.msra.mxu0 0.0
        %1190 = vmatprep.subr.mxu0 0.0
        %1191 = vmatpush1.xpose.msra.mxu0 0.0
        %1192 = vmatprep.subr.mxu0 0.0
        %1193 = vmatpush1.xpose.msra.mxu0 0.0
        %1194 = vmatprep.subr.mxu0 0.0
        %1195 = vmatpush1.xpose.msra.mxu0 0.0
        %1196 = vmatprep.subr.mxu0 0.0
        %1197 = vmatpush1.xpose.msra.mxu0 0.0
        %1198 = vmatprep.subr.mxu0 0.0
        %1199 = vmatpush1.xpose.msra.mxu0 0.0
        %1200 = vmatprep.subr.mxu0 0.0
        %1201 = vmatpush1.xpose.msra.mxu0 0.0
        %1202 = vmatprep.subr.mxu0 0.0
        %1203 = vmatpush1.xpose.msra.mxu0 0.0
        %1204 = vmatprep.subr.mxu0 0.0
        %1205 = vmatpush1.xpose.msra.mxu0 0.0
        %1206 = vmatprep.subr.mxu0 0.0
        %1207 = vmatpush1.xpose.msra.mxu0 0.0
        %1208 = vmatprep.subr.mxu0 0.0
        %1209 = vmatpush1.xpose.msra.mxu0 0.0
        %1210 = vmatprep.subr.mxu0 0.0
        %1211 = vmatpush1.xpose.msra.mxu0 0.0
        %1212 = vmatprep.subr.mxu0 0.0
        %1213 = vmatpush1.xpose.msra.mxu0 0.0
        %1214 = vmatprep.subr.mxu0 0.0
        %1215 = vmatpush1.xpose.msra.mxu0 0.0
        %1216 = vmatprep.subr.mxu0 0.0
        %1217 = vmatpush1.xpose.msra.mxu0 0.0
        %1218 = vmatprep.subr.mxu0 0.0
        %1219 = vmatpush1.xpose.msra.mxu0 0.0
        %1220 = vmatprep.subr.mxu0 0.0
        %1221 = vmatpush1.xpose.msra.mxu0 0.0
        %1222 = vmatprep.subr.mxu0 0.0
        %1223 = vmatpush1.xpose.msra.mxu0 0.0
        %1224 = vmatprep.subr.mxu0 0.0
        %1225 = vmatpush1.xpose.msra.mxu0 0.0
        %1226 = vmatprep.subr.mxu0 0.0
        %1227 = vmatpush1.xpose.msra.mxu0 0.0
        %1228 = vmatprep.subr.mxu0 0.0
        %1229 = vmatpush1.xpose.msra.mxu0 0.0
        %1230 = vmatprep.mubr.f32.mxu0 0.0
        %1231 = vmatmul.mubr.f32.gmra.mrb[0].mxu0 %v1119
        %v1232 = vpop.f32.mrb[0].mxu0
        %v1233 = vadd.f32 0.0, %v1232
        %v1234 = vpop.f32.mrb[0].mxu0
        %1235 = vmatprep.mubr.f32.mxu0 0.0
        %1236 = vmatmul.mubr.f32.gmra.mrb[0].mxu0 %v1122
        %v1237 = vpop.f32.mrb[0].mxu0
        %v1238 = vadd.f32 0.0, %v1237
        %v1239 = vpop.f32.mrb[0].mxu0
        %1240 = vmatprep.mubr.f32.mxu0 0.0
        %1241 = vmatmul.mubr.f32.gmra.mrb[0].mxu0 %v1125
        %v1242 = vpop.f32.mrb[0].mxu0
        %v1243 = vadd.f32 0.0, %v1242
        %v1244 = vpop.f32.mrb[0].mxu0
        %1245 = vmatprep.mubr.f32.mxu0 0.0
        %1246 = vmatmul.mubr.f32.gmra.mrb[0].mxu0 %v1128
        %v1247 = vpop.f32.mrb[0].mxu0
        %v1248 = vadd.f32 0.0, %v1247
        %v1249 = vpop.f32.mrb[0].mxu0
        %1250 = vmatprep.mubr.f32.mxu0 0.0
        %1251 = vmatmul.mubr.f32.gmra.mrb[0].mxu0 %v1131
        %v1252 = vpop.f32.mrb[0].mxu0
        %v1253 = vadd.f32 0.0, %v1252
        %v1254 = vpop.f32.mrb[0].mxu0
        %1255 = vmatprep.mubr.f32.mxu0 0.0
        %1256 = vmatmul.mubr.f32.gmra.mrb[0].mxu0 %v1134
        %v1257 = vpop.f32.mrb[0].mxu0
        %v1258 = vadd.f32 0.0, %v1257
        %v1259 = vpop.f32.mrb[0].mxu0
        %1260 = vmatprep.mubr.f32.mxu0 0.0
        %1261 = vmatmul.mubr.f32.gmra.mrb[0].mxu0 %v1137
        %v1262 = vpop.f32.mrb[0].mxu0
        %v1263 = vadd.f32 0.0, %v1262
        %v1264 = vpop.f32.mrb[0].mxu0
        %1265 = vmatprep.mubr.f32.mxu0 0.0
        %1266 = vmatmul.mubr.f32.gmra.mrb[0].mxu0 %v1140
        %v1267 = vpop.f32.mrb[0].mxu0
        %v1268 = vadd.f32 0.0, %v1267
        %v1269 = vpop.f32.mrb[0].mxu0
        %1270 = vdwg.mxu0
        %v1271 = vmul.f32 %v1233, 0.17677669
        %v1272 = vmul.f32 %v1238, 0.17677669
        %v1273 = vmul.f32 %v1243, 0.17677669
        %v1274 = vmul.f32 %v1248, 0.17677669
        %v1275 = vmul.f32 %v1253, 0.17677669
        %v1276 = vmul.f32 %v1258, 0.17677669
        %v1277 = vmul.f32 %v1263, 0.17677669
        %v1278 = vmul.f32 %v1268, 0.17677669
        %vm1279 = vcmask 523264
        %v1280 = vsel %vm1279, %v1271, -inf
        %1281 = vmax.xlane.f32.xlu0 %v1280
        %v1282 = vpop.xlane.xlu0 %1281
        %v1283 = vsel %vm1279, %v1272, -inf
        %1284 = vmax.xlane.f32.xlu0 %v1283
        %v1285 = vpop.xlane.xlu0 %1284
        %v1286 = vsel %vm1279, %v1273, -inf
        %1287 = vmax.xlane.f32.xlu0 %v1286
        %v1288 = vpop.xlane.xlu0 %1287
        %v1289 = vsel %vm1279, %v1274, -inf
        %1290 = vmax.xlane.f32.xlu0 %v1289
        %v1291 = vpop.xlane.xlu0 %1290
        %v1292 = vsel %vm1279, %v1275, -inf
        %1293 = vmax.xlane.f32.xlu0 %v1292
        %v1294 = vpop.xlane.xlu0 %1293
        %v1295 = vsel %vm1279, %v1276, -inf
        %1296 = vmax.xlane.f32.xlu0 %v1295
        %v1297 = vpop.xlane.xlu0 %1296
        %v1298 = vsel %vm1279, %v1277, -inf
        %1299 = vmax.xlane.f32.xlu0 %v1298
        %v1300 = vpop.xlane.xlu0 %1299
        %v1301 = vsel %vm1279, %v1278, -inf
        %1302 = vmax.xlane.f32.xlu0 %v1301
        %v1303 = vpop.xlane.xlu0 %1302
        %v1304 = vsub.f32 %v1271, %v1282
        %v1305 = vsub.f32 %v1272, %v1285
        %v1306 = vsub.f32 %v1273, %v1288
        %v1307 = vsub.f32 %v1274, %v1291
        %v1308 = vsub.f32 %v1275, %v1294
        %v1309 = vsub.f32 %v1276, %v1297
        %v1310 = vsub.f32 %v1277, %v1300
        %v1311 = vsub.f32 %v1278, %v1303
        %v1312 = vmul.f32 %v1304, 1.442695
        %v1313 = vpow.pop %v1312
        %v1314 = vmul.f32 %v1305, 1.442695
        %v1315 = vpow.pop %v1314
        %v1316 = vmul.f32 %v1306, 1.442695
        %v1317 = vpow.pop %v1316
        %v1318 = vmul.f32 %v1307, 1.442695
        %v1319 = vpow.pop %v1318
        %v1320 = vmul.f32 %v1308, 1.442695
        %v1321 = vpow.pop %v1320
        %v1322 = vmul.f32 %v1309, 1.442695
        %v1323 = vpow.pop %v1322
        %v1324 = vmul.f32 %v1310, 1.442695
        %v1325 = vpow.pop %v1324
        %v1326 = vmul.f32 %v1311, 1.442695
        %v1327 = vpow.pop %v1326
        %v1328 = vsel %vm1279, %v1313, 0.0
        %1329 = vadd.xlane.f32.xlu0 %v1328
        %v1330 = vpop.xlane.xlu0 %1329
        %v1331 = vsel %vm1279, %v1315, 0.0
        %1332 = vadd.xlane.f32.xlu0 %v1331
        %v1333 = vpop.xlane.xlu0 %1332
        %v1334 = vsel %vm1279, %v1317, 0.0
        %1335 = vadd.xlane.f32.xlu0 %v1334
        %v1336 = vpop.xlane.xlu0 %1335
        %v1337 = vsel %vm1279, %v1319, 0.0
        %1338 = vadd.xlane.f32.xlu0 %v1337
        %v1339 = vpop.xlane.xlu0 %1338
        %v1340 = vsel %vm1279, %v1321, 0.0
        %1341 = vadd.xlane.f32.xlu0 %v1340
        %v1342 = vpop.xlane.xlu0 %1341
        %v1343 = vsel %vm1279, %v1323, 0.0
        %1344 = vadd.xlane.f32.xlu0 %v1343
        %v1345 = vpop.xlane.xlu0 %1344
        %v1346 = vsel %vm1279, %v1325, 0.0
        %1347 = vadd.xlane.f32.xlu0 %v1346
        %v1348 = vpop.xlane.xlu0 %1347
        %v1349 = vsel %vm1279, %v1327, 0.0
        %1350 = vadd.xlane.f32.xlu0 %v1349
        %v1351 = vpop.xlane.xlu0 %1350
        %v1352 = vrcp.pop %v1330
        %v1353 = vmul.f32 %v1313, %v1352
        %v1354 = vrcp.pop %v1333
        %v1355 = vmul.f32 %v1315, %v1354
        %v1356 = vrcp.pop %v1336
        %v1357 = vmul.f32 %v1317, %v1356
        %v1358 = vrcp.pop %v1339
        %v1359 = vmul.f32 %v1319, %v1358
        %v1360 = vrcp.pop %v1342
        %v1361 = vmul.f32 %v1321, %v1360
        %v1362 = vrcp.pop %v1345
        %v1363 = vmul.f32 %v1323, %v1362
        %v1364 = vrcp.pop %v1348
        %v1365 = vmul.f32 %v1325, %v1364
        %v1366 = vrcp.pop %v1351
        %v1367 = vmul.f32 %v1327, %v1366
        %v1369 = vsel %vm1279, %v1353, 0
        %v1372 = vsel %vm1279, %v1355, 0
        %v1375 = vsel %vm1279, %v1357, 0
        %v1378 = vsel %vm1279, %v1359, 0
        %v1381 = vsel %vm1279, %v1361, 0
        %v1384 = vsel %vm1279, %v1363, 0
        %v1387 = vsel %vm1279, %v1365, 0
        %v1390 = vsel %vm1279, %v1367, 0
        %1392 = vmatprep.subr.mxu0 0.0
        %1393 = vmatpush1.msra.mxu0 %v1079
        %1394 = vmatprep.subr.mxu0 0.0
        %1395 = vmatpush1.msra.mxu0 %v1084
        %1396 = vmatprep.subr.mxu0 0.0
        %1397 = vmatpush1.msra.mxu0 %v1089
        %1398 = vmatprep.subr.mxu0 0.0
        %1399 = vmatpush1.msra.mxu0 %v1094
        %1400 = vmatprep.subr.mxu0 0.0
        %1401 = vmatpush1.msra.mxu0 %v1099
        %1402 = vmatprep.subr.mxu0 0.0
        %1403 = vmatpush1.msra.mxu0 %v1104
        %1404 = vmatprep.subr.mxu0 0.0
        %1405 = vmatpush1.msra.mxu0 %v1109
        %1406 = vmatprep.subr.mxu0 0.0
        %1407 = vmatpush1.msra.mxu0 %v1114
        %1408 = vmatprep.subr.mxu0 0.0
        %1409 = vmatpush1.msra.mxu0 0.0
        %1410 = vmatprep.subr.mxu0 0.0
        %1411 = vmatpush1.msra.mxu0 0.0
        %1412 = vmatprep.subr.mxu0 0.0
        %1413 = vmatpush1.msra.mxu0 0.0
        %1414 = vmatprep.subr.mxu0 0.0
        %1415 = vmatpush1.msra.mxu0 0.0
        %1416 = vmatprep.subr.mxu0 0.0
        %1417 = vmatpush1.msra.mxu0 0.0
        %1418 = vmatprep.subr.mxu0 0.0
        %1419 = vmatpush1.msra.mxu0 0.0
        %1420 = vmatprep.subr.mxu0 0.0
        %1421 = vmatpush1.msra.mxu0 0.0
        %1422 = vmatprep.subr.mxu0 0.0
        %1423 = vmatpush1.msra.mxu0 0.0
        %1424 = vmatprep.subr.mxu0 0.0
        %1425 = vmatpush1.msra.mxu0 0.0
        %1426 = vmatprep.subr.mxu0 0.0
        %1427 = vmatpush1.msra.mxu0 0.0
        %1428 = vmatprep.subr.mxu0 0.0
        %1429 = vmatpush1.msra.mxu0 0.0
        %1430 = vmatprep.subr.mxu0 0.0
        %1431 = vmatpush1.msra.mxu0 0.0
        %1432 = vmatprep.subr.mxu0 0.0
        %1433 = vmatpush1.msra.mxu0 0.0
        %1434 = vmatprep.subr.mxu0 0.0
        %1435 = vmatpush1.msra.mxu0 0.0
        %1436 = vmatprep.subr.mxu0 0.0
        %1437 = vmatpush1.msra.mxu0 0.0
        %1438 = vmatprep.subr.mxu0 0.0
        %1439 = vmatpush1.msra.mxu0 0.0
        %1440 = vmatprep.subr.mxu0 0.0
        %1441 = vmatpush1.msra.mxu0 0.0
        %1442 = vmatprep.subr.mxu0 0.0
        %1443 = vmatpush1.msra.mxu0 0.0
        %1444 = vmatprep.subr.mxu0 0.0
        %1445 = vmatpush1.msra.mxu0 0.0
        %1446 = vmatprep.subr.mxu0 0.0
        %1447 = vmatpush1.msra.mxu0 0.0
        %1448 = vmatprep.subr.mxu0 0.0
        %1449 = vmatpush1.msra.mxu0 0.0
        %1450 = vmatprep.subr.mxu0 0.0
        %1451 = vmatpush1.msra.mxu0 0.0
        %1452 = vmatprep.subr.mxu0 0.0
        %1453 = vmatpush1.msra.mxu0 0.0
        %1454 = vmatprep.subr.mxu0 0.0
        %1455 = vmatpush1.msra.mxu0 0.0
        %1456 = vmatprep.mubr.f32.mxu0 0.0
        %1457 = vmatmul.mubr.f32.gmra.mrb[0].mxu0 %v1369
        %v1458 = vpop.f32.mrb[0].mxu0
        %v1459 = vadd.f32 0.0, %v1458
        %v1460 = vpop.f32.mrb[0].mxu0
        %1461 = vmatprep.mubr.f32.mxu0 0.0
        %1462 = vmatmul.mubr.f32.gmra.mrb[0].mxu0 %v1372
        %v1463 = vpop.f32.mrb[0].mxu0
        %v1464 = vadd.f32 0.0, %v1463
        %v1465 = vpop.f32.mrb[0].mxu0
        %1466 = vmatprep.mubr.f32.mxu0 0.0
        %1467 = vmatmul.mubr.f32.gmra.mrb[0].mxu0 %v1375
        %v1468 = vpop.f32.mrb[0].mxu0
        %v1469 = vadd.f32 0.0, %v1468
        %v1470 = vpop.f32.mrb[0].mxu0
        %1471 = vmatprep.mubr.f32.mxu0 0.0
        %1472 = vmatmul.mubr.f32.gmra.mrb[0].mxu0 %v1378
        %v1473 = vpop.f32.mrb[0].mxu0
        %v1474 = vadd.f32 0.0, %v1473
        %v1475 = vpop.f32.mrb[0].mxu0
        %1476 = vmatprep.mubr.f32.mxu0 0.0
        %1477 = vmatmul.mubr.f32.gmra.mrb[0].mxu0 %v1381
        %v1478 = vpop.f32.mrb[0].mxu0
        %v1479 = vadd.f32 0.0, %v1478
        %v1480 = vpop.f32.mrb[0].mxu0
        %1481 = vmatprep.mubr.f32.mxu0 0.0
        %1482 = vmatmul.mubr.f32.gmra.mrb[0].mxu0 %v1384
        %v1483 = vpop.f32.mrb[0].mxu0
        %v1484 = vadd.f32 0.0, %v1483
        %v1485 = vpop.f32.mrb[0].mxu0
        %1486 = vmatprep.mubr.f32.mxu0 0.0
        %1487 = vmatmul.mubr.f32.gmra.mrb[0].mxu0 %v1387
        %v1488 = vpop.f32.mrb[0].mxu0
        %v1489 = vadd.f32 0.0, %v1488
        %v1490 = vpop.f32.mrb[0].mxu0
        %1491 = vmatprep.mubr.f32.mxu0 0.0
        %1492 = vmatmul.mubr.f32.gmra.mrb[0].mxu0 %v1390
        %v1493 = vpop.f32.mrb[0].mxu0
        %v1494 = vadd.f32 0.0, %v1493
        %v1495 = vpop.f32.mrb[0].mxu0
        %1496 = vdwg.mxu0
        %1497 = vrot.lane.b32.xlu0 %v837, 96
        %v1498 = vpop.permute.xlu0 %1497
        %1499 = vrot.lane.b32.xlu0 %v842, 96
        %v1500 = vpop.permute.xlu0 %1499
        %1501 = vrot.lane.b32.xlu0 %v847, 96
        %v1502 = vpop.permute.xlu0 %1501
        %1503 = vrot.lane.b32.xlu0 %v852, 96
        %v1504 = vpop.permute.xlu0 %1503
        %1505 = vrot.lane.b32.xlu0 %v857, 96
        %v1506 = vpop.permute.xlu0 %1505
        %1507 = vrot.lane.b32.xlu0 %v862, 96
        %v1508 = vpop.permute.xlu0 %1507
        %1509 = vrot.lane.b32.xlu0 %v867, 96
        %v1510 = vpop.permute.xlu0 %1509
        %1511 = vrot.lane.b32.xlu0 %v872, 96
        %v1512 = vpop.permute.xlu0 %1511
        %1513 = vrot.lane.b32.xlu0 %v958, 96
        %v1514 = vpop.permute.xlu0 %1513
        %1515 = vrot.lane.b32.xlu0 %v963, 96
        %v1516 = vpop.permute.xlu0 %1515
        %1517 = vrot.lane.b32.xlu0 %v968, 96
        %v1518 = vpop.permute.xlu0 %1517
        %1519 = vrot.lane.b32.xlu0 %v973, 96
        %v1520 = vpop.permute.xlu0 %1519
        %1521 = vrot.lane.b32.xlu0 %v978, 96
        %v1522 = vpop.permute.xlu0 %1521
        %1523 = vrot.lane.b32.xlu0 %v983, 96
        %v1524 = vpop.permute.xlu0 %1523
        %1525 = vrot.lane.b32.xlu0 %v988, 96
        %v1526 = vpop.permute.xlu0 %1525
        %1527 = vrot.lane.b32.xlu0 %v993, 96
        %v1528 = vpop.permute.xlu0 %1527
        %v1529 = vsel %vm1117, %v1498, 0
        %v1531 = vsel %vm1117, %v1500, 0
        %v1533 = vsel %vm1117, %v1502, 0
        %v1535 = vsel %vm1117, %v1504, 0
        %v1537 = vsel %vm1117, %v1506, 0
        %v1539 = vsel %vm1117, %v1508, 0
        %v1541 = vsel %vm1117, %v1510, 0
        %v1543 = vsel %vm1117, %v1512, 0
        %v1545 = vsel %vm1117, %v1514, 0
        %v1547 = vsel %vm1117, %v1516, 0
        %v1549 = vsel %vm1117, %v1518, 0
        %v1551 = vsel %vm1117, %v1520, 0
        %v1553 = vsel %vm1117, %v1522, 0
        %v1555 = vsel %vm1117, %v1524, 0
        %v1557 = vsel %vm1117, %v1526, 0
        %v1559 = vsel %vm1117, %v1528, 0
        %1561 = vmatprep.subr.mxu0 0.0
        %1562 = vmatpush1.xpose.msra.mxu0 %v1545
        %1563 = vmatprep.subr.mxu0 0.0
        %1564 = vmatpush1.xpose.msra.mxu0 %v1547
        %1565 = vmatprep.subr.mxu0 0.0
        %1566 = vmatpush1.xpose.msra.mxu0 %v1549
        %1567 = vmatprep.subr.mxu0 0.0
        %1568 = vmatpush1.xpose.msra.mxu0 %v1551
        %1569 = vmatprep.subr.mxu0 0.0
        %1570 = vmatpush1.xpose.msra.mxu0 %v1553
        %1571 = vmatprep.subr.mxu0 0.0
        %1572 = vmatpush1.xpose.msra.mxu0 %v1555
        %1573 = vmatprep.subr.mxu0 0.0
        %1574 = vmatpush1.xpose.msra.mxu0 %v1557
        %1575 = vmatprep.subr.mxu0 0.0
        %1576 = vmatpush1.xpose.msra.mxu0 %v1559
        %1577 = vmatprep.subr.mxu0 0.0
        %1578 = vmatpush1.xpose.msra.mxu0 0.0
        %1579 = vmatprep.subr.mxu0 0.0
        %1580 = vmatpush1.xpose.msra.mxu0 0.0
        %1581 = vmatprep.subr.mxu0 0.0
        %1582 = vmatpush1.xpose.msra.mxu0 0.0
        %1583 = vmatprep.subr.mxu0 0.0
        %1584 = vmatpush1.xpose.msra.mxu0 0.0
        %1585 = vmatprep.subr.mxu0 0.0
        %1586 = vmatpush1.xpose.msra.mxu0 0.0
        %1587 = vmatprep.subr.mxu0 0.0
        %1588 = vmatpush1.xpose.msra.mxu0 0.0
        %1589 = vmatprep.subr.mxu0 0.0
        %1590 = vmatpush1.xpose.msra.mxu0 0.0
        %1591 = vmatprep.subr.mxu0 0.0
        %1592 = vmatpush1.xpose.msra.mxu0 0.0
        %1593 = vmatprep.subr.mxu0 0.0
        %1594 = vmatpush1.xpose.msra.mxu0 0.0
        %1595 = vmatprep.subr.mxu0 0.0
        %1596 = vmatpush1.xpose.msra.mxu0 0.0
        %1597 = vmatprep.subr.mxu0 0.0
        %1598 = vmatpush1.xpose.msra.mxu0 0.0
        %1599 = vmatprep.subr.mxu0 0.0
        %1600 = vmatpush1.xpose.msra.mxu0 0.0
        %1601 = vmatprep.subr.mxu0 0.0
        %1602 = vmatpush1.xpose.msra.mxu0 0.0
        %1603 = vmatprep.subr.mxu0 0.0
        %1604 = vmatpush1.xpose.msra.mxu0 0.0
        %1605 = vmatprep.subr.mxu0 0.0
        %1606 = vmatpush1.xpose.msra.mxu0 0.0
        %1607 = vmatprep.subr.mxu0 0.0
        %1608 = vmatpush1.xpose.msra.mxu0 0.0
        %1609 = vmatprep.subr.mxu0 0.0
        %1610 = vmatpush1.xpose.msra.mxu0 0.0
        %1611 = vmatprep.subr.mxu0 0.0
        %1612 = vmatpush1.xpose.msra.mxu0 0.0
        %1613 = vmatprep.subr.mxu0 0.0
        %1614 = vmatpush1.xpose.msra.mxu0 0.0
        %1615 = vmatprep.subr.mxu0 0.0
        %1616 = vmatpush1.xpose.msra.mxu0 0.0
        %1617 = vmatprep.subr.mxu0 0.0
        %1618 = vmatpush1.xpose.msra.mxu0 0.0
        %1619 = vmatprep.subr.mxu0 0.0
        %1620 = vmatpush1.xpose.msra.mxu0 0.0
        %1621 = vmatprep.subr.mxu0 0.0
        %1622 = vmatpush1.xpose.msra.mxu0 0.0
        %1623 = vmatprep.subr.mxu0 0.0
        %1624 = vmatpush1.xpose.msra.mxu0 0.0
        %1625 = vmatprep.mubr.f32.mxu0 0.0
        %1626 = vmatmul.mubr.f32.gmra.mrb[0].mxu0 %v1529
        %v1627 = vpop.f32.mrb[0].mxu0
        %v1628 = vadd.f32 0.0, %v1627
        %v1629 = vpop.f32.mrb[0].mxu0
        %1630 = vmatprep.mubr.f32.mxu0 0.0
        %1631 = vmatmul.mubr.f32.gmra.mrb[0].mxu0 %v1531
        %v1632 = vpop.f32.mrb[0].mxu0
        %v1633 = vadd.f32 0.0, %v1632
        %v1634 = vpop.f32.mrb[0].mxu0
        %1635 = vmatprep.mubr.f32.mxu0 0.0
        %1636 = vmatmul.mubr.f32.gmra.mrb[0].mxu0 %v1533
        %v1637 = vpop.f32.mrb[0].mxu0
        %v1638 = vadd.f32 0.0, %v1637
        %v1639 = vpop.f32.mrb[0].mxu0
        %1640 = vmatprep.mubr.f32.mxu0 0.0
        %1641 = vmatmul.mubr.f32.gmra.mrb[0].mxu0 %v1535
        %v1642 = vpop.f32.mrb[0].mxu0
        %v1643 = vadd.f32 0.0, %v1642
        %v1644 = vpop.f32.mrb[0].mxu0
        %1645 = vmatprep.mubr.f32.mxu0 0.0
        %1646 = vmatmul.mubr.f32.gmra.mrb[0].mxu0 %v1537
        %v1647 = vpop.f32.mrb[0].mxu0
        %v1648 = vadd.f32 0.0, %v1647
        %v1649 = vpop.f32.mrb[0].mxu0
        %1650 = vmatprep.mubr.f32.mxu0 0.0
        %1651 = vmatmul.mubr.f32.gmra.mrb[0].mxu0 %v1539
        %v1652 = vpop.f32.mrb[0].mxu0
        %v1653 = vadd.f32 0.0, %v1652
        %v1654 = vpop.f32.mrb[0].mxu0
        %1655 = vmatprep.mubr.f32.mxu0 0.0
        %1656 = vmatmul.mubr.f32.gmra.mrb[0].mxu0 %v1541
        %v1657 = vpop.f32.mrb[0].mxu0
        %v1658 = vadd.f32 0.0, %v1657
        %v1659 = vpop.f32.mrb[0].mxu0
        %1660 = vmatprep.mubr.f32.mxu0 0.0
        %1661 = vmatmul.mubr.f32.gmra.mrb[0].mxu0 %v1543
        %v1662 = vpop.f32.mrb[0].mxu0
        %v1663 = vadd.f32 0.0, %v1662
        %v1664 = vpop.f32.mrb[0].mxu0
        %1665 = vdwg.mxu0
        %v1666 = vmul.f32 %v1628, 0.17677669
        %v1667 = vmul.f32 %v1633, 0.17677669
        %v1668 = vmul.f32 %v1638, 0.17677669
        %v1669 = vmul.f32 %v1643, 0.17677669
        %v1670 = vmul.f32 %v1648, 0.17677669
        %v1671 = vmul.f32 %v1653, 0.17677669
        %v1672 = vmul.f32 %v1658, 0.17677669
        %v1673 = vmul.f32 %v1663, 0.17677669
        %v1674 = vsel %vm1279, %v1666, -inf
        %1675 = vmax.xlane.f32.xlu0 %v1674
        %v1676 = vpop.xlane.xlu0 %1675
        %v1677 = vsel %vm1279, %v1667, -inf
        %1678 = vmax.xlane.f32.xlu0 %v1677
        %v1679 = vpop.xlane.xlu0 %1678
        %v1680 = vsel %vm1279, %v1668, -inf
        %1681 = vmax.xlane.f32.xlu0 %v1680
        %v1682 = vpop.xlane.xlu0 %1681
        %v1683 = vsel %vm1279, %v1669, -inf
        %1684 = vmax.xlane.f32.xlu0 %v1683
        %v1685 = vpop.xlane.xlu0 %1684
        %v1686 = vsel %vm1279, %v1670, -inf
        %1687 = vmax.xlane.f32.xlu0 %v1686
        %v1688 = vpop.xlane.xlu0 %1687
        %v1689 = vsel %vm1279, %v1671, -inf
        %1690 = vmax.xlane.f32.xlu0 %v1689
        %v1691 = vpop.xlane.xlu0 %1690
        %v1692 = vsel %vm1279, %v1672, -inf
        %1693 = vmax.xlane.f32.xlu0 %v1692
        %v1694 = vpop.xlane.xlu0 %1693
        %v1695 = vsel %vm1279, %v1673, -inf
        %1696 = vmax.xlane.f32.xlu0 %v1695
        %v1697 = vpop.xlane.xlu0 %1696
        %v1698 = vsub.f32 %v1666, %v1676
        %v1699 = vsub.f32 %v1667, %v1679
        %v1700 = vsub.f32 %v1668, %v1682
        %v1701 = vsub.f32 %v1669, %v1685
        %v1702 = vsub.f32 %v1670, %v1688
        %v1703 = vsub.f32 %v1671, %v1691
        %v1704 = vsub.f32 %v1672, %v1694
        %v1705 = vsub.f32 %v1673, %v1697
        %v1706 = vmul.f32 %v1698, 1.442695
        %v1707 = vpow.pop %v1706
        %v1708 = vmul.f32 %v1699, 1.442695
        %v1709 = vpow.pop %v1708
        %v1710 = vmul.f32 %v1700, 1.442695
        %v1711 = vpow.pop %v1710
        %v1712 = vmul.f32 %v1701, 1.442695
        %v1713 = vpow.pop %v1712
        %v1714 = vmul.f32 %v1702, 1.442695
        %v1715 = vpow.pop %v1714
        %v1716 = vmul.f32 %v1703, 1.442695
        %v1717 = vpow.pop %v1716
        %v1718 = vmul.f32 %v1704, 1.442695
        %v1719 = vpow.pop %v1718
        %v1720 = vmul.f32 %v1705, 1.442695
        %v1721 = vpow.pop %v1720
        %v1722 = vsel %vm1279, %v1707, 0.0
        %1723 = vadd.xlane.f32.xlu0 %v1722
        %v1724 = vpop.xlane.xlu0 %1723
        %v1725 = vsel %vm1279, %v1709, 0.0
        %1726 = vadd.xlane.f32.xlu0 %v1725
        %v1727 = vpop.xlane.xlu0 %1726
        %v1728 = vsel %vm1279, %v1711, 0.0
        %1729 = vadd.xlane.f32.xlu0 %v1728
        %v1730 = vpop.xlane.xlu0 %1729
        %v1731 = vsel %vm1279, %v1713, 0.0
        %1732 = vadd.xlane.f32.xlu0 %v1731
        %v1733 = vpop.xlane.xlu0 %1732
        %v1734 = vsel %vm1279, %v1715, 0.0
        %1735 = vadd.xlane.f32.xlu0 %v1734
        %v1736 = vpop.xlane.xlu0 %1735
        %v1737 = vsel %vm1279, %v1717, 0.0
        %1738 = vadd.xlane.f32.xlu0 %v1737
        %v1739 = vpop.xlane.xlu0 %1738
        %v1740 = vsel %vm1279, %v1719, 0.0
        %1741 = vadd.xlane.f32.xlu0 %v1740
        %v1742 = vpop.xlane.xlu0 %1741
        %v1743 = vsel %vm1279, %v1721, 0.0
        %1744 = vadd.xlane.f32.xlu0 %v1743
        %v1745 = vpop.xlane.xlu0 %1744
        %v1746 = vrcp.pop %v1724
        %v1747 = vmul.f32 %v1707, %v1746
        %v1748 = vrcp.pop %v1727
        %v1749 = vmul.f32 %v1709, %v1748
        %v1750 = vrcp.pop %v1730
        %v1751 = vmul.f32 %v1711, %v1750
        %v1752 = vrcp.pop %v1733
        %v1753 = vmul.f32 %v1713, %v1752
        %v1754 = vrcp.pop %v1736
        %v1755 = vmul.f32 %v1715, %v1754
        %v1756 = vrcp.pop %v1739
        %v1757 = vmul.f32 %v1717, %v1756
        %v1758 = vrcp.pop %v1742
        %v1759 = vmul.f32 %v1719, %v1758
        %v1760 = vrcp.pop %v1745
        %v1761 = vmul.f32 %v1721, %v1760
        %1770 = vrot.lane.b32.xlu0 %v1079, 96
        %v1771 = vpop.permute.xlu0 %1770
        %1772 = vrot.lane.b32.xlu0 %v1084, 96
        %v1773 = vpop.permute.xlu0 %1772
        %1774 = vrot.lane.b32.xlu0 %v1089, 96
        %v1775 = vpop.permute.xlu0 %1774
        %1776 = vrot.lane.b32.xlu0 %v1094, 96
        %v1777 = vpop.permute.xlu0 %1776
        %1778 = vrot.lane.b32.xlu0 %v1099, 96
        %v1779 = vpop.permute.xlu0 %1778
        %1780 = vrot.lane.b32.xlu0 %v1104, 96
        %v1781 = vpop.permute.xlu0 %1780
        %1782 = vrot.lane.b32.xlu0 %v1109, 96
        %v1783 = vpop.permute.xlu0 %1782
        %1784 = vrot.lane.b32.xlu0 %v1114, 96
        %v1785 = vpop.permute.xlu0 %1784
        %v1795 = vsel %vm1279, %v1747, 0
        %v1798 = vsel %vm1279, %v1749, 0
        %v1801 = vsel %vm1279, %v1751, 0
        %v1804 = vsel %vm1279, %v1753, 0
        %v1807 = vsel %vm1279, %v1755, 0
        %v1810 = vsel %vm1279, %v1757, 0
        %v1813 = vsel %vm1279, %v1759, 0
        %v1816 = vsel %vm1279, %v1761, 0
        %1818 = vmatprep.subr.mxu0 0.0
        %1819 = vmatpush1.msra.mxu0 %v1771
        %1820 = vmatprep.subr.mxu0 0.0
        %1821 = vmatpush1.msra.mxu0 %v1773
        %1822 = vmatprep.subr.mxu0 0.0
        %1823 = vmatpush1.msra.mxu0 %v1775
        %1824 = vmatprep.subr.mxu0 0.0
        %1825 = vmatpush1.msra.mxu0 %v1777
        %1826 = vmatprep.subr.mxu0 0.0
        %1827 = vmatpush1.msra.mxu0 %v1779
        %1828 = vmatprep.subr.mxu0 0.0
        %1829 = vmatpush1.msra.mxu0 %v1781
        %1830 = vmatprep.subr.mxu0 0.0
        %1831 = vmatpush1.msra.mxu0 %v1783
        %1832 = vmatprep.subr.mxu0 0.0
        %1833 = vmatpush1.msra.mxu0 %v1785
        %1834 = vmatprep.subr.mxu0 0.0
        %1835 = vmatpush1.msra.mxu0 0.0
        %1836 = vmatprep.subr.mxu0 0.0
        %1837 = vmatpush1.msra.mxu0 0.0
        %1838 = vmatprep.subr.mxu0 0.0
        %1839 = vmatpush1.msra.mxu0 0.0
        %1840 = vmatprep.subr.mxu0 0.0
        %1841 = vmatpush1.msra.mxu0 0.0
        %1842 = vmatprep.subr.mxu0 0.0
        %1843 = vmatpush1.msra.mxu0 0.0
        %1844 = vmatprep.subr.mxu0 0.0
        %1845 = vmatpush1.msra.mxu0 0.0
        %1846 = vmatprep.subr.mxu0 0.0
        %1847 = vmatpush1.msra.mxu0 0.0
        %1848 = vmatprep.subr.mxu0 0.0
        %1849 = vmatpush1.msra.mxu0 0.0
        %1850 = vmatprep.subr.mxu0 0.0
        %1851 = vmatpush1.msra.mxu0 0.0
        %1852 = vmatprep.subr.mxu0 0.0
        %1853 = vmatpush1.msra.mxu0 0.0
        %1854 = vmatprep.subr.mxu0 0.0
        %1855 = vmatpush1.msra.mxu0 0.0
        %1856 = vmatprep.subr.mxu0 0.0
        %1857 = vmatpush1.msra.mxu0 0.0
        %1858 = vmatprep.subr.mxu0 0.0
        %1859 = vmatpush1.msra.mxu0 0.0
        %1860 = vmatprep.subr.mxu0 0.0
        %1861 = vmatpush1.msra.mxu0 0.0
        %1862 = vmatprep.subr.mxu0 0.0
        %1863 = vmatpush1.msra.mxu0 0.0
        %1864 = vmatprep.subr.mxu0 0.0
        %1865 = vmatpush1.msra.mxu0 0.0
        %1866 = vmatprep.subr.mxu0 0.0
        %1867 = vmatpush1.msra.mxu0 0.0
        %1868 = vmatprep.subr.mxu0 0.0
        %1869 = vmatpush1.msra.mxu0 0.0
        %1870 = vmatprep.subr.mxu0 0.0
        %1871 = vmatpush1.msra.mxu0 0.0
        %1872 = vmatprep.subr.mxu0 0.0
        %1873 = vmatpush1.msra.mxu0 0.0
        %1874 = vmatprep.subr.mxu0 0.0
        %1875 = vmatpush1.msra.mxu0 0.0
        %1876 = vmatprep.subr.mxu0 0.0
        %1877 = vmatpush1.msra.mxu0 0.0
        %1878 = vmatprep.subr.mxu0 0.0
        %1879 = vmatpush1.msra.mxu0 0.0
        %1880 = vmatprep.subr.mxu0 0.0
        %1881 = vmatpush1.msra.mxu0 0.0
        %1882 = vmatprep.mubr.f32.mxu0 0.0
        %1883 = vmatmul.mubr.f32.gmra.mrb[0].mxu0 %v1795
        %v1884 = vpop.f32.mrb[0].mxu0
        %v1885 = vadd.f32 0.0, %v1884
        %v1886 = vpop.f32.mrb[0].mxu0
        %1887 = vmatprep.mubr.f32.mxu0 0.0
        %1888 = vmatmul.mubr.f32.gmra.mrb[0].mxu0 %v1798
        %v1889 = vpop.f32.mrb[0].mxu0
        %v1890 = vadd.f32 0.0, %v1889
        %v1891 = vpop.f32.mrb[0].mxu0
        %1892 = vmatprep.mubr.f32.mxu0 0.0
        %1893 = vmatmul.mubr.f32.gmra.mrb[0].mxu0 %v1801
        %v1894 = vpop.f32.mrb[0].mxu0
        %v1895 = vadd.f32 0.0, %v1894
        %v1896 = vpop.f32.mrb[0].mxu0
        %1897 = vmatprep.mubr.f32.mxu0 0.0
        %1898 = vmatmul.mubr.f32.gmra.mrb[0].mxu0 %v1804
        %v1899 = vpop.f32.mrb[0].mxu0
        %v1900 = vadd.f32 0.0, %v1899
        %v1901 = vpop.f32.mrb[0].mxu0
        %1902 = vmatprep.mubr.f32.mxu0 0.0
        %1903 = vmatmul.mubr.f32.gmra.mrb[0].mxu0 %v1807
        %v1904 = vpop.f32.mrb[0].mxu0
        %v1905 = vadd.f32 0.0, %v1904
        %v1906 = vpop.f32.mrb[0].mxu0
        %1907 = vmatprep.mubr.f32.mxu0 0.0
        %1908 = vmatmul.mubr.f32.gmra.mrb[0].mxu0 %v1810
        %v1909 = vpop.f32.mrb[0].mxu0
        %v1910 = vadd.f32 0.0, %v1909
        %v1911 = vpop.f32.mrb[0].mxu0
        %1912 = vmatprep.mubr.f32.mxu0 0.0
        %1913 = vmatmul.mubr.f32.gmra.mrb[0].mxu0 %v1813
        %v1914 = vpop.f32.mrb[0].mxu0
        %v1915 = vadd.f32 0.0, %v1914
        %v1916 = vpop.f32.mrb[0].mxu0
        %1917 = vmatprep.mubr.f32.mxu0 0.0
        %1918 = vmatmul.mubr.f32.gmra.mrb[0].mxu0 %v1816
        %v1919 = vpop.f32.mrb[0].mxu0
        %v1920 = vadd.f32 0.0, %v1919
        %v1921 = vpop.f32.mrb[0].mxu0
        %1922 = vdwg.mxu0
        %1923 = vrot.lane.b32.xlu0 %v837, 64
        %v1924 = vpop.permute.xlu0 %1923
        %1925 = vrot.lane.b32.xlu0 %v842, 64
        %v1926 = vpop.permute.xlu0 %1925
        %1927 = vrot.lane.b32.xlu0 %v847, 64
        %v1928 = vpop.permute.xlu0 %1927
        %1929 = vrot.lane.b32.xlu0 %v852, 64
        %v1930 = vpop.permute.xlu0 %1929
        %1931 = vrot.lane.b32.xlu0 %v857, 64
        %v1932 = vpop.permute.xlu0 %1931
        %1933 = vrot.lane.b32.xlu0 %v862, 64
        %v1934 = vpop.permute.xlu0 %1933
        %1935 = vrot.lane.b32.xlu0 %v867, 64
        %v1936 = vpop.permute.xlu0 %1935
        %1937 = vrot.lane.b32.xlu0 %v872, 64
        %v1938 = vpop.permute.xlu0 %1937
        %1939 = vrot.lane.b32.xlu0 %v958, 64
        %v1940 = vpop.permute.xlu0 %1939
        %1941 = vrot.lane.b32.xlu0 %v963, 64
        %v1942 = vpop.permute.xlu0 %1941
        %1943 = vrot.lane.b32.xlu0 %v968, 64
        %v1944 = vpop.permute.xlu0 %1943
        %1945 = vrot.lane.b32.xlu0 %v973, 64
        %v1946 = vpop.permute.xlu0 %1945
        %1947 = vrot.lane.b32.xlu0 %v978, 64
        %v1948 = vpop.permute.xlu0 %1947
        %1949 = vrot.lane.b32.xlu0 %v983, 64
        %v1950 = vpop.permute.xlu0 %1949
        %1951 = vrot.lane.b32.xlu0 %v988, 64
        %v1952 = vpop.permute.xlu0 %1951
        %1953 = vrot.lane.b32.xlu0 %v993, 64
        %v1954 = vpop.permute.xlu0 %1953
        %v1955 = vsel %vm1117, %v1924, 0
        %v1957 = vsel %vm1117, %v1926, 0
        %v1959 = vsel %vm1117, %v1928, 0
        %v1961 = vsel %vm1117, %v1930, 0
        %v1963 = vsel %vm1117, %v1932, 0
        %v1965 = vsel %vm1117, %v1934, 0
        %v1967 = vsel %vm1117, %v1936, 0
        %v1969 = vsel %vm1117, %v1938, 0
        %v1971 = vsel %vm1117, %v1940, 0
        %v1973 = vsel %vm1117, %v1942, 0
        %v1975 = vsel %vm1117, %v1944, 0
        %v1977 = vsel %vm1117, %v1946, 0
        %v1979 = vsel %vm1117, %v1948, 0
        %v1981 = vsel %vm1117, %v1950, 0
        %v1983 = vsel %vm1117, %v1952, 0
        %v1985 = vsel %vm1117, %v1954, 0
        %1987 = vmatprep.subr.mxu0 0.0
        %1988 = vmatpush1.xpose.msra.mxu0 %v1971
        %1989 = vmatprep.subr.mxu0 0.0
        %1990 = vmatpush1.xpose.msra.mxu0 %v1973
        %1991 = vmatprep.subr.mxu0 0.0
        %1992 = vmatpush1.xpose.msra.mxu0 %v1975
        %1993 = vmatprep.subr.mxu0 0.0
        %1994 = vmatpush1.xpose.msra.mxu0 %v1977
        %1995 = vmatprep.subr.mxu0 0.0
        %1996 = vmatpush1.xpose.msra.mxu0 %v1979
        %1997 = vmatprep.subr.mxu0 0.0
        %1998 = vmatpush1.xpose.msra.mxu0 %v1981
        %1999 = vmatprep.subr.mxu0 0.0
        %2000 = vmatpush1.xpose.msra.mxu0 %v1983
        %2001 = vmatprep.subr.mxu0 0.0
        %2002 = vmatpush1.xpose.msra.mxu0 %v1985
        %2003 = vmatprep.subr.mxu0 0.0
        %2004 = vmatpush1.xpose.msra.mxu0 0.0
        %2005 = vmatprep.subr.mxu0 0.0
        %2006 = vmatpush1.xpose.msra.mxu0 0.0
        %2007 = vmatprep.subr.mxu0 0.0
        %2008 = vmatpush1.xpose.msra.mxu0 0.0
        %2009 = vmatprep.subr.mxu0 0.0
        %2010 = vmatpush1.xpose.msra.mxu0 0.0
        %2011 = vmatprep.subr.mxu0 0.0
        %2012 = vmatpush1.xpose.msra.mxu0 0.0
        %2013 = vmatprep.subr.mxu0 0.0
        %2014 = vmatpush1.xpose.msra.mxu0 0.0
        %2015 = vmatprep.subr.mxu0 0.0
        %2016 = vmatpush1.xpose.msra.mxu0 0.0
        %2017 = vmatprep.subr.mxu0 0.0
        %2018 = vmatpush1.xpose.msra.mxu0 0.0
        %2019 = vmatprep.subr.mxu0 0.0
        %2020 = vmatpush1.xpose.msra.mxu0 0.0
        %2021 = vmatprep.subr.mxu0 0.0
        %2022 = vmatpush1.xpose.msra.mxu0 0.0
        %2023 = vmatprep.subr.mxu0 0.0
        %2024 = vmatpush1.xpose.msra.mxu0 0.0
        %2025 = vmatprep.subr.mxu0 0.0
        %2026 = vmatpush1.xpose.msra.mxu0 0.0
        %2027 = vmatprep.subr.mxu0 0.0
        %2028 = vmatpush1.xpose.msra.mxu0 0.0
        %2029 = vmatprep.subr.mxu0 0.0
        %2030 = vmatpush1.xpose.msra.mxu0 0.0
        %2031 = vmatprep.subr.mxu0 0.0
        %2032 = vmatpush1.xpose.msra.mxu0 0.0
        %2033 = vmatprep.subr.mxu0 0.0
        %2034 = vmatpush1.xpose.msra.mxu0 0.0
        %2035 = vmatprep.subr.mxu0 0.0
        %2036 = vmatpush1.xpose.msra.mxu0 0.0
        %2037 = vmatprep.subr.mxu0 0.0
        %2038 = vmatpush1.xpose.msra.mxu0 0.0
        %2039 = vmatprep.subr.mxu0 0.0
        %2040 = vmatpush1.xpose.msra.mxu0 0.0
        %2041 = vmatprep.subr.mxu0 0.0
        %2042 = vmatpush1.xpose.msra.mxu0 0.0
        %2043 = vmatprep.subr.mxu0 0.0
        %2044 = vmatpush1.xpose.msra.mxu0 0.0
        %2045 = vmatprep.subr.mxu0 0.0
        %2046 = vmatpush1.xpose.msra.mxu0 0.0
        %2047 = vmatprep.subr.mxu0 0.0
        %2048 = vmatpush1.xpose.msra.mxu0 0.0
        %2049 = vmatprep.subr.mxu0 0.0
        %2050 = vmatpush1.xpose.msra.mxu0 0.0
        %2051 = vmatprep.mubr.f32.mxu0 0.0
        %2052 = vmatmul.mubr.f32.gmra.mrb[0].mxu0 %v1955
        %v2053 = vpop.f32.mrb[0].mxu0
        %v2054 = vadd.f32 0.0, %v2053
        %v2055 = vpop.f32.mrb[0].mxu0
        %2056 = vmatprep.mubr.f32.mxu0 0.0
        %2057 = vmatmul.mubr.f32.gmra.mrb[0].mxu0 %v1957
        %v2058 = vpop.f32.mrb[0].mxu0
        %v2059 = vadd.f32 0.0, %v2058
        %v2060 = vpop.f32.mrb[0].mxu0
        %2061 = vmatprep.mubr.f32.mxu0 0.0
        %2062 = vmatmul.mubr.f32.gmra.mrb[0].mxu0 %v1959
        %v2063 = vpop.f32.mrb[0].mxu0
        %v2064 = vadd.f32 0.0, %v2063
        %v2065 = vpop.f32.mrb[0].mxu0
        %2066 = vmatprep.mubr.f32.mxu0 0.0
        %2067 = vmatmul.mubr.f32.gmra.mrb[0].mxu0 %v1961
        %v2068 = vpop.f32.mrb[0].mxu0
        %v2069 = vadd.f32 0.0, %v2068
        %v2070 = vpop.f32.mrb[0].mxu0
        %2071 = vmatprep.mubr.f32.mxu0 0.0
        %2072 = vmatmul.mubr.f32.gmra.mrb[0].mxu0 %v1963
        %v2073 = vpop.f32.mrb[0].mxu0
        %v2074 = vadd.f32 0.0, %v2073
        %v2075 = vpop.f32.mrb[0].mxu0
        %2076 = vmatprep.mubr.f32.mxu0 0.0
        %2077 = vmatmul.mubr.f32.gmra.mrb[0].mxu0 %v1965
        %v2078 = vpop.f32.mrb[0].mxu0
        %v2079 = vadd.f32 0.0, %v2078
        %v2080 = vpop.f32.mrb[0].mxu0
        %2081 = vmatprep.mubr.f32.mxu0 0.0
        %2082 = vmatmul.mubr.f32.gmra.mrb[0].mxu0 %v1967
        %v2083 = vpop.f32.mrb[0].mxu0
        %v2084 = vadd.f32 0.0, %v2083
        %v2085 = vpop.f32.mrb[0].mxu0
        %2086 = vmatprep.mubr.f32.mxu0 0.0
        %2087 = vmatmul.mubr.f32.gmra.mrb[0].mxu0 %v1969
        %v2088 = vpop.f32.mrb[0].mxu0
        %v2089 = vadd.f32 0.0, %v2088
        %v2090 = vpop.f32.mrb[0].mxu0
        %2091 = vdwg.mxu0
        %v2092 = vmul.f32 %v2054, 0.17677669
        %v2093 = vmul.f32 %v2059, 0.17677669
        %v2094 = vmul.f32 %v2064, 0.17677669
        %v2095 = vmul.f32 %v2069, 0.17677669
        %v2096 = vmul.f32 %v2074, 0.17677669
        %v2097 = vmul.f32 %v2079, 0.17677669
        %v2098 = vmul.f32 %v2084, 0.17677669
        %v2099 = vmul.f32 %v2089, 0.17677669
        %v2100 = vsel %vm1279, %v2092, -inf
        %2101 = vmax.xlane.f32.xlu0 %v2100
        %v2102 = vpop.xlane.xlu0 %2101
        %v2103 = vsel %vm1279, %v2093, -inf
        %2104 = vmax.xlane.f32.xlu0 %v2103
        %v2105 = vpop.xlane.xlu0 %2104
        %v2106 = vsel %vm1279, %v2094, -inf
        %2107 = vmax.xlane.f32.xlu0 %v2106
        %v2108 = vpop.xlane.xlu0 %2107
        %v2109 = vsel %vm1279, %v2095, -inf
        %2110 = vmax.xlane.f32.xlu0 %v2109
        %v2111 = vpop.xlane.xlu0 %2110
        %v2112 = vsel %vm1279, %v2096, -inf
        %2113 = vmax.xlane.f32.xlu0 %v2112
        %v2114 = vpop.xlane.xlu0 %2113
        %v2115 = vsel %vm1279, %v2097, -inf
        %2116 = vmax.xlane.f32.xlu0 %v2115
        %v2117 = vpop.xlane.xlu0 %2116
        %v2118 = vsel %vm1279, %v2098, -inf
        %2119 = vmax.xlane.f32.xlu0 %v2118
        %v2120 = vpop.xlane.xlu0 %2119
        %v2121 = vsel %vm1279, %v2099, -inf
        %2122 = vmax.xlane.f32.xlu0 %v2121
        %v2123 = vpop.xlane.xlu0 %2122
        %v2124 = vsub.f32 %v2092, %v2102
        %v2125 = vsub.f32 %v2093, %v2105
        %v2126 = vsub.f32 %v2094, %v2108
        %v2127 = vsub.f32 %v2095, %v2111
        %v2128 = vsub.f32 %v2096, %v2114
        %v2129 = vsub.f32 %v2097, %v2117
        %v2130 = vsub.f32 %v2098, %v2120
        %v2131 = vsub.f32 %v2099, %v2123
        %v2132 = vmul.f32 %v2124, 1.442695
        %v2133 = vpow.pop %v2132
        %v2134 = vmul.f32 %v2125, 1.442695
        %v2135 = vpow.pop %v2134
        %v2136 = vmul.f32 %v2126, 1.442695
        %v2137 = vpow.pop %v2136
        %v2138 = vmul.f32 %v2127, 1.442695
        %v2139 = vpow.pop %v2138
        %v2140 = vmul.f32 %v2128, 1.442695
        %v2141 = vpow.pop %v2140
        %v2142 = vmul.f32 %v2129, 1.442695
        %v2143 = vpow.pop %v2142
        %v2144 = vmul.f32 %v2130, 1.442695
        %v2145 = vpow.pop %v2144
        %v2146 = vmul.f32 %v2131, 1.442695
        %v2147 = vpow.pop %v2146
        %v2148 = vsel %vm1279, %v2133, 0.0
        %2149 = vadd.xlane.f32.xlu0 %v2148
        %v2150 = vpop.xlane.xlu0 %2149
        %v2151 = vsel %vm1279, %v2135, 0.0
        %2152 = vadd.xlane.f32.xlu0 %v2151
        %v2153 = vpop.xlane.xlu0 %2152
        %v2154 = vsel %vm1279, %v2137, 0.0
        %2155 = vadd.xlane.f32.xlu0 %v2154
        %v2156 = vpop.xlane.xlu0 %2155
        %v2157 = vsel %vm1279, %v2139, 0.0
        %2158 = vadd.xlane.f32.xlu0 %v2157
        %v2159 = vpop.xlane.xlu0 %2158
        %v2160 = vsel %vm1279, %v2141, 0.0
        %2161 = vadd.xlane.f32.xlu0 %v2160
        %v2162 = vpop.xlane.xlu0 %2161
        %v2163 = vsel %vm1279, %v2143, 0.0
        %2164 = vadd.xlane.f32.xlu0 %v2163
        %v2165 = vpop.xlane.xlu0 %2164
        %v2166 = vsel %vm1279, %v2145, 0.0
        %2167 = vadd.xlane.f32.xlu0 %v2166
        %v2168 = vpop.xlane.xlu0 %2167
        %v2169 = vsel %vm1279, %v2147, 0.0
        %2170 = vadd.xlane.f32.xlu0 %v2169
        %v2171 = vpop.xlane.xlu0 %2170
        %v2172 = vrcp.pop %v2150
        %v2173 = vmul.f32 %v2133, %v2172
        %v2174 = vrcp.pop %v2153
        %v2175 = vmul.f32 %v2135, %v2174
        %v2176 = vrcp.pop %v2156
        %v2177 = vmul.f32 %v2137, %v2176
        %v2178 = vrcp.pop %v2159
        %v2179 = vmul.f32 %v2139, %v2178
        %v2180 = vrcp.pop %v2162
        %v2181 = vmul.f32 %v2141, %v2180
        %v2182 = vrcp.pop %v2165
        %v2183 = vmul.f32 %v2143, %v2182
        %v2184 = vrcp.pop %v2168
        %v2185 = vmul.f32 %v2145, %v2184
        %v2186 = vrcp.pop %v2171
        %v2187 = vmul.f32 %v2147, %v2186
        %2188 = vrot.lane.b32.xlu0 %v1079, 64
        %v2189 = vpop.permute.xlu0 %2188
        %2190 = vrot.lane.b32.xlu0 %v1084, 64
        %v2191 = vpop.permute.xlu0 %2190
        %2192 = vrot.lane.b32.xlu0 %v1089, 64
        %v2193 = vpop.permute.xlu0 %2192
        %2194 = vrot.lane.b32.xlu0 %v1094, 64
        %v2195 = vpop.permute.xlu0 %2194
        %2196 = vrot.lane.b32.xlu0 %v1099, 64
        %v2197 = vpop.permute.xlu0 %2196
        %2198 = vrot.lane.b32.xlu0 %v1104, 64
        %v2199 = vpop.permute.xlu0 %2198
        %2200 = vrot.lane.b32.xlu0 %v1109, 64
        %v2201 = vpop.permute.xlu0 %2200
        %2202 = vrot.lane.b32.xlu0 %v1114, 64
        %v2203 = vpop.permute.xlu0 %2202
        %v2213 = vsel %vm1279, %v2173, 0
        %v2216 = vsel %vm1279, %v2175, 0
        %v2219 = vsel %vm1279, %v2177, 0
        %v2222 = vsel %vm1279, %v2179, 0
        %v2225 = vsel %vm1279, %v2181, 0
        %v2228 = vsel %vm1279, %v2183, 0
        %v2231 = vsel %vm1279, %v2185, 0
        %v2234 = vsel %vm1279, %v2187, 0
        %2236 = vmatprep.subr.mxu0 0.0
        %2237 = vmatpush1.msra.mxu0 %v2189
        %2238 = vmatprep.subr.mxu0 0.0
        %2239 = vmatpush1.msra.mxu0 %v2191
        %2240 = vmatprep.subr.mxu0 0.0
        %2241 = vmatpush1.msra.mxu0 %v2193
        %2242 = vmatprep.subr.mxu0 0.0
        %2243 = vmatpush1.msra.mxu0 %v2195
        %2244 = vmatprep.subr.mxu0 0.0
        %2245 = vmatpush1.msra.mxu0 %v2197
        %2246 = vmatprep.subr.mxu0 0.0
        %2247 = vmatpush1.msra.mxu0 %v2199
        %2248 = vmatprep.subr.mxu0 0.0
        %2249 = vmatpush1.msra.mxu0 %v2201
        %2250 = vmatprep.subr.mxu0 0.0
        %2251 = vmatpush1.msra.mxu0 %v2203
        %2252 = vmatprep.subr.mxu0 0.0
        %2253 = vmatpush1.msra.mxu0 0.0
        %2254 = vmatprep.subr.mxu0 0.0
        %2255 = vmatpush1.msra.mxu0 0.0
        %2256 = vmatprep.subr.mxu0 0.0
        %2257 = vmatpush1.msra.mxu0 0.0
        %2258 = vmatprep.subr.mxu0 0.0
        %2259 = vmatpush1.msra.mxu0 0.0
        %2260 = vmatprep.subr.mxu0 0.0
        %2261 = vmatpush1.msra.mxu0 0.0
        %2262 = vmatprep.subr.mxu0 0.0
        %2263 = vmatpush1.msra.mxu0 0.0
        %2264 = vmatprep.subr.mxu0 0.0
        %2265 = vmatpush1.msra.mxu0 0.0
        %2266 = vmatprep.subr.mxu0 0.0
        %2267 = vmatpush1.msra.mxu0 0.0
        %2268 = vmatprep.subr.mxu0 0.0
        %2269 = vmatpush1.msra.mxu0 0.0
        %2270 = vmatprep.subr.mxu0 0.0
        %2271 = vmatpush1.msra.mxu0 0.0
        %2272 = vmatprep.subr.mxu0 0.0
        %2273 = vmatpush1.msra.mxu0 0.0
        %2274 = vmatprep.subr.mxu0 0.0
        %2275 = vmatpush1.msra.mxu0 0.0
        %2276 = vmatprep.subr.mxu0 0.0
        %2277 = vmatpush1.msra.mxu0 0.0
        %2278 = vmatprep.subr.mxu0 0.0
        %2279 = vmatpush1.msra.mxu0 0.0
        %2280 = vmatprep.subr.mxu0 0.0
        %2281 = vmatpush1.msra.mxu0 0.0
        %2282 = vmatprep.subr.mxu0 0.0
        %2283 = vmatpush1.msra.mxu0 0.0
        %2284 = vmatprep.subr.mxu0 0.0
        %2285 = vmatpush1.msra.mxu0 0.0
        %2286 = vmatprep.subr.mxu0 0.0
        %2287 = vmatpush1.msra.mxu0 0.0
        %2288 = vmatprep.subr.mxu0 0.0
        %2289 = vmatpush1.msra.mxu0 0.0
        %2290 = vmatprep.subr.mxu0 0.0
        %2291 = vmatpush1.msra.mxu0 0.0
        %2292 = vmatprep.subr.mxu0 0.0
        %2293 = vmatpush1.msra.mxu0 0.0
        %2294 = vmatprep.subr.mxu0 0.0
        %2295 = vmatpush1.msra.mxu0 0.0
        %2296 = vmatprep.subr.mxu0 0.0
        %2297 = vmatpush1.msra.mxu0 0.0
        %2298 = vmatprep.subr.mxu0 0.0
        %2299 = vmatpush1.msra.mxu0 0.0
        %2300 = vmatprep.mubr.f32.mxu0 0.0
        %2301 = vmatmul.mubr.f32.gmra.mrb[0].mxu0 %v2213
        %v2302 = vpop.f32.mrb[0].mxu0
        %v2303 = vadd.f32 0.0, %v2302
        %v2304 = vpop.f32.mrb[0].mxu0
        %2305 = vmatprep.mubr.f32.mxu0 0.0
        %2306 = vmatmul.mubr.f32.gmra.mrb[0].mxu0 %v2216
        %v2307 = vpop.f32.mrb[0].mxu0
        %v2308 = vadd.f32 0.0, %v2307
        %v2309 = vpop.f32.mrb[0].mxu0
        %2310 = vmatprep.mubr.f32.mxu0 0.0
        %2311 = vmatmul.mubr.f32.gmra.mrb[0].mxu0 %v2219
        %v2312 = vpop.f32.mrb[0].mxu0
        %v2313 = vadd.f32 0.0, %v2312
        %v2314 = vpop.f32.mrb[0].mxu0
        %2315 = vmatprep.mubr.f32.mxu0 0.0
        %2316 = vmatmul.mubr.f32.gmra.mrb[0].mxu0 %v2222
        %v2317 = vpop.f32.mrb[0].mxu0
        %v2318 = vadd.f32 0.0, %v2317
        %v2319 = vpop.f32.mrb[0].mxu0
        %2320 = vmatprep.mubr.f32.mxu0 0.0
        %2321 = vmatmul.mubr.f32.gmra.mrb[0].mxu0 %v2225
        %v2322 = vpop.f32.mrb[0].mxu0
        %v2323 = vadd.f32 0.0, %v2322
        %v2324 = vpop.f32.mrb[0].mxu0
        %2325 = vmatprep.mubr.f32.mxu0 0.0
        %2326 = vmatmul.mubr.f32.gmra.mrb[0].mxu0 %v2228
        %v2327 = vpop.f32.mrb[0].mxu0
        %v2328 = vadd.f32 0.0, %v2327
        %v2329 = vpop.f32.mrb[0].mxu0
        %2330 = vmatprep.mubr.f32.mxu0 0.0
        %2331 = vmatmul.mubr.f32.gmra.mrb[0].mxu0 %v2231
        %v2332 = vpop.f32.mrb[0].mxu0
        %v2333 = vadd.f32 0.0, %v2332
        %v2334 = vpop.f32.mrb[0].mxu0
        %2335 = vmatprep.mubr.f32.mxu0 0.0
        %2336 = vmatmul.mubr.f32.gmra.mrb[0].mxu0 %v2234
        %v2337 = vpop.f32.mrb[0].mxu0
        %v2338 = vadd.f32 0.0, %v2337
        %v2339 = vpop.f32.mrb[0].mxu0
        %2340 = vdwg.mxu0
        %2341 = vrot.lane.b32.xlu0 %v837, 32
        %v2342 = vpop.permute.xlu0 %2341
        %2343 = vrot.lane.b32.xlu0 %v842, 32
        %v2344 = vpop.permute.xlu0 %2343
        %2345 = vrot.lane.b32.xlu0 %v847, 32
        %v2346 = vpop.permute.xlu0 %2345
        %2347 = vrot.lane.b32.xlu0 %v852, 32
        %v2348 = vpop.permute.xlu0 %2347
        %2349 = vrot.lane.b32.xlu0 %v857, 32
        %v2350 = vpop.permute.xlu0 %2349
        %2351 = vrot.lane.b32.xlu0 %v862, 32
        %v2352 = vpop.permute.xlu0 %2351
        %2353 = vrot.lane.b32.xlu0 %v867, 32
        %v2354 = vpop.permute.xlu0 %2353
        %2355 = vrot.lane.b32.xlu0 %v872, 32
        %v2356 = vpop.permute.xlu0 %2355
        %2357 = vrot.lane.b32.xlu0 %v958, 32
        %v2358 = vpop.permute.xlu0 %2357
        %2359 = vrot.lane.b32.xlu0 %v963, 32
        %v2360 = vpop.permute.xlu0 %2359
        %2361 = vrot.lane.b32.xlu0 %v968, 32
        %v2362 = vpop.permute.xlu0 %2361
        %2363 = vrot.lane.b32.xlu0 %v973, 32
        %v2364 = vpop.permute.xlu0 %2363
        %2365 = vrot.lane.b32.xlu0 %v978, 32
        %v2366 = vpop.permute.xlu0 %2365
        %2367 = vrot.lane.b32.xlu0 %v983, 32
        %v2368 = vpop.permute.xlu0 %2367
        %2369 = vrot.lane.b32.xlu0 %v988, 32
        %v2370 = vpop.permute.xlu0 %2369
        %2371 = vrot.lane.b32.xlu0 %v993, 32
        %v2372 = vpop.permute.xlu0 %2371
        %v2373 = vsel %vm1117, %v2342, 0
        %v2375 = vsel %vm1117, %v2344, 0
        %v2377 = vsel %vm1117, %v2346, 0
        %v2379 = vsel %vm1117, %v2348, 0
        %v2381 = vsel %vm1117, %v2350, 0
        %v2383 = vsel %vm1117, %v2352, 0
        %v2385 = vsel %vm1117, %v2354, 0
        %v2387 = vsel %vm1117, %v2356, 0
        %v2389 = vsel %vm1117, %v2358, 0
        %v2391 = vsel %vm1117, %v2360, 0
        %v2393 = vsel %vm1117, %v2362, 0
        %v2395 = vsel %vm1117, %v2364, 0
        %v2397 = vsel %vm1117, %v2366, 0
        %v2399 = vsel %vm1117, %v2368, 0
        %v2401 = vsel %vm1117, %v2370, 0
        %v2403 = vsel %vm1117, %v2372, 0
        %2405 = vmatprep.subr.mxu0 0.0
        %2406 = vmatpush1.xpose.msra.mxu0 %v2389
        %2407 = vmatprep.subr.mxu0 0.0
        %2408 = vmatpush1.xpose.msra.mxu0 %v2391
        %2409 = vmatprep.subr.mxu0 0.0
        %2410 = vmatpush1.xpose.msra.mxu0 %v2393
        %2411 = vmatprep.subr.mxu0 0.0
        %2412 = vmatpush1.xpose.msra.mxu0 %v2395
        %2413 = vmatprep.subr.mxu0 0.0
        %2414 = vmatpush1.xpose.msra.mxu0 %v2397
        %2415 = vmatprep.subr.mxu0 0.0
        %2416 = vmatpush1.xpose.msra.mxu0 %v2399
        %2417 = vmatprep.subr.mxu0 0.0
        %2418 = vmatpush1.xpose.msra.mxu0 %v2401
        %2419 = vmatprep.subr.mxu0 0.0
        %2420 = vmatpush1.xpose.msra.mxu0 %v2403
        %2421 = vmatprep.subr.mxu0 0.0
        %2422 = vmatpush1.xpose.msra.mxu0 0.0
        %2423 = vmatprep.subr.mxu0 0.0
        %2424 = vmatpush1.xpose.msra.mxu0 0.0
        %2425 = vmatprep.subr.mxu0 0.0
        %2426 = vmatpush1.xpose.msra.mxu0 0.0
        %2427 = vmatprep.subr.mxu0 0.0
        %2428 = vmatpush1.xpose.msra.mxu0 0.0
        %2429 = vmatprep.subr.mxu0 0.0
        %2430 = vmatpush1.xpose.msra.mxu0 0.0
        %2431 = vmatprep.subr.mxu0 0.0
        %2432 = vmatpush1.xpose.msra.mxu0 0.0
        %2433 = vmatprep.subr.mxu0 0.0
        %2434 = vmatpush1.xpose.msra.mxu0 0.0
        %2435 = vmatprep.subr.mxu0 0.0
        %2436 = vmatpush1.xpose.msra.mxu0 0.0
        %2437 = vmatprep.subr.mxu0 0.0
        %2438 = vmatpush1.xpose.msra.mxu0 0.0
        %2439 = vmatprep.subr.mxu0 0.0
        %2440 = vmatpush1.xpose.msra.mxu0 0.0
        %2441 = vmatprep.subr.mxu0 0.0
        %2442 = vmatpush1.xpose.msra.mxu0 0.0
        %2443 = vmatprep.subr.mxu0 0.0
        %2444 = vmatpush1.xpose.msra.mxu0 0.0
        %2445 = vmatprep.subr.mxu0 0.0
        %2446 = vmatpush1.xpose.msra.mxu0 0.0
        %2447 = vmatprep.subr.mxu0 0.0
        %2448 = vmatpush1.xpose.msra.mxu0 0.0
        %2449 = vmatprep.subr.mxu0 0.0
        %2450 = vmatpush1.xpose.msra.mxu0 0.0
        %2451 = vmatprep.subr.mxu0 0.0
        %2452 = vmatpush1.xpose.msra.mxu0 0.0
        %2453 = vmatprep.subr.mxu0 0.0
        %2454 = vmatpush1.xpose.msra.mxu0 0.0
        %2455 = vmatprep.subr.mxu0 0.0
        %2456 = vmatpush1.xpose.msra.mxu0 0.0
        %2457 = vmatprep.subr.mxu0 0.0
        %2458 = vmatpush1.xpose.msra.mxu0 0.0
        %2459 = vmatprep.subr.mxu0 0.0
        %2460 = vmatpush1.xpose.msra.mxu0 0.0
        %2461 = vmatprep.subr.mxu0 0.0
        %2462 = vmatpush1.xpose.msra.mxu0 0.0
        %2463 = vmatprep.subr.mxu0 0.0
        %2464 = vmatpush1.xpose.msra.mxu0 0.0
        %2465 = vmatprep.subr.mxu0 0.0
        %2466 = vmatpush1.xpose.msra.mxu0 0.0
        %2467 = vmatprep.subr.mxu0 0.0
        %2468 = vmatpush1.xpose.msra.mxu0 0.0
        %2469 = vmatprep.mubr.f32.mxu0 0.0
        %2470 = vmatmul.mubr.f32.gmra.mrb[0].mxu0 %v2373
        %v2471 = vpop.f32.mrb[0].mxu0
        %v2472 = vadd.f32 0.0, %v2471
        %v2473 = vpop.f32.mrb[0].mxu0
        %2474 = vmatprep.mubr.f32.mxu0 0.0
        %2475 = vmatmul.mubr.f32.gmra.mrb[0].mxu0 %v2375
        %v2476 = vpop.f32.mrb[0].mxu0
        %v2477 = vadd.f32 0.0, %v2476
        %v2478 = vpop.f32.mrb[0].mxu0
        %2479 = vmatprep.mubr.f32.mxu0 0.0
        %2480 = vmatmul.mubr.f32.gmra.mrb[0].mxu0 %v2377
        %v2481 = vpop.f32.mrb[0].mxu0
        %v2482 = vadd.f32 0.0, %v2481
        %v2483 = vpop.f32.mrb[0].mxu0
        %2484 = vmatprep.mubr.f32.mxu0 0.0
        %2485 = vmatmul.mubr.f32.gmra.mrb[0].mxu0 %v2379
        %v2486 = vpop.f32.mrb[0].mxu0
        %v2487 = vadd.f32 0.0, %v2486
        %v2488 = vpop.f32.mrb[0].mxu0
        %2489 = vmatprep.mubr.f32.mxu0 0.0
        %2490 = vmatmul.mubr.f32.gmra.mrb[0].mxu0 %v2381
        %v2491 = vpop.f32.mrb[0].mxu0
        %v2492 = vadd.f32 0.0, %v2491
        %v2493 = vpop.f32.mrb[0].mxu0
        %2494 = vmatprep.mubr.f32.mxu0 0.0
        %2495 = vmatmul.mubr.f32.gmra.mrb[0].mxu0 %v2383
        %v2496 = vpop.f32.mrb[0].mxu0
        %v2497 = vadd.f32 0.0, %v2496
        %v2498 = vpop.f32.mrb[0].mxu0
        %2499 = vmatprep.mubr.f32.mxu0 0.0
        %2500 = vmatmul.mubr.f32.gmra.mrb[0].mxu0 %v2385
        %v2501 = vpop.f32.mrb[0].mxu0
        %v2502 = vadd.f32 0.0, %v2501
        %v2503 = vpop.f32.mrb[0].mxu0
        %2504 = vmatprep.mubr.f32.mxu0 0.0
        %2505 = vmatmul.mubr.f32.gmra.mrb[0].mxu0 %v2387
        %v2506 = vpop.f32.mrb[0].mxu0
        %v2507 = vadd.f32 0.0, %v2506
        %v2508 = vpop.f32.mrb[0].mxu0
        %2509 = vdwg.mxu0
        %v2510 = vmul.f32 %v2472, 0.17677669
        %v2511 = vmul.f32 %v2477, 0.17677669
        %v2512 = vmul.f32 %v2482, 0.17677669
        %v2513 = vmul.f32 %v2487, 0.17677669
        %v2514 = vmul.f32 %v2492, 0.17677669
        %v2515 = vmul.f32 %v2497, 0.17677669
        %v2516 = vmul.f32 %v2502, 0.17677669
        %v2517 = vmul.f32 %v2507, 0.17677669
        %v2518 = vsel %vm1279, %v2510, -inf
        %2519 = vmax.xlane.f32.xlu0 %v2518
        %v2520 = vpop.xlane.xlu0 %2519
        %v2521 = vsel %vm1279, %v2511, -inf
        %2522 = vmax.xlane.f32.xlu0 %v2521
        %v2523 = vpop.xlane.xlu0 %2522
        %v2524 = vsel %vm1279, %v2512, -inf
        %2525 = vmax.xlane.f32.xlu0 %v2524
        %v2526 = vpop.xlane.xlu0 %2525
        %v2527 = vsel %vm1279, %v2513, -inf
        %2528 = vmax.xlane.f32.xlu0 %v2527
        %v2529 = vpop.xlane.xlu0 %2528
        %v2530 = vsel %vm1279, %v2514, -inf
        %2531 = vmax.xlane.f32.xlu0 %v2530
        %v2532 = vpop.xlane.xlu0 %2531
        %v2533 = vsel %vm1279, %v2515, -inf
        %2534 = vmax.xlane.f32.xlu0 %v2533
        %v2535 = vpop.xlane.xlu0 %2534
        %v2536 = vsel %vm1279, %v2516, -inf
        %2537 = vmax.xlane.f32.xlu0 %v2536
        %v2538 = vpop.xlane.xlu0 %2537
        %v2539 = vsel %vm1279, %v2517, -inf
        %2540 = vmax.xlane.f32.xlu0 %v2539
        %v2541 = vpop.xlane.xlu0 %2540
        %v2542 = vsub.f32 %v2510, %v2520
        %v2543 = vsub.f32 %v2511, %v2523
        %v2544 = vsub.f32 %v2512, %v2526
        %v2545 = vsub.f32 %v2513, %v2529
        %v2546 = vsub.f32 %v2514, %v2532
        %v2547 = vsub.f32 %v2515, %v2535
        %v2548 = vsub.f32 %v2516, %v2538
        %v2549 = vsub.f32 %v2517, %v2541
        %v2550 = vmul.f32 %v2542, 1.442695
        %v2551 = vpow.pop %v2550
        %v2552 = vmul.f32 %v2543, 1.442695
        %v2553 = vpow.pop %v2552
        %v2554 = vmul.f32 %v2544, 1.442695
        %v2555 = vpow.pop %v2554
        %v2556 = vmul.f32 %v2545, 1.442695
        %v2557 = vpow.pop %v2556
        %v2558 = vmul.f32 %v2546, 1.442695
        %v2559 = vpow.pop %v2558
        %v2560 = vmul.f32 %v2547, 1.442695
        %v2561 = vpow.pop %v2560
        %v2562 = vmul.f32 %v2548, 1.442695
        %v2563 = vpow.pop %v2562
        %v2564 = vmul.f32 %v2549, 1.442695
        %v2565 = vpow.pop %v2564
        %v2566 = vsel %vm1279, %v2551, 0.0
        %2567 = vadd.xlane.f32.xlu0 %v2566
        %v2568 = vpop.xlane.xlu0 %2567
        %v2569 = vsel %vm1279, %v2553, 0.0
        %2570 = vadd.xlane.f32.xlu0 %v2569
        %v2571 = vpop.xlane.xlu0 %2570
        %v2572 = vsel %vm1279, %v2555, 0.0
        %2573 = vadd.xlane.f32.xlu0 %v2572
        %v2574 = vpop.xlane.xlu0 %2573
        %v2575 = vsel %vm1279, %v2557, 0.0
        %2576 = vadd.xlane.f32.xlu0 %v2575
        %v2577 = vpop.xlane.xlu0 %2576
        %v2578 = vsel %vm1279, %v2559, 0.0
        %2579 = vadd.xlane.f32.xlu0 %v2578
        %v2580 = vpop.xlane.xlu0 %2579
        %v2581 = vsel %vm1279, %v2561, 0.0
        %2582 = vadd.xlane.f32.xlu0 %v2581
        %v2583 = vpop.xlane.xlu0 %2582
        %v2584 = vsel %vm1279, %v2563, 0.0
        %2585 = vadd.xlane.f32.xlu0 %v2584
        %v2586 = vpop.xlane.xlu0 %2585
        %v2587 = vsel %vm1279, %v2565, 0.0
        %2588 = vadd.xlane.f32.xlu0 %v2587
        %v2589 = vpop.xlane.xlu0 %2588
        %v2590 = vrcp.pop %v2568
        %v2591 = vmul.f32 %v2551, %v2590
        %v2592 = vrcp.pop %v2571
        %v2593 = vmul.f32 %v2553, %v2592
        %v2594 = vrcp.pop %v2574
        %v2595 = vmul.f32 %v2555, %v2594
        %v2596 = vrcp.pop %v2577
        %v2597 = vmul.f32 %v2557, %v2596
        %v2598 = vrcp.pop %v2580
        %v2599 = vmul.f32 %v2559, %v2598
        %v2600 = vrcp.pop %v2583
        %v2601 = vmul.f32 %v2561, %v2600
        %v2602 = vrcp.pop %v2586
        %v2603 = vmul.f32 %v2563, %v2602
        %v2604 = vrcp.pop %v2589
        %v2605 = vmul.f32 %v2565, %v2604
        %2606 = vrot.lane.b32.xlu0 %v1079, 32
        %v2607 = vpop.permute.xlu0 %2606
        %2608 = vrot.lane.b32.xlu0 %v1084, 32
        %v2609 = vpop.permute.xlu0 %2608
        %2610 = vrot.lane.b32.xlu0 %v1089, 32
        %v2611 = vpop.permute.xlu0 %2610
        %2612 = vrot.lane.b32.xlu0 %v1094, 32
        %v2613 = vpop.permute.xlu0 %2612
        %2614 = vrot.lane.b32.xlu0 %v1099, 32
        %v2615 = vpop.permute.xlu0 %2614
        %2616 = vrot.lane.b32.xlu0 %v1104, 32
        %v2617 = vpop.permute.xlu0 %2616
        %2618 = vrot.lane.b32.xlu0 %v1109, 32
        %v2619 = vpop.permute.xlu0 %2618
        %2620 = vrot.lane.b32.xlu0 %v1114, 32
        %v2621 = vpop.permute.xlu0 %2620
        %v2631 = vsel %vm1279, %v2591, 0
        %v2634 = vsel %vm1279, %v2593, 0
        %v2637 = vsel %vm1279, %v2595, 0
        %v2640 = vsel %vm1279, %v2597, 0
        %v2643 = vsel %vm1279, %v2599, 0
        %v2646 = vsel %vm1279, %v2601, 0
        %v2649 = vsel %vm1279, %v2603, 0
        %v2652 = vsel %vm1279, %v2605, 0
        %2654 = vmatprep.subr.mxu0 0.0
        %2655 = vmatpush1.msra.mxu0 %v2607
        %2656 = vmatprep.subr.mxu0 0.0
        %2657 = vmatpush1.msra.mxu0 %v2609
        %2658 = vmatprep.subr.mxu0 0.0
        %2659 = vmatpush1.msra.mxu0 %v2611
        %2660 = vmatprep.subr.mxu0 0.0
        %2661 = vmatpush1.msra.mxu0 %v2613
        %2662 = vmatprep.subr.mxu0 0.0
        %2663 = vmatpush1.msra.mxu0 %v2615
        %2664 = vmatprep.subr.mxu0 0.0
        %2665 = vmatpush1.msra.mxu0 %v2617
        %2666 = vmatprep.subr.mxu0 0.0
        %2667 = vmatpush1.msra.mxu0 %v2619
        %2668 = vmatprep.subr.mxu0 0.0
        %2669 = vmatpush1.msra.mxu0 %v2621
        %2670 = vmatprep.subr.mxu0 0.0
        %2671 = vmatpush1.msra.mxu0 0.0
        %2672 = vmatprep.subr.mxu0 0.0
        %2673 = vmatpush1.msra.mxu0 0.0
        %2674 = vmatprep.subr.mxu0 0.0
        %2675 = vmatpush1.msra.mxu0 0.0
        %2676 = vmatprep.subr.mxu0 0.0
        %2677 = vmatpush1.msra.mxu0 0.0
        %2678 = vmatprep.subr.mxu0 0.0
        %2679 = vmatpush1.msra.mxu0 0.0
        %2680 = vmatprep.subr.mxu0 0.0
        %2681 = vmatpush1.msra.mxu0 0.0
        %2682 = vmatprep.subr.mxu0 0.0
        %2683 = vmatpush1.msra.mxu0 0.0
        %2684 = vmatprep.subr.mxu0 0.0
        %2685 = vmatpush1.msra.mxu0 0.0
        %2686 = vmatprep.subr.mxu0 0.0
        %2687 = vmatpush1.msra.mxu0 0.0
        %2688 = vmatprep.subr.mxu0 0.0
        %2689 = vmatpush1.msra.mxu0 0.0
        %2690 = vmatprep.subr.mxu0 0.0
        %2691 = vmatpush1.msra.mxu0 0.0
        %2692 = vmatprep.subr.mxu0 0.0
        %2693 = vmatpush1.msra.mxu0 0.0
        %2694 = vmatprep.subr.mxu0 0.0
        %2695 = vmatpush1.msra.mxu0 0.0
        %2696 = vmatprep.subr.mxu0 0.0
        %2697 = vmatpush1.msra.mxu0 0.0
        %2698 = vmatprep.subr.mxu0 0.0
        %2699 = vmatpush1.msra.mxu0 0.0
        %2700 = vmatprep.subr.mxu0 0.0
        %2701 = vmatpush1.msra.mxu0 0.0
        %2702 = vmatprep.subr.mxu0 0.0
        %2703 = vmatpush1.msra.mxu0 0.0
        %2704 = vmatprep.subr.mxu0 0.0
        %2705 = vmatpush1.msra.mxu0 0.0
        %2706 = vmatprep.subr.mxu0 0.0
        %2707 = vmatpush1.msra.mxu0 0.0
        %2708 = vmatprep.subr.mxu0 0.0
        %2709 = vmatpush1.msra.mxu0 0.0
        %2710 = vmatprep.subr.mxu0 0.0
        %2711 = vmatpush1.msra.mxu0 0.0
        %2712 = vmatprep.subr.mxu0 0.0
        %2713 = vmatpush1.msra.mxu0 0.0
        %2714 = vmatprep.subr.mxu0 0.0
        %2715 = vmatpush1.msra.mxu0 0.0
        %2716 = vmatprep.subr.mxu0 0.0
        %2717 = vmatpush1.msra.mxu0 0.0
        %2718 = vmatprep.mubr.f32.mxu0 0.0
        %2719 = vmatmul.mubr.f32.gmra.mrb[0].mxu0 %v2631
        %v2720 = vpop.f32.mrb[0].mxu0
        %v2721 = vadd.f32 0.0, %v2720
        %v2722 = vpop.f32.mrb[0].mxu0
        %2723 = vmatprep.mubr.f32.mxu0 0.0
        %2724 = vmatmul.mubr.f32.gmra.mrb[0].mxu0 %v2634
        %v2725 = vpop.f32.mrb[0].mxu0
        %v2726 = vadd.f32 0.0, %v2725
        %v2727 = vpop.f32.mrb[0].mxu0
        %2728 = vmatprep.mubr.f32.mxu0 0.0
        %2729 = vmatmul.mubr.f32.gmra.mrb[0].mxu0 %v2637
        %v2730 = vpop.f32.mrb[0].mxu0
        %v2731 = vadd.f32 0.0, %v2730
        %v2732 = vpop.f32.mrb[0].mxu0
        %2733 = vmatprep.mubr.f32.mxu0 0.0
        %2734 = vmatmul.mubr.f32.gmra.mrb[0].mxu0 %v2640
        %v2735 = vpop.f32.mrb[0].mxu0
        %v2736 = vadd.f32 0.0, %v2735
        %v2737 = vpop.f32.mrb[0].mxu0
        %2738 = vmatprep.mubr.f32.mxu0 0.0
        %2739 = vmatmul.mubr.f32.gmra.mrb[0].mxu0 %v2643
        %v2740 = vpop.f32.mrb[0].mxu0
        %v2741 = vadd.f32 0.0, %v2740
        %v2742 = vpop.f32.mrb[0].mxu0
        %2743 = vmatprep.mubr.f32.mxu0 0.0
        %2744 = vmatmul.mubr.f32.gmra.mrb[0].mxu0 %v2646
        %v2745 = vpop.f32.mrb[0].mxu0
        %v2746 = vadd.f32 0.0, %v2745
        %v2747 = vpop.f32.mrb[0].mxu0
        %2748 = vmatprep.mubr.f32.mxu0 0.0
        %2749 = vmatmul.mubr.f32.gmra.mrb[0].mxu0 %v2649
        %v2750 = vpop.f32.mrb[0].mxu0
        %v2751 = vadd.f32 0.0, %v2750
        %v2752 = vpop.f32.mrb[0].mxu0
        %2753 = vmatprep.mubr.f32.mxu0 0.0
        %2754 = vmatmul.mubr.f32.gmra.mrb[0].mxu0 %v2652
        %v2755 = vpop.f32.mrb[0].mxu0
        %v2756 = vadd.f32 0.0, %v2755
        %v2757 = vpop.f32.mrb[0].mxu0
        %2758 = vdwg.mxu0
        %2767 = vrot.lane.b32.xlu0 %v1885, 32
        %v2768 = vpop.permute.xlu0 %2767
        %2769 = vrot.lane.b32.xlu0 %v1890, 32
        %v2770 = vpop.permute.xlu0 %2769
        %2771 = vrot.lane.b32.xlu0 %v1895, 32
        %v2772 = vpop.permute.xlu0 %2771
        %2773 = vrot.lane.b32.xlu0 %v1900, 32
        %v2774 = vpop.permute.xlu0 %2773
        %2775 = vrot.lane.b32.xlu0 %v1905, 32
        %v2776 = vpop.permute.xlu0 %2775
        %2777 = vrot.lane.b32.xlu0 %v1910, 32
        %v2778 = vpop.permute.xlu0 %2777
        %2779 = vrot.lane.b32.xlu0 %v1915, 32
        %v2780 = vpop.permute.xlu0 %2779
        %2781 = vrot.lane.b32.xlu0 %v1920, 32
        %v2782 = vpop.permute.xlu0 %2781
        %2799 = vrot.lane.b32.xlu0 %v2303, 64
        %v2800 = vpop.permute.xlu0 %2799
        %2801 = vrot.lane.b32.xlu0 %v2308, 64
        %v2802 = vpop.permute.xlu0 %2801
        %2803 = vrot.lane.b32.xlu0 %v2313, 64
        %v2804 = vpop.permute.xlu0 %2803
        %2805 = vrot.lane.b32.xlu0 %v2318, 64
        %v2806 = vpop.permute.xlu0 %2805
        %2807 = vrot.lane.b32.xlu0 %v2323, 64
        %v2808 = vpop.permute.xlu0 %2807
        %2809 = vrot.lane.b32.xlu0 %v2328, 64
        %v2810 = vpop.permute.xlu0 %2809
        %2811 = vrot.lane.b32.xlu0 %v2333, 64
        %v2812 = vpop.permute.xlu0 %2811
        %2813 = vrot.lane.b32.xlu0 %v2338, 64
        %v2814 = vpop.permute.xlu0 %2813
        %2831 = vrot.lane.b32.xlu0 %v2721, 96
        %v2832 = vpop.permute.xlu0 %2831
        %2833 = vrot.lane.b32.xlu0 %v2726, 96
        %v2834 = vpop.permute.xlu0 %2833
        %2835 = vrot.lane.b32.xlu0 %v2731, 96
        %v2836 = vpop.permute.xlu0 %2835
        %2837 = vrot.lane.b32.xlu0 %v2736, 96
        %v2838 = vpop.permute.xlu0 %2837
        %2839 = vrot.lane.b32.xlu0 %v2741, 96
        %v2840 = vpop.permute.xlu0 %2839
        %2841 = vrot.lane.b32.xlu0 %v2746, 96
        %v2842 = vpop.permute.xlu0 %2841
        %2843 = vrot.lane.b32.xlu0 %v2751, 96
        %v2844 = vpop.permute.xlu0 %2843
        %2845 = vrot.lane.b32.xlu0 %v2756, 96
        %v2846 = vpop.permute.xlu0 %2845
        %v2855 = vsel %vm1117, %v1459, %v2768
        %v2856 = vsel %vm1117, %v1464, %v2770
        %v2857 = vsel %vm1117, %v1469, %v2772
        %v2858 = vsel %vm1117, %v1474, %v2774
        %v2859 = vsel %vm1117, %v1479, %v2776
        %v2860 = vsel %vm1117, %v1484, %v2778
        %v2861 = vsel %vm1117, %v1489, %v2780
        %v2862 = vsel %vm1117, %v1494, %v2782
        %v2863 = vsel %vm1279, %v2855, %v2800
        %v2864 = vsel %vm1279, %v2856, %v2802
        %v2865 = vsel %vm1279, %v2857, %v2804
        %v2866 = vsel %vm1279, %v2858, %v2806
        %v2867 = vsel %vm1279, %v2859, %v2808
        %v2868 = vsel %vm1279, %v2860, %v2810
        %v2869 = vsel %vm1279, %v2861, %v2812
        %v2870 = vsel %vm1279, %v2862, %v2814
        %vm2871 = vcmask 785408
        %v2872 = vsel %vm2871, %v2863, %v2832
        %v2873 = vsel %vm2871, %v2864, %v2834
        %v2874 = vsel %vm2871, %v2865, %v2836
        %v2875 = vsel %vm2871, %v2866, %v2838
        %v2876 = vsel %vm2871, %v2867, %v2840
        %v2877 = vsel %vm2871, %v2868, %v2842
        %v2878 = vsel %vm2871, %v2869, %v2844
        %v2879 = vsel %vm2871, %v2870, %v2846
        %v2880 = vld [vmem:[%s7] sm:$0x1]
        %v2881 = vld [vmem:[#allocation10] sm:$0xff]
        %v2882 = vld [vmem:[#allocation10 + $0x8] sm:$0xff]
        %v2883 = vld [vmem:[#allocation10 + $0x10] sm:$0xff]
        %v2884 = vld [vmem:[#allocation10 + $0x18] sm:$0xff]
        %v2885 = vld [vmem:[#allocation10 + $0x20] sm:$0xff]
        %v2886 = vld [vmem:[#allocation10 + $0x28] sm:$0xff]
        %v2887 = vld [vmem:[#allocation10 + $0x30] sm:$0xff]
        %v2888 = vld [vmem:[#allocation10 + $0x38] sm:$0xff]
        %v2889 = vld [vmem:[#allocation10 + $0x40] sm:$0xff]
        %v2890 = vld [vmem:[#allocation10 + $0x48] sm:$0xff]
        %v2891 = vld [vmem:[#allocation10 + $0x50] sm:$0xff]
        %v2892 = vld [vmem:[#allocation10 + $0x58] sm:$0xff]
        %v2893 = vld [vmem:[#allocation10 + $0x60] sm:$0xff]
        %v2894 = vld [vmem:[#allocation10 + $0x68] sm:$0xff]
        %v2895 = vld [vmem:[#allocation10 + $0x70] sm:$0xff]
        %v2896 = vld [vmem:[#allocation10 + $0x78] sm:$0xff]
        %v2898 = vlaneseq
        %v2899 = vshrl.u32 %v2898, 7
        %v2900 = vsub.s32 0, %v2899
        %v2901 = vrot.slane %v2880, %v2900
        %2903 = vmatprep.subr.mxu0 0.0
        %2904 = vmatpush1.xpose.msra.mxu0 %v2881
        %2905 = vmatprep.subr.mxu0 0.0
        %2906 = vmatpush1.xpose.msra.mxu0 %v2882
        %2907 = vmatprep.subr.mxu0 0.0
        %2908 = vmatpush1.xpose.msra.mxu0 %v2883
        %2909 = vmatprep.subr.mxu0 0.0
        %2910 = vmatpush1.xpose.msra.mxu0 %v2884
        %2911 = vmatprep.subr.mxu0 0.0
        %2912 = vmatpush1.xpose.msra.mxu0 %v2885
        %2913 = vmatprep.subr.mxu0 0.0
        %2914 = vmatpush1.xpose.msra.mxu0 %v2886
        %2915 = vmatprep.subr.mxu0 0.0
        %2916 = vmatpush1.xpose.msra.mxu0 %v2887
        %2917 = vmatprep.subr.mxu0 0.0
        %2918 = vmatpush1.xpose.msra.mxu0 %v2888
        %2919 = vmatprep.subr.mxu0 0.0
        %2920 = vmatpush1.xpose.msra.mxu0 %v2889
        %2921 = vmatprep.subr.mxu0 0.0
        %2922 = vmatpush1.xpose.msra.mxu0 %v2890
        %2923 = vmatprep.subr.mxu0 0.0
        %2924 = vmatpush1.xpose.msra.mxu0 %v2891
        %2925 = vmatprep.subr.mxu0 0.0
        %2926 = vmatpush1.xpose.msra.mxu0 %v2892
        %2927 = vmatprep.subr.mxu0 0.0
        %2928 = vmatpush1.xpose.msra.mxu0 %v2893
        %2929 = vmatprep.subr.mxu0 0.0
        %2930 = vmatpush1.xpose.msra.mxu0 %v2894
        %2931 = vmatprep.subr.mxu0 0.0
        %2932 = vmatpush1.xpose.msra.mxu0 %v2895
        %2933 = vmatprep.subr.mxu0 0.0
        %2934 = vmatpush1.xpose.msra.mxu0 %v2896
        %2935 = vmatprep.subr.mxu0 0.0
        %2936 = vmatpush1.xpose.msra.mxu0 0.0
        %2937 = vmatprep.subr.mxu0 0.0
        %2938 = vmatpush1.xpose.msra.mxu0 0.0
        %2939 = vmatprep.subr.mxu0 0.0
        %2940 = vmatpush1.xpose.msra.mxu0 0.0
        %2941 = vmatprep.subr.mxu0 0.0
        %2942 = vmatpush1.xpose.msra.mxu0 0.0
        %2943 = vmatprep.subr.mxu0 0.0
        %2944 = vmatpush1.xpose.msra.mxu0 0.0
        %2945 = vmatprep.subr.mxu0 0.0
        %2946 = vmatpush1.xpose.msra.mxu0 0.0
        %2947 = vmatprep.subr.mxu0 0.0
        %2948 = vmatpush1.xpose.msra.mxu0 0.0
        %2949 = vmatprep.subr.mxu0 0.0
        %2950 = vmatpush1.xpose.msra.mxu0 0.0
        %2951 = vmatprep.subr.mxu0 0.0
        %2952 = vmatpush1.xpose.msra.mxu0 0.0
        %2953 = vmatprep.subr.mxu0 0.0
        %2954 = vmatpush1.xpose.msra.mxu0 0.0
        %2955 = vmatprep.subr.mxu0 0.0
        %2956 = vmatpush1.xpose.msra.mxu0 0.0
        %2957 = vmatprep.subr.mxu0 0.0
        %2958 = vmatpush1.xpose.msra.mxu0 0.0
        %2959 = vmatprep.subr.mxu0 0.0
        %2960 = vmatpush1.xpose.msra.mxu0 0.0
        %2961 = vmatprep.subr.mxu0 0.0
        %2962 = vmatpush1.xpose.msra.mxu0 0.0
        %2963 = vmatprep.subr.mxu0 0.0
        %2964 = vmatpush1.xpose.msra.mxu0 0.0
        %2965 = vmatprep.subr.mxu0 0.0
        %2966 = vmatpush1.xpose.msra.mxu0 0.0
        %2967 = vmatprep.mubr.f32.mxu0 0.0
        %2968 = vmatmul.mubr.f32.gmra.mrb[0].mxu0 %v2872
        %v2969 = vpop.f32.mrb[0].mxu0
        %v2970 = vadd.f32 %v2901, %v2969
        %v2971 = vpop.f32.mrb[0].mxu0
        %2972 = vmatprep.mubr.f32.mxu0 0.0
        %2973 = vmatmul.mubr.f32.gmra.mrb[0].mxu0 %v2873
        %v2974 = vpop.f32.mrb[0].mxu0
        %v2975 = vadd.f32 %v2901, %v2974
        %v2976 = vpop.f32.mrb[0].mxu0
        %2977 = vmatprep.mubr.f32.mxu0 0.0
        %2978 = vmatmul.mubr.f32.gmra.mrb[0].mxu0 %v2874
        %v2979 = vpop.f32.mrb[0].mxu0
        %v2980 = vadd.f32 %v2901, %v2979
        %v2981 = vpop.f32.mrb[0].mxu0
        %2982 = vmatprep.mubr.f32.mxu0 0.0
        %2983 = vmatmul.mubr.f32.gmra.mrb[0].mxu0 %v2875
        %v2984 = vpop.f32.mrb[0].mxu0
        %v2985 = vadd.f32 %v2901, %v2984
        %v2986 = vpop.f32.mrb[0].mxu0
        %2987 = vmatprep.mubr.f32.mxu0 0.0
        %2988 = vmatmul.mubr.f32.gmra.mrb[0].mxu0 %v2876
        %v2989 = vpop.f32.mrb[0].mxu0
        %v2990 = vadd.f32 %v2901, %v2989
        %v2991 = vpop.f32.mrb[0].mxu0
        %2992 = vmatprep.mubr.f32.mxu0 0.0
        %2993 = vmatmul.mubr.f32.gmra.mrb[0].mxu0 %v2877
        %v2994 = vpop.f32.mrb[0].mxu0
        %v2995 = vadd.f32 %v2901, %v2994
        %v2996 = vpop.f32.mrb[0].mxu0
        %2997 = vmatprep.mubr.f32.mxu0 0.0
        %2998 = vmatmul.mubr.f32.gmra.mrb[0].mxu0 %v2878
        %v2999 = vpop.f32.mrb[0].mxu0
        %v3000 = vadd.f32 %v2901, %v2999
        %v3001 = vpop.f32.mrb[0].mxu0
        %3002 = vmatprep.mubr.f32.mxu0 0.0
        %3003 = vmatmul.mubr.f32.gmra.mrb[0].mxu0 %v2879
        %v3004 = vpop.f32.mrb[0].mxu0
        %v3005 = vadd.f32 %v2901, %v3004
        %v3006 = vpop.f32.mrb[0].mxu0
        %3007 = vdwg.mxu0
        %v3008 = vadd.f32 %v627, %v2970
        %v3009 = vadd.f32 %v628, %v2975
        %v3010 = vadd.f32 %v629, %v2980
        %v3011 = vadd.f32 %v630, %v2985
        %v3012 = vadd.f32 %v631, %v2990
        %v3013 = vadd.f32 %v632, %v2995
        %v3014 = vadd.f32 %v633, %v3000
        %v3015 = vadd.f32 %v634, %v3005
        %v3016 = vld [vmem:[%s8] sm:$0x1]
        %v3017 = vld [vmem:[%s9] sm:$0x1]
        %3018 = vadd.xlane.f32.xlu0 %v3008
        %v3019 = vpop.xlane.xlu0 %3018
        %3020 = vadd.xlane.f32.xlu0 %v3009
        %v3021 = vpop.xlane.xlu0 %3020
        %3022 = vadd.xlane.f32.xlu0 %v3010
        %v3023 = vpop.xlane.xlu0 %3022
        %3024 = vadd.xlane.f32.xlu0 %v3011
        %v3025 = vpop.xlane.xlu0 %3024
        %3026 = vadd.xlane.f32.xlu0 %v3012
        %v3027 = vpop.xlane.xlu0 %3026
        %3028 = vadd.xlane.f32.xlu0 %v3013
        %v3029 = vpop.xlane.xlu0 %3028
        %3030 = vadd.xlane.f32.xlu0 %v3014
        %v3031 = vpop.xlane.xlu0 %3030
        %3032 = vadd.xlane.f32.xlu0 %v3015
        %v3033 = vpop.xlane.xlu0 %3032
        %v3034 = vmul.f32 %v3019, %v653
        %v3035 = vmul.f32 %v3021, %v653
        %v3036 = vmul.f32 %v3023, %v653
        %v3037 = vmul.f32 %v3025, %v653
        %v3038 = vmul.f32 %v3027, %v653
        %v3039 = vmul.f32 %v3029, %v653
        %v3040 = vmul.f32 %v3031, %v653
        %v3041 = vmul.f32 %v3033, %v653
        %v3042 = vsub.f32 %v3008, %v3034
        %v3043 = vsub.f32 %v3009, %v3035
        %v3044 = vsub.f32 %v3010, %v3036
        %v3045 = vsub.f32 %v3011, %v3037
        %v3046 = vsub.f32 %v3012, %v3038
        %v3047 = vsub.f32 %v3013, %v3039
        %v3048 = vsub.f32 %v3014, %v3040
        %v3049 = vsub.f32 %v3015, %v3041
        %v3050 = vmul.f32 %v3042, %v3042
        %v3051 = vmul.f32 %v3043, %v3043
        %v3052 = vmul.f32 %v3044, %v3044
        %v3053 = vmul.f32 %v3045, %v3045
        %v3054 = vmul.f32 %v3046, %v3046
        %v3055 = vmul.f32 %v3047, %v3047
        %v3056 = vmul.f32 %v3048, %v3048
        %v3057 = vmul.f32 %v3049, %v3049
        %3058 = vadd.xlane.f32.xlu0 %v3050
        %v3059 = vpop.xlane.xlu0 %3058
        %3060 = vadd.xlane.f32.xlu0 %v3051
        %v3061 = vpop.xlane.xlu0 %3060
        %3062 = vadd.xlane.f32.xlu0 %v3052
        %v3063 = vpop.xlane.xlu0 %3062
        %3064 = vadd.xlane.f32.xlu0 %v3053
        %v3065 = vpop.xlane.xlu0 %3064
        %3066 = vadd.xlane.f32.xlu0 %v3054
        %v3067 = vpop.xlane.xlu0 %3066
        %3068 = vadd.xlane.f32.xlu0 %v3055
        %v3069 = vpop.xlane.xlu0 %3068
        %3070 = vadd.xlane.f32.xlu0 %v3056
        %v3071 = vpop.xlane.xlu0 %3070
        %3072 = vadd.xlane.f32.xlu0 %v3057
        %v3073 = vpop.xlane.xlu0 %3072
        %v3074 = vmul.f32 %v3059, %v653
        %v3075 = vmul.f32 %v3061, %v653
        %v3076 = vmul.f32 %v3063, %v653
        %v3077 = vmul.f32 %v3065, %v653
        %v3078 = vmul.f32 %v3067, %v653
        %v3079 = vmul.f32 %v3069, %v653
        %v3080 = vmul.f32 %v3071, %v653
        %v3081 = vmul.f32 %v3073, %v653
        %v3082 = vadd.f32 %v3074, 1e-05
        %v3083 = vadd.f32 %v3075, 1e-05
        %v3084 = vadd.f32 %v3076, 1e-05
        %v3085 = vadd.f32 %v3077, 1e-05
        %v3086 = vadd.f32 %v3078, 1e-05
        %v3087 = vadd.f32 %v3079, 1e-05
        %v3088 = vadd.f32 %v3080, 1e-05
        %v3089 = vadd.f32 %v3081, 1e-05
        %v3090 = vrsqrt.pop %v3082
        %v3091 = vrsqrt.pop %v3083
        %v3092 = vrsqrt.pop %v3084
        %v3093 = vrsqrt.pop %v3085
        %v3094 = vrsqrt.pop %v3086
        %v3095 = vrsqrt.pop %v3087
        %v3096 = vrsqrt.pop %v3088
        %v3097 = vrsqrt.pop %v3089
        %v3098 = vmul.f32 %v3042, %v3090
        %v3099 = vmul.f32 %v3043, %v3091
        %v3100 = vmul.f32 %v3044, %v3092
        %v3101 = vmul.f32 %v3045, %v3093
        %v3102 = vmul.f32 %v3046, %v3094
        %v3103 = vmul.f32 %v3047, %v3095
        %v3104 = vmul.f32 %v3048, %v3096
        %v3105 = vmul.f32 %v3049, %v3097
        %v3107 = vlaneseq
        %v3108 = vshrl.u32 %v3107, 7
        %v3109 = vsub.s32 0, %v3108
        %v3110 = vrot.slane %v3016, %v3109
        %v3112 = vmul.f32 %v3098, %v3110
        %v3113 = vmul.f32 %v3099, %v3110
        %v3114 = vmul.f32 %v3100, %v3110
        %v3115 = vmul.f32 %v3101, %v3110
        %v3116 = vmul.f32 %v3102, %v3110
        %v3117 = vmul.f32 %v3103, %v3110
        %v3118 = vmul.f32 %v3104, %v3110
        %v3119 = vmul.f32 %v3105, %v3110
        %v3121 = vlaneseq
        %v3122 = vshrl.u32 %v3121, 7
        %v3123 = vsub.s32 0, %v3122
        %v3124 = vrot.slane %v3017, %v3123
        %v3126 = vadd.f32 %v3112, %v3124
        %v3127 = vadd.f32 %v3113, %v3124
        %v3128 = vadd.f32 %v3114, %v3124
        %v3129 = vadd.f32 %v3115, %v3124
        %v3130 = vadd.f32 %v3116, %v3124
        %v3131 = vadd.f32 %v3117, %v3124
        %v3132 = vadd.f32 %v3118, %v3124
        %v3133 = vadd.f32 %v3119, %v3124
        %v3134 = vld [vmem:[%s11] sm:$0x3]
        %v3135 = vld [vmem:[#allocation11] sm:$0xff]
        %v3136 = vld [vmem:[#allocation11 + $0x8] sm:$0xff]
        %v3137 = vld [vmem:[#allocation11 + $0x10] sm:$0xff]
        %v3138 = vld [vmem:[#allocation11 + $0x18] sm:$0xff]
        %v3139 = vld [vmem:[#allocation11 + $0x20] sm:$0xff]
        %v3140 = vld [vmem:[#allocation11 + $0x28] sm:$0xff]
        %v3141 = vld [vmem:[#allocation11 + $0x30] sm:$0xff]
        %v3142 = vld [vmem:[#allocation11 + $0x38] sm:$0xff]
        %v3143 = vld [vmem:[#allocation11 + $0x40] sm:$0xff]
        %v3144 = vld [vmem:[#allocation11 + $0x48] sm:$0xff]
        %v3145 = vld [vmem:[#allocation11 + $0x50] sm:$0xff]
        %v3146 = vld [vmem:[#allocation11 + $0x58] sm:$0xff]
        %v3147 = vld [vmem:[#allocation11 + $0x60] sm:$0xff]
        %v3148 = vld [vmem:[#allocation11 + $0x68] sm:$0xff]
        %v3149 = vld [vmem:[#allocation11 + $0x70] sm:$0xff]
        %v3150 = vld [vmem:[#allocation11 + $0x78] sm:$0xff]
        %v3151 = vld [vmem:[#allocation11 + $0x80] sm:$0xff]
        %v3152 = vld [vmem:[#allocation11 + $0x88] sm:$0xff]
        %v3153 = vld [vmem:[#allocation11 + $0x90] sm:$0xff]
        %v3154 = vld [vmem:[#allocation11 + $0x98] sm:$0xff]
        %v3155 = vld [vmem:[#allocation11 + $0xa0] sm:$0xff]
        %v3156 = vld [vmem:[#allocation11 + $0xa8] sm:$0xff]
        %v3157 = vld [vmem:[#allocation11 + $0xb0] sm:$0xff]
        %v3158 = vld [vmem:[#allocation11 + $0xb8] sm:$0xff]
        %v3159 = vld [vmem:[#allocation11 + $0xc0] sm:$0xff]
        %v3160 = vld [vmem:[#allocation11 + $0xc8] sm:$0xff]
        %v3161 = vld [vmem:[#allocation11 + $0xd0] sm:$0xff]
        %v3162 = vld [vmem:[#allocation11 + $0xd8] sm:$0xff]
        %v3163 = vld [vmem:[#allocation11 + $0xe0] sm:$0xff]
        %v3164 = vld [vmem:[#allocation11 + $0xe8] sm:$0xff]
        %v3165 = vld [vmem:[#allocation11 + $0xf0] sm:$0xff]
        %v3166 = vld [vmem:[#allocation11 + $0xf8] sm:$0xff]
        %v3168 = vlaneseq
        %v3169 = vshrl.u32 %v3168, 7
        %v3170 = vsub.s32 0, %v3169
        %v3171 = vrot.slane %v3134, %v3170
        %v3172 = vlaneseq
        %v3173 = vshrl.u32 %v3172, 7
        %v3174 = vsub.s32 1, %v3173
        %v3175 = vrot.slane %v3134, %v3174
        %3178 = vmatprep.subr.mxu0 0.0
        %3179 = vmatpush1.xpose.msra.mxu0 %v3135
        %3180 = vmatprep.subr.mxu0 0.0
        %3181 = vmatpush1.xpose.msra.mxu0 %v3136
        %3182 = vmatprep.subr.mxu0 0.0
        %3183 = vmatpush1.xpose.msra.mxu0 %v3137
        %3184 = vmatprep.subr.mxu0 0.0
        %3185 = vmatpush1.xpose.msra.mxu0 %v3138
        %3186 = vmatprep.subr.mxu0 0.0
        %3187 = vmatpush1.xpose.msra.mxu0 %v3139
        %3188 = vmatprep.subr.mxu0 0.0
        %3189 = vmatpush1.xpose.msra.mxu0 %v3140
        %3190 = vmatprep.subr.mxu0 0.0
        %3191 = vmatpush1.xpose.msra.mxu0 %v3141
        %3192 = vmatprep.subr.mxu0 0.0
        %3193 = vmatpush1.xpose.msra.mxu0 %v3142
        %3194 = vmatprep.subr.mxu0 0.0
        %3195 = vmatpush1.xpose.msra.mxu0 %v3143
        %3196 = vmatprep.subr.mxu0 0.0
        %3197 = vmatpush1.xpose.msra.mxu0 %v3144
        %3198 = vmatprep.subr.mxu0 0.0
        %3199 = vmatpush1.xpose.msra.mxu0 %v3145
        %3200 = vmatprep.subr.mxu0 0.0
        %3201 = vmatpush1.xpose.msra.mxu0 %v3146
        %3202 = vmatprep.subr.mxu0 0.0
        %3203 = vmatpush1.xpose.msra.mxu0 %v3147
        %3204 = vmatprep.subr.mxu0 0.0
        %3205 = vmatpush1.xpose.msra.mxu0 %v3148
        %3206 = vmatprep.subr.mxu0 0.0
        %3207 = vmatpush1.xpose.msra.mxu0 %v3149
        %3208 = vmatprep.subr.mxu0 0.0
        %3209 = vmatpush1.xpose.msra.mxu0 %v3150
        %3210 = vmatprep.subr.mxu0 0.0
        %3211 = vmatpush1.xpose.msra.mxu0 %v3151
        %3212 = vmatprep.subr.mxu0 0.0
        %3213 = vmatpush1.xpose.msra.mxu0 %v3152
        %3214 = vmatprep.subr.mxu0 0.0
        %3215 = vmatpush1.xpose.msra.mxu0 %v3153
        %3216 = vmatprep.subr.mxu0 0.0
        %3217 = vmatpush1.xpose.msra.mxu0 %v3154
        %3218 = vmatprep.subr.mxu0 0.0
        %3219 = vmatpush1.xpose.msra.mxu0 %v3155
        %3220 = vmatprep.subr.mxu0 0.0
        %3221 = vmatpush1.xpose.msra.mxu0 %v3156
        %3222 = vmatprep.subr.mxu0 0.0
        %3223 = vmatpush1.xpose.msra.mxu0 %v3157
        %3224 = vmatprep.subr.mxu0 0.0
        %3225 = vmatpush1.xpose.msra.mxu0 %v3158
        %3226 = vmatprep.subr.mxu0 0.0
        %3227 = vmatpush1.xpose.msra.mxu0 %v3159
        %3228 = vmatprep.subr.mxu0 0.0
        %3229 = vmatpush1.xpose.msra.mxu0 %v3160
        %3230 = vmatprep.subr.mxu0 0.0
        %3231 = vmatpush1.xpose.msra.mxu0 %v3161
        %3232 = vmatprep.subr.mxu0 0.0
        %3233 = vmatpush1.xpose.msra.mxu0 %v3162
        %3234 = vmatprep.subr.mxu0 0.0
        %3235 = vmatpush1.xpose.msra.mxu0 %v3163
        %3236 = vmatprep.subr.mxu0 0.0
        %3237 = vmatpush1.xpose.msra.mxu0 %v3164
        %3238 = vmatprep.subr.mxu0 0.0
        %3239 = vmatpush1.xpose.msra.mxu0 %v3165
        %3240 = vmatprep.subr.mxu0 0.0
        %3241 = vmatpush1.xpose.msra.mxu0 %v3166
        %3242 = vmatprep.mubr.f32.mxu0 0.0
        %3243 = vmatmul.mubr.f32.gmra.mrb[0].mxu0 %v3126
        %v3244 = vpop.f32.mrb[0].mxu0
        %v3245 = vadd.f32 %v3171, %v3244
        %v3246 = vpop.f32.mrb[0].mxu0
        %v3247 = vadd.f32 %v3175, %v3246
        %3248 = vmatprep.mubr.f32.mxu0 0.0
        %3249 = vmatmul.mubr.f32.gmra.mrb[0].mxu0 %v3127
        %v3250 = vpop.f32.mrb[0].mxu0
        %v3251 = vadd.f32 %v3171, %v3250
        %v3252 = vpop.f32.mrb[0].mxu0
        %v3253 = vadd.f32 %v3175, %v3252
        %3254 = vmatprep.mubr.f32.mxu0 0.0
        %3255 = vmatmul.mubr.f32.gmra.mrb[0].mxu0 %v3128
        %v3256 = vpop.f32.mrb[0].mxu0
        %v3257 = vadd.f32 %v3171, %v3256
        %v3258 = vpop.f32.mrb[0].mxu0
        %v3259 = vadd.f32 %v3175, %v3258
        %3260 = vmatprep.mubr.f32.mxu0 0.0
        %3261 = vmatmul.mubr.f32.gmra.mrb[0].mxu0 %v3129
        %v3262 = vpop.f32.mrb[0].mxu0
        %v3263 = vadd.f32 %v3171, %v3262
        %v3264 = vpop.f32.mrb[0].mxu0
        %v3265 = vadd.f32 %v3175, %v3264
        %3266 = vmatprep.mubr.f32.mxu0 0.0
        %3267 = vmatmul.mubr.f32.gmra.mrb[0].mxu0 %v3130
        %v3268 = vpop.f32.mrb[0].mxu0
        %v3269 = vadd.f32 %v3171, %v3268
        %v3270 = vpop.f32.mrb[0].mxu0
        %v3271 = vadd.f32 %v3175, %v3270
        %3272 = vmatprep.mubr.f32.mxu0 0.0
        %3273 = vmatmul.mubr.f32.gmra.mrb[0].mxu0 %v3131
        %v3274 = vpop.f32.mrb[0].mxu0
        %v3275 = vadd.f32 %v3171, %v3274
        %v3276 = vpop.f32.mrb[0].mxu0
        %v3277 = vadd.f32 %v3175, %v3276
        %3278 = vmatprep.mubr.f32.mxu0 0.0
        %3279 = vmatmul.mubr.f32.gmra.mrb[0].mxu0 %v3132
        %v3280 = vpop.f32.mrb[0].mxu0
        %v3281 = vadd.f32 %v3171, %v3280
        %v3282 = vpop.f32.mrb[0].mxu0
        %v3283 = vadd.f32 %v3175, %v3282
        %3284 = vmatprep.mubr.f32.mxu0 0.0
        %3285 = vmatmul.mubr.f32.gmra.mrb[0].mxu0 %v3133
        %v3286 = vpop.f32.mrb[0].mxu0
        %v3287 = vadd.f32 %v3171, %v3286
        %v3288 = vpop.f32.mrb[0].mxu0
        %v3289 = vadd.f32 %v3175, %v3288
        %3290 = vdwg.mxu0
        %vm3307 = vcmask 1040384
        %v3308 = vrot.slane %v3245, 7
        %v3309 = vrot.slane %v3247, 7
        %v3310 = vrot.slane %v3251, 7
        %v3311 = vsel %vm3307, %v3308, %v3310
        %v3312 = vrot.slane %v3253, 7
        %v3313 = vsel %vm3307, %v3309, %v3312
        %v3314 = vrot.slane %v3257, 7
        %v3315 = vsel %vm3307, %v3310, %v3314
        %v3316 = vrot.slane %v3259, 7
        %v3317 = vsel %vm3307, %v3312, %v3316
        %v3318 = vrot.slane %v3263, 7
        %v3319 = vsel %vm3307, %v3314, %v3318
        %v3320 = vrot.slane %v3265, 7
        %v3321 = vsel %vm3307, %v3316, %v3320
        %v3322 = vrot.slane %v3269, 7
        %v3323 = vsel %vm3307, %v3318, %v3322
        %v3324 = vrot.slane %v3271, 7
        %v3325 = vsel %vm3307, %v3320, %v3324
        %v3326 = vrot.slane %v3275, 7
        %v3327 = vsel %vm3307, %v3322, %v3326
        %v3328 = vrot.slane %v3277, 7
        %v3329 = vsel %vm3307, %v3324, %v3328
        %v3330 = vrot.slane %v3281, 7
        %v3331 = vsel %vm3307, %v3326, %v3330
        %v3332 = vrot.slane %v3283, 7
        %v3333 = vsel %vm3307, %v3328, %v3332
        %v3334 = vrot.slane %v3287, 7
        %v3335 = vsel %vm3307, %v3330, %v3334
        %v3336 = vrot.slane %v3289, 7
        %v3337 = vsel %vm3307, %v3332, %v3336
        %v3356 = vsel %vm3307, 0.0, %v3308
        %v3357 = vsel %vm3307, 0.0, %v3309
        %v3358 = vsel %vm3307, %v3334, 0.0
        %v3359 = vsel %vm3307, %v3336, 0.0
        %v3360 = vlaneseq
        %v3361 = vshrl.u32 %v3360, 7
        %v3362 = vadd.s32 %v3361, 8
        %v3363 = vadd.s32 %v3361, 16
        %v3364 = vadd.s32 %v3361, 24
        %v3365 = vadd.s32 %v3361, 32
        %v3366 = vadd.s32 %v3361, 40
        %v3367 = vadd.s32 %v3361, 48
        %v3368 = vadd.s32 %v3361, 56
        %vm3369 = vcmp.lt.s32.totalorder %v3361, 0
        %v3370 = vsub.s32 0, %v3361
        %v3371 = vsel %vm3369, %v3370, %v3361
        %v3372 = vshrl.u32 %v3371, 3
        %v3373 = vand.u32 %v3371, 7
        %v3374 = vsub.s32 0, %v3373
        %v3375 = vsel %vm3369, %v3374, %v3373
        %vm3376 = vcmp.lt.s32.totalorder %v3362, 0
        %v3377 = vsub.s32 0, %v3362
        %v3378 = vsel %vm3376, %v3377, %v3362
        %v3379 = vshrl.u32 %v3378, 3
        %v3380 = vand.u32 %v3378, 7
        %v3381 = vsub.s32 0, %v3380
        %v3382 = vsel %vm3376, %v3381, %v3380
        %vm3383 = vcmp.lt.s32.totalorder %v3363, 0
        %v3384 = vsub.s32 0, %v3363
        %v3385 = vsel %vm3383, %v3384, %v3363
        %v3386 = vshrl.u32 %v3385, 3
        %v3387 = vand.u32 %v3385, 7
        %v3388 = vsub.s32 0, %v3387
        %v3389 = vsel %vm3383, %v3388, %v3387
        %vm3390 = vcmp.lt.s32.totalorder %v3364, 0
        %v3391 = vsub.s32 0, %v3364
        %v3392 = vsel %vm3390, %v3391, %v3364
        %v3393 = vshrl.u32 %v3392, 3
        %v3394 = vand.u32 %v3392, 7
        %v3395 = vsub.s32 0, %v3394
        %v3396 = vsel %vm3390, %v3395, %v3394
        %vm3397 = vcmp.lt.s32.totalorder %v3365, 0
        %v3398 = vsub.s32 0, %v3365
        %v3399 = vsel %vm3397, %v3398, %v3365
        %v3400 = vshrl.u32 %v3399, 3
        %v3401 = vand.u32 %v3399, 7
        %v3402 = vsub.s32 0, %v3401
        %v3403 = vsel %vm3397, %v3402, %v3401
        %vm3404 = vcmp.lt.s32.totalorder %v3366, 0
        %v3405 = vsub.s32 0, %v3366
        %v3406 = vsel %vm3404, %v3405, %v3366
        %v3407 = vshrl.u32 %v3406, 3
        %v3408 = vand.u32 %v3406, 7
        %v3409 = vsub.s32 0, %v3408
        %v3410 = vsel %vm3404, %v3409, %v3408
        %vm3411 = vcmp.lt.s32.totalorder %v3367, 0
        %v3412 = vsub.s32 0, %v3367
        %v3413 = vsel %vm3411, %v3412, %v3367
        %v3414 = vshrl.u32 %v3413, 3
        %v3415 = vand.u32 %v3413, 7
        %v3416 = vsub.s32 0, %v3415
        %v3417 = vsel %vm3411, %v3416, %v3415
        %vm3418 = vcmp.lt.s32.totalorder %v3368, 0
        %v3419 = vsub.s32 0, %v3368
        %v3420 = vsel %vm3418, %v3419, %v3368
        %v3421 = vshrl.u32 %v3420, 3
        %v3422 = vand.u32 %v3420, 7
        %v3423 = vsub.s32 0, %v3422
        %v3424 = vsel %vm3418, %v3423, %v3422
        %vm3425 = vcmp.ne.s32.totalorder %v3375, 0
        %vm3426 = vcmp.ne.s32.totalorder %v3382, 0
        %vm3427 = vcmp.ne.s32.totalorder %v3389, 0
        %vm3428 = vcmp.ne.s32.totalorder %v3396, 0
        %vm3429 = vcmp.ne.s32.totalorder %v3403, 0
        %vm3430 = vcmp.ne.s32.totalorder %v3410, 0
        %vm3431 = vcmp.ne.s32.totalorder %v3417, 0
        %vm3432 = vcmp.ne.s32.totalorder %v3424, 0
        %vm3433 = vcmp.lt.s32.totalorder %v3375, 0
        %vm3434 = vcmp.lt.s32.totalorder %v3382, 0
        %vm3435 = vcmp.lt.s32.totalorder %v3389, 0
        %vm3436 = vcmp.lt.s32.totalorder %v3396, 0
        %vm3437 = vcmp.lt.s32.totalorder %v3403, 0
        %vm3438 = vcmp.lt.s32.totalorder %v3410, 0
        %vm3439 = vcmp.lt.s32.totalorder %v3417, 0
        %vm3440 = vcmp.lt.s32.totalorder %v3424, 0
        %vm3441 = vmand %vm3433, %vm3425
        %vm3442 = vmand %vm3434, %vm3426
        %vm3443 = vmand %vm3435, %vm3427
        %vm3444 = vmand %vm3436, %vm3428
        %vm3445 = vmand %vm3437, %vm3429
        %vm3446 = vmand %vm3438, %vm3430
        %vm3447 = vmand %vm3439, %vm3431
        %vm3448 = vmand %vm3440, %vm3432
        %v3449 = vadd.s32 %v3375, 8
        %v3450 = vadd.s32 %v3382, 8
        %v3451 = vadd.s32 %v3389, 8
        %v3452 = vadd.s32 %v3396, 8
        %v3453 = vadd.s32 %v3403, 8
        %v3454 = vadd.s32 %v3410, 8
        %v3455 = vadd.s32 %v3417, 8
        %v3456 = vadd.s32 %v3424, 8
        %v3457 = vsel %vm3441, %v3449, %v3375
        %v3458 = vsel %vm3442, %v3450, %v3382
        %v3459 = vsel %vm3443, %v3451, %v3389
        %v3460 = vsel %vm3444, %v3452, %v3396
        %v3461 = vsel %vm3445, %v3453, %v3403
        %v3462 = vsel %vm3446, %v3454, %v3410
        %v3463 = vsel %vm3447, %v3455, %v3417
        %v3464 = vsel %vm3448, %v3456, %v3424
        %v3465 = vld [vmem:[%s12] sm:$0xff]
        %v3466 = vld [vmem:[%s12 + $0x8] sm:$0xff]
        %v3467 = vld [vmem:[%s12 + $0x10] sm:$0x1]
        %v3468 = vld [vmem:[%s12 + $0x18] sm:$0x1]
        %v3469 = vld [vmem:[%s13] sm:$0x3]
        %v3471 = vlaneseq
        %v3472 = vshrl.u32 %v3471, 7
        %v3473 = vsub.s32 0, %v3472
        %v3474 = vrot.slane %v3469, %v3473
        %v3475 = vlaneseq
        %v3476 = vshrl.u32 %v3475, 7
        %v3477 = vsub.s32 1, %v3476
        %v3478 = vrot.slane %v3469, %v3477
        %v3481 = vadd.f32 %v3474, 0.0
        %v3482 = vadd.f32 %v3478, 0.0
        %vm3483 = vcmp.ge.s32.totalorder %v3457, 1
        %vm3484 = vcmp.ge.s32.totalorder %v3458, 1
        %vm3485 = vcmp.ge.s32.totalorder %v3459, 1
        %vm3486 = vcmp.ge.s32.totalorder %v3460, 1
        %vm3487 = vcmp.ge.s32.totalorder %v3461, 1
        %vm3488 = vcmp.ge.s32.totalorder %v3462, 1
        %vm3489 = vcmp.ge.s32.totalorder %v3463, 1
        %vm3490 = vcmp.ge.s32.totalorder %v3464, 1
        %v3491 = vsel %vm3483, 1, 0
        %v3492 = vsel %vm3484, 1, 0
        %v3493 = vsel %vm3485, 1, 0
        %v3494 = vsel %vm3486, 1, 0
        %v3495 = vsel %vm3487, 1, 0
        %v3496 = vsel %vm3488, 1, 0
        %v3497 = vsel %vm3489, 1, 0
        %v3498 = vsel %vm3490, 1, 0
        %vm3499 = vcmp.eq.s32.totalorder %v3491, 1
        %vm3500 = vcmp.eq.s32.totalorder %v3492, 1
        %vm3501 = vcmp.eq.s32.totalorder %v3493, 1
        %vm3502 = vcmp.eq.s32.totalorder %v3494, 1
        %vm3503 = vcmp.eq.s32.totalorder %v3495, 1
        %vm3504 = vcmp.eq.s32.totalorder %v3496, 1
        %vm3505 = vcmp.eq.s32.totalorder %v3497, 1
        %vm3506 = vcmp.eq.s32.totalorder %v3498, 1
        %v3507 = vsel %vm3500, %v3356, 0.0
        %v3508 = vsel %vm3500, %v3357, 0.0
        %v3509 = vsel %vm3501, %v3311, 0.0
        %v3510 = vsel %vm3501, %v3313, 0.0
        %v3511 = vsel %vm3502, %v3315, 0.0
        %v3512 = vsel %vm3502, %v3317, 0.0
        %v3513 = vsel %vm3503, %v3319, 0.0
        %v3514 = vsel %vm3503, %v3321, 0.0
        %v3515 = vsel %vm3504, %v3323, 0.0
        %v3516 = vsel %vm3504, %v3325, 0.0
        %v3517 = vsel %vm3505, %v3327, 0.0
        %v3518 = vsel %vm3505, %v3329, 0.0
        %v3519 = vsel %vm3506, %v3331, 0.0
        %v3520 = vsel %vm3506, %v3333, 0.0
        %v3521 = vlaneseq
        %v3522 = vshrl.u32 %v3521, 7
        %v3523 = vsub.s32 0, %v3522
        %v3524 = vrot.slane %v3465, %v3523
        %v3525 = vlaneseq
        %v3526 = vshrl.u32 %v3525, 7
        %v3527 = vsub.s32 0, %v3526
        %v3528 = vrot.slane %v3466, %v3527
        %v3529 = vmul.f32 %v3524, 0.0
        %v3530 = vmul.f32 %v3528, 0.0
        %v3531 = vmul.f32 %v3507, %v3524
        %v3532 = vmul.f32 %v3508, %v3528
        %v3533 = vmul.f32 %v3509, %v3524
        %v3534 = vmul.f32 %v3510, %v3528
        %v3535 = vmul.f32 %v3511, %v3524
        %v3536 = vmul.f32 %v3512, %v3528
        %v3537 = vmul.f32 %v3513, %v3524
        %v3538 = vmul.f32 %v3514, %v3528
        %v3539 = vmul.f32 %v3515, %v3524
        %v3540 = vmul.f32 %v3516, %v3528
        %v3541 = vmul.f32 %v3517, %v3524
        %v3542 = vmul.f32 %v3518, %v3528
        %v3543 = vmul.f32 %v3519, %v3524
        %v3544 = vmul.f32 %v3520, %v3528
        %v3545 = vadd.f32 %v3481, %v3529
        %v3546 = vadd.f32 %v3482, %v3530
        %v3547 = vadd.f32 %v3481, %v3531
        %v3548 = vadd.f32 %v3482, %v3532
        %v3549 = vadd.f32 %v3481, %v3533
        %v3550 = vadd.f32 %v3482, %v3534
        %v3551 = vadd.f32 %v3481, %v3535
        %v3552 = vadd.f32 %v3482, %v3536
        %v3553 = vadd.f32 %v3481, %v3537
        %v3554 = vadd.f32 %v3482, %v3538
        %v3555 = vadd.f32 %v3481, %v3539
        %v3556 = vadd.f32 %v3482, %v3540
        %v3557 = vadd.f32 %v3481, %v3541
        %v3558 = vadd.f32 %v3482, %v3542
        %v3559 = vadd.f32 %v3481, %v3543
        %v3560 = vadd.f32 %v3482, %v3544
        %v3561 = vlaneseq
        %v3562 = vshrl.u32 %v3561, 7
        %v3563 = vsub.s32 1, %v3562
        %v3564 = vrot.slane %v3465, %v3563
        %v3565 = vlaneseq
        %v3566 = vshrl.u32 %v3565, 7
        %v3567 = vsub.s32 1, %v3566
        %v3568 = vrot.slane %v3466, %v3567
        %v3569 = vmul.f32 %v3564, 0.0
        %v3570 = vmul.f32 %v3568, 0.0
        %v3571 = vmul.f32 %v3356, %v3564
        %v3572 = vmul.f32 %v3357, %v3568
        %v3573 = vmul.f32 %v3311, %v3564
        %v3574 = vmul.f32 %v3313, %v3568
        %v3575 = vmul.f32 %v3315, %v3564
        %v3576 = vmul.f32 %v3317, %v3568
        %v3577 = vmul.f32 %v3319, %v3564
        %v3578 = vmul.f32 %v3321, %v3568
        %v3579 = vmul.f32 %v3323, %v3564
        %v3580 = vmul.f32 %v3325, %v3568
        %v3581 = vmul.f32 %v3327, %v3564
        %v3582 = vmul.f32 %v3329, %v3568
        %v3583 = vmul.f32 %v3331, %v3564
        %v3584 = vmul.f32 %v3333, %v3568
        %v3585 = vmul.f32 %v3335, %v3564
        %v3586 = vmul.f32 %v3337, %v3568
        %vm3605 = vcmask 1046528
        %v3606 = vrot.slane %v3569, 1
        %v3607 = vrot.slane %v3571, 1
        %v3608 = vsel %vm3605, %v3606, %v3607
        %v3609 = vrot.slane %v3570, 1
        %v3610 = vrot.slane %v3572, 1
        %v3611 = vsel %vm3605, %v3609, %v3610
        %v3612 = vrot.slane %v3573, 1
        %v3613 = vsel %vm3605, %v3607, %v3612
        %v3614 = vrot.slane %v3574, 1
        %v3615 = vsel %vm3605, %v3610, %v3614
        %v3616 = vrot.slane %v3575, 1
        %v3617 = vsel %vm3605, %v3612, %v3616
        %v3618 = vrot.slane %v3576, 1
        %v3619 = vsel %vm3605, %v3614, %v3618
        %v3620 = vrot.slane %v3577, 1
        %v3621 = vsel %vm3605, %v3616, %v3620
        %v3622 = vrot.slane %v3578, 1
        %v3623 = vsel %vm3605, %v3618, %v3622
        %v3624 = vrot.slane %v3579, 1
        %v3625 = vsel %vm3605, %v3620, %v3624
        %v3626 = vrot.slane %v3580, 1
        %v3627 = vsel %vm3605, %v3622, %v3626
        %v3628 = vrot.slane %v3581, 1
        %v3629 = vsel %vm3605, %v3624, %v3628
        %v3630 = vrot.slane %v3582, 1
        %v3631 = vsel %vm3605, %v3626, %v3630
        %v3632 = vrot.slane %v3583, 1
        %v3633 = vsel %vm3605, %v3628, %v3632
        %v3634 = vrot.slane %v3584, 1
        %v3635 = vsel %vm3605, %v3630, %v3634
        %v3636 = vrot.slane %v3585, 1
        %v3637 = vsel %vm3605, %v3632, %v3636
        %v3638 = vrot.slane %v3586, 1
        %v3639 = vsel %vm3605, %v3634, %v3638
        %v3656 = vadd.f32 %v3545, %v3608
        %v3657 = vadd.f32 %v3546, %v3611
        %v3658 = vadd.f32 %v3547, %v3613
        %v3659 = vadd.f32 %v3548, %v3615
        %v3660 = vadd.f32 %v3549, %v3617
        %v3661 = vadd.f32 %v3550, %v3619
        %v3662 = vadd.f32 %v3551, %v3621
        %v3663 = vadd.f32 %v3552, %v3623
        %v3664 = vadd.f32 %v3553, %v3625
        %v3665 = vadd.f32 %v3554, %v3627
        %v3666 = vadd.f32 %v3555, %v3629
        %v3667 = vadd.f32 %v3556, %v3631
        %v3668 = vadd.f32 %v3557, %v3633
        %v3669 = vadd.f32 %v3558, %v3635
        %v3670 = vadd.f32 %v3559, %v3637
        %v3671 = vadd.f32 %v3560, %v3639
        %vm3672 = vcmp.le.s32.totalorder %v3457, 6
        %vm3673 = vcmp.le.s32.totalorder %v3458, 6
        %vm3674 = vcmp.le.s32.totalorder %v3459, 6
        %vm3675 = vcmp.le.s32.totalorder %v3460, 6
        %vm3676 = vcmp.le.s32.totalorder %v3461, 6
        %vm3677 = vcmp.le.s32.totalorder %v3462, 6
        %vm3678 = vcmp.le.s32.totalorder %v3463, 6
        %vm3679 = vcmp.le.s32.totalorder %v3464, 6
        %v3680 = vsel %vm3672, 1, 0
        %v3681 = vsel %vm3673, 1, 0
        %v3682 = vsel %vm3674, 1, 0
        %v3683 = vsel %vm3675, 1, 0
        %v3684 = vsel %vm3676, 1, 0
        %v3685 = vsel %vm3677, 1, 0
        %v3686 = vsel %vm3678, 1, 0
        %v3687 = vsel %vm3679, 1, 0
        %vm3688 = vcmp.eq.s32.totalorder %v3680, 1
        %vm3689 = vcmp.eq.s32.totalorder %v3681, 1
        %vm3690 = vcmp.eq.s32.totalorder %v3682, 1
        %vm3691 = vcmp.eq.s32.totalorder %v3683, 1
        %vm3692 = vcmp.eq.s32.totalorder %v3684, 1
        %vm3693 = vcmp.eq.s32.totalorder %v3685, 1
        %vm3694 = vcmp.eq.s32.totalorder %v3686, 1
        %vm3695 = vcmp.eq.s32.totalorder %v3687, 1
        %vm3699 = vcmask 1045504
        %v3700 = vrot.slane 0.0, 2
        %v3701 = vrot.slane %v3356, 2
        %v3702 = vsel %vm3699, %v3700, %v3701
        %v3703 = vrot.slane %v3357, 2
        %v3704 = vsel %vm3699, %v3700, %v3703
        %v3705 = vrot.slane %v3311, 2
        %v3706 = vsel %vm3699, %v3701, %v3705
        %v3707 = vrot.slane %v3313, 2
        %v3708 = vsel %vm3699, %v3703, %v3707
        %v3709 = vrot.slane %v3315, 2
        %v3710 = vsel %vm3699, %v3705, %v3709
        %v3711 = vrot.slane %v3317, 2
        %v3712 = vsel %vm3699, %v3707, %v3711
        %v3713 = vrot.slane %v3319, 2
        %v3714 = vsel %vm3699, %v3709, %v3713
        %v3715 = vrot.slane %v3321, 2
        %v3716 = vsel %vm3699, %v3711, %v3715
        %v3717 = vrot.slane %v3323, 2
        %v3718 = vsel %vm3699, %v3713, %v3717
        %v3719 = vrot.slane %v3325, 2
        %v3720 = vsel %vm3699, %v3715, %v3719
        %v3721 = vrot.slane %v3327, 2
        %v3722 = vsel %vm3699, %v3717, %v3721
        %v3723 = vrot.slane %v3329, 2
        %v3724 = vsel %vm3699, %v3719, %v3723
        %v3725 = vrot.slane %v3331, 2
        %v3726 = vsel %vm3699, %v3721, %v3725
        %v3727 = vrot.slane %v3333, 2
        %v3728 = vsel %vm3699, %v3723, %v3727
        %v3729 = vrot.slane %v3335, 2
        %v3730 = vsel %vm3699, %v3725, %v3729
        %v3731 = vrot.slane %v3337, 2
        %v3732 = vsel %vm3699, %v3727, %v3731
        %v3749 = vsel %vm3688, %v3702, 0.0
        %v3750 = vsel %vm3688, %v3704, 0.0
        %v3751 = vsel %vm3689, %v3706, 0.0
        %v3752 = vsel %vm3689, %v3708, 0.0
        %v3753 = vsel %vm3690, %v3710, 0.0
        %v3754 = vsel %vm3690, %v3712, 0.0
        %v3755 = vsel %vm3691, %v3714, 0.0
        %v3756 = vsel %vm3691, %v3716, 0.0
        %v3757 = vsel %vm3692, %v3718, 0.0
        %v3758 = vsel %vm3692, %v3720, 0.0
        %v3759 = vsel %vm3693, %v3722, 0.0
        %v3760 = vsel %vm3693, %v3724, 0.0
        %v3761 = vsel %vm3694, %v3726, 0.0
        %v3762 = vsel %vm3694, %v3728, 0.0
        %v3763 = vsel %vm3695, %v3730, 0.0
        %v3764 = vsel %vm3695, %v3732, 0.0
        %v3765 = vlaneseq
        %v3766 = vshrl.u32 %v3765, 7
        %v3767 = vsub.s32 2, %v3766
        %v3768 = vrot.slane %v3465, %v3767
        %v3769 = vlaneseq
        %v3770 = vshrl.u32 %v3769, 7
        %v3771 = vsub.s32 2, %v3770
        %v3772 = vrot.slane %v3466, %v3771
        %v3773 = vmul.f32 %v3749, %v3768
        %v3774 = vmul.f32 %v3750, %v3772
        %v3775 = vmul.f32 %v3751, %v3768
        %v3776 = vmul.f32 %v3752, %v3772
        %v3777 = vmul.f32 %v3753, %v3768
        %v3778 = vmul.f32 %v3754, %v3772
        %v3779 = vmul.f32 %v3755, %v3768
        %v3780 = vmul.f32 %v3756, %v3772
        %v3781 = vmul.f32 %v3757, %v3768
        %v3782 = vmul.f32 %v3758, %v3772
        %v3783 = vmul.f32 %v3759, %v3768
        %v3784 = vmul.f32 %v3760, %v3772
        %v3785 = vmul.f32 %v3761, %v3768
        %v3786 = vmul.f32 %v3762, %v3772
        %v3787 = vmul.f32 %v3763, %v3768
        %v3788 = vmul.f32 %v3764, %v3772
        %v3789 = vadd.f32 %v3656, %v3773
        %v3790 = vadd.f32 %v3657, %v3774
        %v3791 = vadd.f32 %v3658, %v3775
        %v3792 = vadd.f32 %v3659, %v3776
        %v3793 = vadd.f32 %v3660, %v3777
        %v3794 = vadd.f32 %v3661, %v3778
        %v3795 = vadd.f32 %v3662, %v3779
        %v3796 = vadd.f32 %v3663, %v3780
        %v3797 = vadd.f32 %v3664, %v3781
        %v3798 = vadd.f32 %v3665, %v3782
        %v3799 = vadd.f32 %v3666, %v3783
        %v3800 = vadd.f32 %v3667, %v3784
        %v3801 = vadd.f32 %v3668, %v3785
        %v3802 = vadd.f32 %v3669, %v3786
        %v3803 = vadd.f32 %v3670, %v3787
        %v3804 = vadd.f32 %v3671, %v3788
        %v3805 = vsel %vm3499, %v3356, 0.0
        %v3806 = vsel %vm3499, %v3357, 0.0
        %v3807 = vsel %vm3500, %v3311, 0.0
        %v3808 = vsel %vm3500, %v3313, 0.0
        %v3809 = vsel %vm3501, %v3315, 0.0
        %v3810 = vsel %vm3501, %v3317, 0.0
        %v3811 = vsel %vm3502, %v3319, 0.0
        %v3812 = vsel %vm3502, %v3321, 0.0
        %v3813 = vsel %vm3503, %v3323, 0.0
        %v3814 = vsel %vm3503, %v3325, 0.0
        %v3815 = vsel %vm3504, %v3327, 0.0
        %v3816 = vsel %vm3504, %v3329, 0.0
        %v3817 = vsel %vm3505, %v3331, 0.0
        %v3818 = vsel %vm3505, %v3333, 0.0
        %v3819 = vsel %vm3506, %v3335, 0.0
        %v3820 = vsel %vm3506, %v3337, 0.0
        %v3821 = vlaneseq
        %v3822 = vshrl.u32 %v3821, 7
        %v3823 = vsub.s32 3, %v3822
        %v3824 = vrot.slane %v3465, %v3823
        %v3825 = vlaneseq
        %v3826 = vshrl.u32 %v3825, 7
        %v3827 = vsub.s32 3, %v3826
        %v3828 = vrot.slane %v3466, %v3827
        %v3829 = vmul.f32 %v3805, %v3824
        %v3830 = vmul.f32 %v3806, %v3828
        %v3831 = vmul.f32 %v3807, %v3824
        %v3832 = vmul.f32 %v3808, %v3828
        %v3833 = vmul.f32 %v3809, %v3824
        %v3834 = vmul.f32 %v3810, %v3828
        %v3835 = vmul.f32 %v3811, %v3824
        %v3836 = vmul.f32 %v3812, %v3828
        %v3837 = vmul.f32 %v3813, %v3824
        %v3838 = vmul.f32 %v3814, %v3828
        %v3839 = vmul.f32 %v3815, %v3824
        %v3840 = vmul.f32 %v3816, %v3828
        %v3841 = vmul.f32 %v3817, %v3824
        %v3842 = vmul.f32 %v3818, %v3828
        %v3843 = vmul.f32 %v3819, %v3824
        %v3844 = vmul.f32 %v3820, %v3828
        %v3845 = vadd.f32 %v3789, %v3829
        %v3846 = vadd.f32 %v3790, %v3830
        %v3847 = vadd.f32 %v3791, %v3831
        %v3848 = vadd.f32 %v3792, %v3832
        %v3849 = vadd.f32 %v3793, %v3833
        %v3850 = vadd.f32 %v3794, %v3834
        %v3851 = vadd.f32 %v3795, %v3835
        %v3852 = vadd.f32 %v3796, %v3836
        %v3853 = vadd.f32 %v3797, %v3837
        %v3854 = vadd.f32 %v3798, %v3838
        %v3855 = vadd.f32 %v3799, %v3839
        %v3856 = vadd.f32 %v3800, %v3840
        %v3857 = vadd.f32 %v3801, %v3841
        %v3858 = vadd.f32 %v3802, %v3842
        %v3859 = vadd.f32 %v3803, %v3843
        %v3860 = vadd.f32 %v3804, %v3844
        %v3861 = vlaneseq
        %v3862 = vshrl.u32 %v3861, 7
        %v3863 = vsub.s32 4, %v3862
        %v3864 = vrot.slane %v3465, %v3863
        %v3865 = vlaneseq
        %v3866 = vshrl.u32 %v3865, 7
        %v3867 = vsub.s32 4, %v3866
        %v3868 = vrot.slane %v3466, %v3867
        %v3869 = vmul.f32 %v3356, %v3864
        %v3870 = vmul.f32 %v3357, %v3868
        %v3871 = vmul.f32 %v3311, %v3864
        %v3872 = vmul.f32 %v3313, %v3868
        %v3873 = vmul.f32 %v3315, %v3864
        %v3874 = vmul.f32 %v3317, %v3868
        %v3875 = vmul.f32 %v3319, %v3864
        %v3876 = vmul.f32 %v3321, %v3868
        %v3877 = vmul.f32 %v3323, %v3864
        %v3878 = vmul.f32 %v3325, %v3868
        %v3879 = vmul.f32 %v3327, %v3864
        %v3880 = vmul.f32 %v3329, %v3868
        %v3881 = vmul.f32 %v3331, %v3864
        %v3882 = vmul.f32 %v3333, %v3868
        %v3883 = vmul.f32 %v3335, %v3864
        %v3884 = vmul.f32 %v3337, %v3868
        %v3885 = vmul.f32 %v3358, %v3864
        %v3886 = vmul.f32 %v3359, %v3868
        %v3905 = vrot.slane %v3869, 1
        %v3906 = vrot.slane %v3871, 1
        %v3907 = vsel %vm3605, %v3905, %v3906
        %v3908 = vrot.slane %v3870, 1
        %v3909 = vrot.slane %v3872, 1
        %v3910 = vsel %vm3605, %v3908, %v3909
        %v3911 = vrot.slane %v3873, 1
        %v3912 = vsel %vm3605, %v3906, %v3911
        %v3913 = vrot.slane %v3874, 1
        %v3914 = vsel %vm3605, %v3909, %v3913
        %v3915 = vrot.slane %v3875, 1
        %v3916 = vsel %vm3605, %v3911, %v3915
        %v3917 = vrot.slane %v3876, 1
        %v3918 = vsel %vm3605, %v3913, %v3917
        %v3919 = vrot.slane %v3877, 1
        %v3920 = vsel %vm3605, %v3915, %v3919
        %v3921 = vrot.slane %v3878, 1
        %v3922 = vsel %vm3605, %v3917, %v3921
        %v3923 = vrot.slane %v3879, 1
        %v3924 = vsel %vm3605, %v3919, %v3923
        %v3925 = vrot.slane %v3880, 1
        %v3926 = vsel %vm3605, %v3921, %v3925
        %v3927 = vrot.slane %v3881, 1
        %v3928 = vsel %vm3605, %v3923, %v3927
        %v3929 = vrot.slane %v3882, 1
        %v3930 = vsel %vm3605, %v3925, %v3929
        %v3931 = vrot.slane %v3883, 1
        %v3932 = vsel %vm3605, %v3927, %v3931
        %v3933 = vrot.slane %v3884, 1
        %v3934 = vsel %vm3605, %v3929, %v3933
        %v3935 = vrot.slane %v3885, 1
        %v3936 = vsel %vm3605, %v3931, %v3935
        %v3937 = vrot.slane %v3886, 1
        %v3938 = vsel %vm3605, %v3933, %v3937
        %v3955 = vadd.f32 %v3845, %v3907
        %v3956 = vadd.f32 %v3846, %v3910
        %v3957 = vadd.f32 %v3847, %v3912
        %v3958 = vadd.f32 %v3848, %v3914
        %v3959 = vadd.f32 %v3849, %v3916
        %v3960 = vadd.f32 %v3850, %v3918
        %v3961 = vadd.f32 %v3851, %v3920
        %v3962 = vadd.f32 %v3852, %v3922
        %v3963 = vadd.f32 %v3853, %v3924
        %v3964 = vadd.f32 %v3854, %v3926
        %v3965 = vadd.f32 %v3855, %v3928
        %v3966 = vadd.f32 %v3856, %v3930
        %v3967 = vadd.f32 %v3857, %v3932
        %v3968 = vadd.f32 %v3858, %v3934
        %v3969 = vadd.f32 %v3859, %v3936
        %v3970 = vadd.f32 %v3860, %v3938
        %v3973 = vrot.slane %v3358, 2
        %v3974 = vsel %vm3699, %v3729, %v3973
        %v3975 = vrot.slane %v3359, 2
        %v3976 = vsel %vm3699, %v3731, %v3975
        %v3979 = vsel %vm3688, %v3706, 0.0
        %v3980 = vsel %vm3688, %v3708, 0.0
        %v3981 = vsel %vm3689, %v3710, 0.0
        %v3982 = vsel %vm3689, %v3712, 0.0
        %v3983 = vsel %vm3690, %v3714, 0.0
        %v3984 = vsel %vm3690, %v3716, 0.0
        %v3985 = vsel %vm3691, %v3718, 0.0
        %v3986 = vsel %vm3691, %v3720, 0.0
        %v3987 = vsel %vm3692, %v3722, 0.0
        %v3988 = vsel %vm3692, %v3724, 0.0
        %v3989 = vsel %vm3693, %v3726, 0.0
        %v3990 = vsel %vm3693, %v3728, 0.0
        %v3991 = vsel %vm3694, %v3730, 0.0
        %v3992 = vsel %vm3694, %v3732, 0.0
        %v3993 = vsel %vm3695, %v3974, 0.0
        %v3994 = vsel %vm3695, %v3976, 0.0
        %v3995 = vlaneseq
        %v3996 = vshrl.u32 %v3995, 7
        %v3997 = vsub.s32 5, %v3996
        %v3998 = vrot.slane %v3465, %v3997
        %v3999 = vlaneseq
        %v4000 = vshrl.u32 %v3999, 7
        %v4001 = vsub.s32 5, %v4000
        %v4002 = vrot.slane %v3466, %v4001
        %v4003 = vmul.f32 %v3979, %v3998
        %v4004 = vmul.f32 %v3980, %v4002
        %v4005 = vmul.f32 %v3981, %v3998
        %v4006 = vmul.f32 %v3982, %v4002
        %v4007 = vmul.f32 %v3983, %v3998
        %v4008 = vmul.f32 %v3984, %v4002
        %v4009 = vmul.f32 %v3985, %v3998
        %v4010 = vmul.f32 %v3986, %v4002
        %v4011 = vmul.f32 %v3987, %v3998
        %v4012 = vmul.f32 %v3988, %v4002
        %v4013 = vmul.f32 %v3989, %v3998
        %v4014 = vmul.f32 %v3990, %v4002
        %v4015 = vmul.f32 %v3991, %v3998
        %v4016 = vmul.f32 %v3992, %v4002
        %v4017 = vmul.f32 %v3993, %v3998
        %v4018 = vmul.f32 %v3994, %v4002
        %v4019 = vadd.f32 %v3955, %v4003
        %v4020 = vadd.f32 %v3956, %v4004
        %v4021 = vadd.f32 %v3957, %v4005
        %v4022 = vadd.f32 %v3958, %v4006
        %v4023 = vadd.f32 %v3959, %v4007
        %v4024 = vadd.f32 %v3960, %v4008
        %v4025 = vadd.f32 %v3961, %v4009
        %v4026 = vadd.f32 %v3962, %v4010
        %v4027 = vadd.f32 %v3963, %v4011
        %v4028 = vadd.f32 %v3964, %v4012
        %v4029 = vadd.f32 %v3965, %v4013
        %v4030 = vadd.f32 %v3966, %v4014
        %v4031 = vadd.f32 %v3967, %v4015
        %v4032 = vadd.f32 %v3968, %v4016
        %v4033 = vadd.f32 %v3969, %v4017
        %v4034 = vadd.f32 %v3970, %v4018
        %v4035 = vsel %vm3499, %v3311, 0.0
        %v4036 = vsel %vm3499, %v3313, 0.0
        %v4037 = vsel %vm3500, %v3315, 0.0
        %v4038 = vsel %vm3500, %v3317, 0.0
        %v4039 = vsel %vm3501, %v3319, 0.0
        %v4040 = vsel %vm3501, %v3321, 0.0
        %v4041 = vsel %vm3502, %v3323, 0.0
        %v4042 = vsel %vm3502, %v3325, 0.0
        %v4043 = vsel %vm3503, %v3327, 0.0
        %v4044 = vsel %vm3503, %v3329, 0.0
        %v4045 = vsel %vm3504, %v3331, 0.0
        %v4046 = vsel %vm3504, %v3333, 0.0
        %v4047 = vsel %vm3505, %v3335, 0.0
        %v4048 = vsel %vm3505, %v3337, 0.0
        %v4049 = vsel %vm3506, %v3358, 0.0
        %v4050 = vsel %vm3506, %v3359, 0.0
        %v4051 = vlaneseq
        %v4052 = vshrl.u32 %v4051, 7
        %v4053 = vsub.s32 6, %v4052
        %v4054 = vrot.slane %v3465, %v4053
        %v4055 = vlaneseq
        %v4056 = vshrl.u32 %v4055, 7
        %v4057 = vsub.s32 6, %v4056
        %v4058 = vrot.slane %v3466, %v4057
        %v4059 = vmul.f32 %v4035, %v4054
        %v4060 = vmul.f32 %v4036, %v4058
        %v4061 = vmul.f32 %v4037, %v4054
        %v4062 = vmul.f32 %v4038, %v4058
        %v4063 = vmul.f32 %v4039, %v4054
        %v4064 = vmul.f32 %v4040, %v4058
        %v4065 = vmul.f32 %v4041, %v4054
        %v4066 = vmul.f32 %v4042, %v4058
        %v4067 = vmul.f32 %v4043, %v4054
        %v4068 = vmul.f32 %v4044, %v4058
        %v4069 = vmul.f32 %v4045, %v4054
        %v4070 = vmul.f32 %v4046, %v4058
        %v4071 = vmul.f32 %v4047, %v4054
        %v4072 = vmul.f32 %v4048, %v4058
        %v4073 = vmul.f32 %v4049, %v4054
        %v4074 = vmul.f32 %v4050, %v4058
        %v4075 = vadd.f32 %v4019, %v4059
        %v4076 = vadd.f32 %v4020, %v4060
        %v4077 = vadd.f32 %v4021, %v4061
        %v4078 = vadd.f32 %v4022, %v4062
        %v4079 = vadd.f32 %v4023, %v4063
        %v4080 = vadd.f32 %v4024, %v4064
        %v4081 = vadd.f32 %v4025, %v4065
        %v4082 = vadd.f32 %v4026, %v4066
        %v4083 = vadd.f32 %v4027, %v4067
        %v4084 = vadd.f32 %v4028, %v4068
        %v4085 = vadd.f32 %v4029, %v4069
        %v4086 = vadd.f32 %v4030, %v4070
        %v4087 = vadd.f32 %v4031, %v4071
        %v4088 = vadd.f32 %v4032, %v4072
        %v4089 = vadd.f32 %v4033, %v4073
        %v4090 = vadd.f32 %v4034, %v4074
        %v4091 = vlaneseq
        %v4092 = vshrl.u32 %v4091, 7
        %v4093 = vsub.s32 7, %v4092
        %v4094 = vrot.slane %v3465, %v4093
        %v4095 = vlaneseq
        %v4096 = vshrl.u32 %v4095, 7
        %v4097 = vsub.s32 7, %v4096
        %v4098 = vrot.slane %v3466, %v4097
        %v4099 = vmul.f32 %v3311, %v4094
        %v4100 = vmul.f32 %v3313, %v4098
        %v4101 = vmul.f32 %v3315, %v4094
        %v4102 = vmul.f32 %v3317, %v4098
        %v4103 = vmul.f32 %v3319, %v4094
        %v4104 = vmul.f32 %v3321, %v4098
        %v4105 = vmul.f32 %v3323, %v4094
        %v4106 = vmul.f32 %v3325, %v4098
        %v4107 = vmul.f32 %v3327, %v4094
        %v4108 = vmul.f32 %v3329, %v4098
        %v4109 = vmul.f32 %v3331, %v4094
        %v4110 = vmul.f32 %v3333, %v4098
        %v4111 = vmul.f32 %v3335, %v4094
        %v4112 = vmul.f32 %v3337, %v4098
        %v4113 = vmul.f32 %v3358, %v4094
        %v4114 = vmul.f32 %v3359, %v4098
        %v4115 = vmul.f32 %v4094, 0.0
        %v4116 = vmul.f32 %v4098, 0.0
        %v4135 = vrot.slane %v4099, 1
        %v4136 = vrot.slane %v4101, 1
        %v4137 = vsel %vm3605, %v4135, %v4136
        %v4138 = vrot.slane %v4100, 1
        %v4139 = vrot.slane %v4102, 1
        %v4140 = vsel %vm3605, %v4138, %v4139
        %v4141 = vrot.slane %v4103, 1
        %v4142 = vsel %vm3605, %v4136, %v4141
        %v4143 = vrot.slane %v4104, 1
        %v4144 = vsel %vm3605, %v4139, %v4143
        %v4145 = vrot.slane %v4105, 1
        %v4146 = vsel %vm3605, %v4141, %v4145
        %v4147 = vrot.slane %v4106, 1
        %v4148 = vsel %vm3605, %v4143, %v4147
        %v4149 = vrot.slane %v4107, 1
        %v4150 = vsel %vm3605, %v4145, %v4149
        %v4151 = vrot.slane %v4108, 1
        %v4152 = vsel %vm3605, %v4147, %v4151
        %v4153 = vrot.slane %v4109, 1
        %v4154 = vsel %vm3605, %v4149, %v4153
        %v4155 = vrot.slane %v4110, 1
        %v4156 = vsel %vm3605, %v4151, %v4155
        %v4157 = vrot.slane %v4111, 1
        %v4158 = vsel %vm3605, %v4153, %v4157
        %v4159 = vrot.slane %v4112, 1
        %v4160 = vsel %vm3605, %v4155, %v4159
        %v4161 = vrot.slane %v4113, 1
        %v4162 = vsel %vm3605, %v4157, %v4161
        %v4163 = vrot.slane %v4114, 1
        %v4164 = vsel %vm3605, %v4159, %v4163
        %v4165 = vrot.slane %v4115, 1
        %v4166 = vsel %vm3605, %v4161, %v4165
        %v4167 = vrot.slane %v4116, 1
        %v4168 = vsel %vm3605, %v4163, %v4167
        %v4185 = vadd.f32 %v4075, %v4137
        %v4186 = vadd.f32 %v4076, %v4140
        %v4187 = vadd.f32 %v4077, %v4142
        %v4188 = vadd.f32 %v4078, %v4144
        %v4189 = vadd.f32 %v4079, %v4146
        %v4190 = vadd.f32 %v4080, %v4148
        %v4191 = vadd.f32 %v4081, %v4150
        %v4192 = vadd.f32 %v4082, %v4152
        %v4193 = vadd.f32 %v4083, %v4154
        %v4194 = vadd.f32 %v4084, %v4156
        %v4195 = vadd.f32 %v4085, %v4158
        %v4196 = vadd.f32 %v4086, %v4160
        %v4197 = vadd.f32 %v4087, %v4162
        %v4198 = vadd.f32 %v4088, %v4164
        %v4199 = vadd.f32 %v4089, %v4166
        %v4200 = vadd.f32 %v4090, %v4168
        %v4201 = vsel %vm3699, %v3973, %v3700
        %v4202 = vsel %vm3699, %v3975, %v3700
        %v4205 = vsel %vm3688, %v3710, 0.0
        %v4206 = vsel %vm3688, %v3712, 0.0
        %v4207 = vsel %vm3689, %v3714, 0.0
        %v4208 = vsel %vm3689, %v3716, 0.0
        %v4209 = vsel %vm3690, %v3718, 0.0
        %v4210 = vsel %vm3690, %v3720, 0.0
        %v4211 = vsel %vm3691, %v3722, 0.0
        %v4212 = vsel %vm3691, %v3724, 0.0
        %v4213 = vsel %vm3692, %v3726, 0.0
        %v4214 = vsel %vm3692, %v3728, 0.0
        %v4215 = vsel %vm3693, %v3730, 0.0
        %v4216 = vsel %vm3693, %v3732, 0.0
        %v4217 = vsel %vm3694, %v3974, 0.0
        %v4218 = vsel %vm3694, %v3976, 0.0
        %v4219 = vsel %vm3695, %v4201, 0.0
        %v4220 = vsel %vm3695, %v4202, 0.0
        %v4221 = vlaneseq
        %v4222 = vshrl.u32 %v4221, 7
        %v4223 = vsub.s32 0, %v4222
        %v4224 = vrot.slane %v3467, %v4223
        %v4225 = vlaneseq
        %v4226 = vshrl.u32 %v4225, 7
        %v4227 = vsub.s32 0, %v4226
        %v4228 = vrot.slane %v3468, %v4227
        %v4229 = vmul.f32 %v4205, %v4224
        %v4230 = vmul.f32 %v4206, %v4228
        %v4231 = vmul.f32 %v4207, %v4224
        %v4232 = vmul.f32 %v4208, %v4228
        %v4233 = vmul.f32 %v4209, %v4224
        %v4234 = vmul.f32 %v4210, %v4228
        %v4235 = vmul.f32 %v4211, %v4224
        %v4236 = vmul.f32 %v4212, %v4228
        %v4237 = vmul.f32 %v4213, %v4224
        %v4238 = vmul.f32 %v4214, %v4228
        %v4239 = vmul.f32 %v4215, %v4224
        %v4240 = vmul.f32 %v4216, %v4228
        %v4241 = vmul.f32 %v4217, %v4224
        %v4242 = vmul.f32 %v4218, %v4228
        %v4243 = vmul.f32 %v4219, %v4224
        %v4244 = vmul.f32 %v4220, %v4228
        %v4245 = vadd.f32 %v4185, %v4229
        %v4246 = vadd.f32 %v4186, %v4230
        %v4247 = vadd.f32 %v4187, %v4231
        %v4248 = vadd.f32 %v4188, %v4232
        %v4249 = vadd.f32 %v4189, %v4233
        %v4250 = vadd.f32 %v4190, %v4234
        %v4251 = vadd.f32 %v4191, %v4235
        %v4252 = vadd.f32 %v4192, %v4236
        %v4253 = vadd.f32 %v4193, %v4237
        %v4254 = vadd.f32 %v4194, %v4238
        %v4255 = vadd.f32 %v4195, %v4239
        %v4256 = vadd.f32 %v4196, %v4240
        %v4257 = vadd.f32 %v4197, %v4241
        %v4258 = vadd.f32 %v4198, %v4242
        %v4259 = vadd.f32 %v4199, %v4243
        %v4260 = vadd.f32 %v4200, %v4244
        %v4261 = vmul.f32 %v4245, 0.5
        %v4262 = vmul.f32 %v4246, 0.5
        %v4263 = vmul.f32 %v4247, 0.5
        %v4264 = vmul.f32 %v4248, 0.5
        %v4265 = vmul.f32 %v4249, 0.5
        %v4266 = vmul.f32 %v4250, 0.5
        %v4267 = vmul.f32 %v4251, 0.5
        %v4268 = vmul.f32 %v4252, 0.5
        %v4269 = vmul.f32 %v4253, 0.5
        %v4270 = vmul.f32 %v4254, 0.5
        %v4271 = vmul.f32 %v4255, 0.5
        %v4272 = vmul.f32 %v4256, 0.5
        %v4273 = vmul.f32 %v4257, 0.5
        %v4274 = vmul.f32 %v4258, 0.5
        %v4275 = vmul.f32 %v4259, 0.5
        %v4276 = vmul.f32 %v4260, 0.5
        %v4277 = vmul.f32 %v4245, 0.044715
        %v4278 = vmul.f32 %v4246, 0.044715
        %v4279 = vmul.f32 %v4247, 0.044715
        %v4280 = vmul.f32 %v4248, 0.044715
        %v4281 = vmul.f32 %v4249, 0.044715
        %v4282 = vmul.f32 %v4250, 0.044715
        %v4283 = vmul.f32 %v4251, 0.044715
        %v4284 = vmul.f32 %v4252, 0.044715
        %v4285 = vmul.f32 %v4253, 0.044715
        %v4286 = vmul.f32 %v4254, 0.044715
        %v4287 = vmul.f32 %v4255, 0.044715
        %v4288 = vmul.f32 %v4256, 0.044715
        %v4289 = vmul.f32 %v4257, 0.044715
        %v4290 = vmul.f32 %v4258, 0.044715
        %v4291 = vmul.f32 %v4259, 0.044715
        %v4292 = vmul.f32 %v4260, 0.044715
        %v4293 = vmul.f32 %v4277, %v4245
        %v4294 = vmul.f32 %v4278, %v4246
        %v4295 = vmul.f32 %v4279, %v4247
        %v4296 = vmul.f32 %v4280, %v4248
        %v4297 = vmul.f32 %v4281, %v4249
        %v4298 = vmul.f32 %v4282, %v4250
        %v4299 = vmul.f32 %v4283, %v4251
        %v4300 = vmul.f32 %v4284, %v4252
        %v4301 = vmul.f32 %v4285, %v4253
        %v4302 = vmul.f32 %v4286, %v4254
        %v4303 = vmul.f32 %v4287, %v4255
        %v4304 = vmul.f32 %v4288, %v4256
        %v4305 = vmul.f32 %v4289, %v4257
        %v4306 = vmul.f32 %v4290, %v4258
        %v4307 = vmul.f32 %v4291, %v4259
        %v4308 = vmul.f32 %v4292, %v4260
        %v4309 = vmul.f32 %v4293, %v4245
        %v4310 = vmul.f32 %v4294, %v4246
        %v4311 = vmul.f32 %v4295, %v4247
        %v4312 = vmul.f32 %v4296, %v4248
        %v4313 = vmul.f32 %v4297, %v4249
        %v4314 = vmul.f32 %v4298, %v4250
        %v4315 = vmul.f32 %v4299, %v4251
        %v4316 = vmul.f32 %v4300, %v4252
        %v4317 = vmul.f32 %v4301, %v4253
        %v4318 = vmul.f32 %v4302, %v4254
        %v4319 = vmul.f32 %v4303, %v4255
        %v4320 = vmul.f32 %v4304, %v4256
        %v4321 = vmul.f32 %v4305, %v4257
        %v4322 = vmul.f32 %v4306, %v4258
        %v4323 = vmul.f32 %v4307, %v4259
        %v4324 = vmul.f32 %v4308, %v4260
        %v4325 = vadd.f32 %v4245, %v4309
        %v4326 = vadd.f32 %v4246, %v4310
        %v4327 = vadd.f32 %v4247, %v4311
        %v4328 = vadd.f32 %v4248, %v4312
        %v4329 = vadd.f32 %v4249, %v4313
        %v4330 = vadd.f32 %v4250, %v4314
        %v4331 = vadd.f32 %v4251, %v4315
        %v4332 = vadd.f32 %v4252, %v4316
        %v4333 = vadd.f32 %v4253, %v4317
        %v4334 = vadd.f32 %v4254, %v4318
        %v4335 = vadd.f32 %v4255, %v4319
        %v4336 = vadd.f32 %v4256, %v4320
        %v4337 = vadd.f32 %v4257, %v4321
        %v4338 = vadd.f32 %v4258, %v4322
        %v4339 = vadd.f32 %v4259, %v4323
        %v4340 = vadd.f32 %v4260, %v4324
        %v4341 = vmul.f32 %v4325, 0.7978846
        %v4342 = vmul.f32 %v4326, 0.7978846
        %v4343 = vmul.f32 %v4327, 0.7978846
        %v4344 = vmul.f32 %v4328, 0.7978846
        %v4345 = vmul.f32 %v4329, 0.7978846
        %v4346 = vmul.f32 %v4330, 0.7978846
        %v4347 = vmul.f32 %v4331, 0.7978846
        %v4348 = vmul.f32 %v4332, 0.7978846
        %v4349 = vmul.f32 %v4333, 0.7978846
        %v4350 = vmul.f32 %v4334, 0.7978846
        %v4351 = vmul.f32 %v4335, 0.7978846
        %v4352 = vmul.f32 %v4336, 0.7978846
        %v4353 = vmul.f32 %v4337, 0.7978846
        %v4354 = vmul.f32 %v4338, 0.7978846
        %v4355 = vmul.f32 %v4339, 0.7978846
        %v4356 = vmul.f32 %v4340, 0.7978846
        %v4357 = vtanh.pop %v4341
        %v4358 = vtanh.pop %v4342
        %v4359 = vtanh.pop %v4343
        %v4360 = vtanh.pop %v4344
        %v4361 = vtanh.pop %v4345
        %v4362 = vtanh.pop %v4346
        %v4363 = vtanh.pop %v4347
        %v4364 = vtanh.pop %v4348
        %v4365 = vtanh.pop %v4349
        %v4366 = vtanh.pop %v4350
        %v4367 = vtanh.pop %v4351
        %v4368 = vtanh.pop %v4352
        %v4369 = vtanh.pop %v4353
        %v4370 = vtanh.pop %v4354
        %v4371 = vtanh.pop %v4355
        %v4372 = vtanh.pop %v4356
        %v4373 = vadd.f32 %v4357, 1.0
        %v4374 = vadd.f32 %v4358, 1.0
        %v4375 = vadd.f32 %v4359, 1.0
        %v4376 = vadd.f32 %v4360, 1.0
        %v4377 = vadd.f32 %v4361, 1.0
        %v4378 = vadd.f32 %v4362, 1.0
        %v4379 = vadd.f32 %v4363, 1.0
        %v4380 = vadd.f32 %v4364, 1.0
        %v4381 = vadd.f32 %v4365, 1.0
        %v4382 = vadd.f32 %v4366, 1.0
        %v4383 = vadd.f32 %v4367, 1.0
        %v4384 = vadd.f32 %v4368, 1.0
        %v4385 = vadd.f32 %v4369, 1.0
        %v4386 = vadd.f32 %v4370, 1.0
        %v4387 = vadd.f32 %v4371, 1.0
        %v4388 = vadd.f32 %v4372, 1.0
        %v4389 = vmul.f32 %v4261, %v4373
        %v4390 = vmul.f32 %v4262, %v4374
        %v4391 = vmul.f32 %v4263, %v4375
        %v4392 = vmul.f32 %v4264, %v4376
        %v4393 = vmul.f32 %v4265, %v4377
        %v4394 = vmul.f32 %v4266, %v4378
        %v4395 = vmul.f32 %v4267, %v4379
        %v4396 = vmul.f32 %v4268, %v4380
        %v4397 = vmul.f32 %v4269, %v4381
        %v4398 = vmul.f32 %v4270, %v4382
        %v4399 = vmul.f32 %v4271, %v4383
        %v4400 = vmul.f32 %v4272, %v4384
        %v4401 = vmul.f32 %v4273, %v4385
        %v4402 = vmul.f32 %v4274, %v4386
        %v4403 = vmul.f32 %v4275, %v4387
        %v4404 = vmul.f32 %v4276, %v4388
        %v4405 = vld [vmem:[%s15] sm:$0x1]
        %v4406 = vld [vmem:[#allocation13] sm:$0xff]
        %v4407 = vld [vmem:[#allocation13 + $0x8] sm:$0xff]
        %v4408 = vld [vmem:[#allocation13 + $0x10] sm:$0xff]
        %v4409 = vld [vmem:[#allocation13 + $0x18] sm:$0xff]
        %v4410 = vld [vmem:[#allocation13 + $0x20] sm:$0xff]
        %v4411 = vld [vmem:[#allocation13 + $0x28] sm:$0xff]
        %v4412 = vld [vmem:[#allocation13 + $0x30] sm:$0xff]
        %v4413 = vld [vmem:[#allocation13 + $0x38] sm:$0xff]
        %v4414 = vld [vmem:[#allocation13 + $0x40] sm:$0xff]
        %v4415 = vld [vmem:[#allocation13 + $0x48] sm:$0xff]
        %v4416 = vld [vmem:[#allocation13 + $0x50] sm:$0xff]
        %v4417 = vld [vmem:[#allocation13 + $0x58] sm:$0xff]
        %v4418 = vld [vmem:[#allocation13 + $0x60] sm:$0xff]
        %v4419 = vld [vmem:[#allocation13 + $0x68] sm:$0xff]
        %v4420 = vld [vmem:[#allocation13 + $0x70] sm:$0xff]
        %v4421 = vld [vmem:[#allocation13 + $0x78] sm:$0xff]
        %v4422 = vld [vmem:[#allocation13 + $0x80] sm:$0xff]
        %v4423 = vld [vmem:[#allocation13 + $0x88] sm:$0xff]
        %v4424 = vld [vmem:[#allocation13 + $0x90] sm:$0xff]
        %v4425 = vld [vmem:[#allocation13 + $0x98] sm:$0xff]
        %v4426 = vld [vmem:[#allocation13 + $0xa0] sm:$0xff]
        %v4427 = vld [vmem:[#allocation13 + $0xa8] sm:$0xff]
        %v4428 = vld [vmem:[#allocation13 + $0xb0] sm:$0xff]
        %v4429 = vld [vmem:[#allocation13 + $0xb8] sm:$0xff]
        %v4430 = vld [vmem:[#allocation13 + $0xc0] sm:$0xff]
        %v4431 = vld [vmem:[#allocation13 + $0xc8] sm:$0xff]
        %v4432 = vld [vmem:[#allocation13 + $0xd0] sm:$0xff]
        %v4433 = vld [vmem:[#allocation13 + $0xd8] sm:$0xff]
        %v4434 = vld [vmem:[#allocation13 + $0xe0] sm:$0xff]
        %v4435 = vld [vmem:[#allocation13 + $0xe8] sm:$0xff]
        %v4436 = vld [vmem:[#allocation13 + $0xf0] sm:$0xff]
        %v4437 = vld [vmem:[#allocation13 + $0xf8] sm:$0xff]
        %v4439 = vlaneseq
        %v4440 = vshrl.u32 %v4439, 7
        %v4441 = vsub.s32 0, %v4440
        %v4442 = vrot.slane %v4405, %v4441
        %4444 = vmatprep.subr.mxu0 %v4407
        %4445 = vmatpush1.xpose.msra.mxu0 %v4406
        %4446 = vmatprep.subr.mxu0 %v4409
        %4447 = vmatpush1.xpose.msra.mxu0 %v4408
        %4448 = vmatprep.subr.mxu0 %v4411
        %4449 = vmatpush1.xpose.msra.mxu0 %v4410
        %4450 = vmatprep.subr.mxu0 %v4413
        %4451 = vmatpush1.xpose.msra.mxu0 %v4412
        %4452 = vmatprep.subr.mxu0 %v4415
        %4453 = vmatpush1.xpose.msra.mxu0 %v4414
        %4454 = vmatprep.subr.mxu0 %v4417
        %4455 = vmatpush1.xpose.msra.mxu0 %v4416
        %4456 = vmatprep.subr.mxu0 %v4419
        %4457 = vmatpush1.xpose.msra.mxu0 %v4418
        %4458 = vmatprep.subr.mxu0 %v4421
        %4459 = vmatpush1.xpose.msra.mxu0 %v4420
        %4460 = vmatprep.subr.mxu0 %v4423
        %4461 = vmatpush1.xpose.msra.mxu0 %v4422
        %4462 = vmatprep.subr.mxu0 %v4425
        %4463 = vmatpush1.xpose.msra.mxu0 %v4424
        %4464 = vmatprep.subr.mxu0 %v4427
        %4465 = vmatpush1.xpose.msra.mxu0 %v4426
        %4466 = vmatprep.subr.mxu0 %v4429
        %4467 = vmatpush1.xpose.msra.mxu0 %v4428
        %4468 = vmatprep.subr.mxu0 %v4431
        %4469 = vmatpush1.xpose.msra.mxu0 %v4430
        %4470 = vmatprep.subr.mxu0 %v4433
        %4471 = vmatpush1.xpose.msra.mxu0 %v4432
        %4472 = vmatprep.subr.mxu0 %v4435
        %4473 = vmatpush1.xpose.msra.mxu0 %v4434
        %4474 = vmatprep.subr.mxu0 %v4437
        %4475 = vmatpush1.xpose.msra.mxu0 %v4436
        %4476 = vmatprep.subr.mxu0 0.0
        %4477 = vmatpush1.xpose.msra.mxu0 0.0
        %4478 = vmatprep.subr.mxu0 0.0
        %4479 = vmatpush1.xpose.msra.mxu0 0.0
        %4480 = vmatprep.subr.mxu0 0.0
        %4481 = vmatpush1.xpose.msra.mxu0 0.0
        %4482 = vmatprep.subr.mxu0 0.0
        %4483 = vmatpush1.xpose.msra.mxu0 0.0
        %4484 = vmatprep.subr.mxu0 0.0
        %4485 = vmatpush1.xpose.msra.mxu0 0.0
        %4486 = vmatprep.subr.mxu0 0.0
        %4487 = vmatpush1.xpose.msra.mxu0 0.0
        %4488 = vmatprep.subr.mxu0 0.0
        %4489 = vmatpush1.xpose.msra.mxu0 0.0
        %4490 = vmatprep.subr.mxu0 0.0
        %4491 = vmatpush1.xpose.msra.mxu0 0.0
        %4492 = vmatprep.subr.mxu0 0.0
        %4493 = vmatpush1.xpose.msra.mxu0 0.0
        %4494 = vmatprep.subr.mxu0 0.0
        %4495 = vmatpush1.xpose.msra.mxu0 0.0
        %4496 = vmatprep.subr.mxu0 0.0
        %4497 = vmatpush1.xpose.msra.mxu0 0.0
        %4498 = vmatprep.subr.mxu0 0.0
        %4499 = vmatpush1.xpose.msra.mxu0 0.0
        %4500 = vmatprep.subr.mxu0 0.0
        %4501 = vmatpush1.xpose.msra.mxu0 0.0
        %4502 = vmatprep.subr.mxu0 0.0
        %4503 = vmatpush1.xpose.msra.mxu0 0.0
        %4504 = vmatprep.subr.mxu0 0.0
        %4505 = vmatpush1.xpose.msra.mxu0 0.0
        %4506 = vmatprep.subr.mxu0 0.0
        %4507 = vmatpush1.xpose.msra.mxu0 0.0
        %4508 = vmatprep.mubr.f32.mxu0 %v4390
        %4509 = vmatmul.mubr.f32.gmra.mrb[0].mxu0 %v4389
        %v4510 = vpop.f32.mrb[0].mxu0
        %v4511 = vadd.f32 %v4442, %v4510
        %v4512 = vpop.f32.mrb[0].mxu0
        %4513 = vmatprep.mubr.f32.mxu0 %v4392
        %4514 = vmatmul.mubr.f32.gmra.mrb[0].mxu0 %v4391
        %v4515 = vpop.f32.mrb[0].mxu0
        %v4516 = vadd.f32 %v4442, %v4515
        %v4517 = vpop.f32.mrb[0].mxu0
        %4518 = vmatprep.mubr.f32.mxu0 %v4394
        %4519 = vmatmul.mubr.f32.gmra.mrb[0].mxu0 %v4393
        %v4520 = vpop.f32.mrb[0].mxu0
        %v4521 = vadd.f32 %v4442, %v4520
        %v4522 = vpop.f32.mrb[0].mxu0
        %4523 = vmatprep.mubr.f32.mxu0 %v4396
        %4524 = vmatmul.mubr.f32.gmra.mrb[0].mxu0 %v4395
        %v4525 = vpop.f32.mrb[0].mxu0
        %v4526 = vadd.f32 %v4442, %v4525
        %v4527 = vpop.f32.mrb[0].mxu0
        %4528 = vmatprep.mubr.f32.mxu0 %v4398
        %4529 = vmatmul.mubr.f32.gmra.mrb[0].mxu0 %v4397
        %v4530 = vpop.f32.mrb[0].mxu0
        %v4531 = vadd.f32 %v4442, %v4530
        %v4532 = vpop.f32.mrb[0].mxu0
        %4533 = vmatprep.mubr.f32.mxu0 %v4400
        %4534 = vmatmul.mubr.f32.gmra.mrb[0].mxu0 %v4399
        %v4535 = vpop.f32.mrb[0].mxu0
        %v4536 = vadd.f32 %v4442, %v4535
        %v4537 = vpop.f32.mrb[0].mxu0
        %4538 = vmatprep.mubr.f32.mxu0 %v4402
        %4539 = vmatmul.mubr.f32.gmra.mrb[0].mxu0 %v4401
        %v4540 = vpop.f32.mrb[0].mxu0
        %v4541 = vadd.f32 %v4442, %v4540
        %v4542 = vpop.f32.mrb[0].mxu0
        %4543 = vmatprep.mubr.f32.mxu0 %v4404
        %4544 = vmatmul.mubr.f32.gmra.mrb[0].mxu0 %v4403
        %v4545 = vpop.f32.mrb[0].mxu0
        %v4546 = vadd.f32 %v4442, %v4545
        %v4547 = vpop.f32.mrb[0].mxu0
        %4548 = vdwg.mxu0
        %v4549 = vadd.f32 %v3008, %v4511
        %v4550 = vadd.f32 %v3009, %v4516
        %v4551 = vadd.f32 %v3010, %v4521
        %v4552 = vadd.f32 %v3011, %v4526
        %v4553 = vadd.f32 %v3012, %v4531
        %v4554 = vadd.f32 %v3013, %v4536
        %v4555 = vadd.f32 %v3014, %v4541
        %v4556 = vadd.f32 %v3015, %v4546
        %4557 = vst [vmem:[%s626] sm:$0xff] %v4549
        %4558 = vst [vmem:[%s626 + $0x8] sm:$0xff] %v4550
        %4559 = vst [vmem:[%s626 + $0x10] sm:$0xff] %v4551
        %4560 = vst [vmem:[%s626 + $0x18] sm:$0xff] %v4552
        %4561 = vst [vmem:[%s626 + $0x20] sm:$0xff] %v4553
        %4562 = vst [vmem:[%s626 + $0x28] sm:$0xff] %v4554
        %4563 = vst [vmem:[%s626 + $0x30] sm:$0xff] %v4555
        %4564 = vst [vmem:[%s626 + $0x38] sm:$0xff] %v4556
        %s4565 = sand.u32 %s385, 1
        %s4566 = scalar_lea.sflag [#allocation4], %s4565
        %s4567 = sand.u32 %s385, 1
        %s4568 = smul.addr %s4567, 64
        %s4569 = scalar_lea.vmem [#allocation14], %s4568
        // Predicated region
        $region113: #{tpu_custom_call.1} parent=83 // pred_check
          %p4570 = pneg %p395
        $region114: #{tpu_custom_call.1} parent=83 // pred_check_branch
          %4572 = sbr.rel (%p4570) target = $region116
        $region115: #{tpu_custom_call.1} parent=83 // pred_region
          %s4574 = ssub.s32 1024, 1024
          %4575 = vsyncadd %s4566, %s4574
          %s4576 = smul.addr %s36, 8
          %s4577 = smul.addr %s4576, 128
          %s4578 = scalar_lea.hbm %s16, %s4577
          %s4579 = sshll.u32 %s4569, 4
          %s4580 = int_to_ptr.vmem [resolvable:$true] %s4579
          %4585 = dma.vmem_to_hbm [thread:$0]  %s4580, 1024, %s4578, %s4566, 128, 128, 8
        $region116: #{tpu_custom_call.1} parent=83 // pred_fallthru
          _
      $region84: #{tpu_custom_call.1} parent=5 // pred_fallthru
        _
      %p4586 = scmp.le.s32.totalorder 2, %s31
      // Predicated region
      $region117: #{tpu_custom_call.1} parent=5 // pred_check
        %p4587 = pneg %p4586
      $region118: #{tpu_custom_call.1} parent=5 // pred_check_branch
        %4589 = sbr.rel (%p4587) target = $region120
      $region119: #{tpu_custom_call.1} parent=5 // pred_region
        %s4590 = ssub.s32 %s31, 2
        // Predicated region
        $region121: #{tpu_custom_call.1} parent=119 // pred_check
          %p4591 = pneg %p401
        $region122: #{tpu_custom_call.1} parent=119 // pred_check_branch
          %4593 = sbr.rel (%p4591) target = $region124
        $region123: #{tpu_custom_call.1} parent=119 // pred_region
          %s4594 = sand.u32 %s386, 1
          %s4595 = scalar_lea.sflag [#allocation4], %s4594
          %s4596 = sand.u32 %s386, 1
          %s4597 = smul.addr %s4596, 64
          %s4598 = scalar_lea.vmem [#allocation14], %s4597
          %4599 = dma.done %s4595, 1024
        $region124: #{tpu_custom_call.1} parent=119 // pred_fallthru
          _
      $region120: #{tpu_custom_call.1} parent=5 // pred_fallthru
        _
    $region6: #{tpu_custom_call.1} parent=1 // loop_footer
      %s35 = sadd.s32 1, %s31
    $region7: #{tpu_custom_call.1} parent=1 // loop_footer_branch
      %30 = sbr.rel target = $region3
    $region8: #{tpu_custom_call.1} parent=1 // loop_exit
      _
    %4600 = vsyncpa [#allocation3], 1
    %s4601 = scalar_lea.sflag [#allocation3], 1
    %4602 = vsyncpa %s4601, 1
    %4603 = vsyncpa [#allocation6], 1
    %4604 = vsyncpa [#allocation9], 1
    %4605 = vsyncpa [#allocation12], 1
    %4606 = vsyncpa [#allocation4], 1
    %s4607 = scalar_lea.sflag [#allocation4], 1
    %4608 = vsyncpa %s4607, 1

</llo_original>
